<compile_context>
chip_gen: v5e
topology: v5e:2x2
jax: 0.10.0
libtpu: 0.0.40
codegen_flags: <defaults>
</compile_context>

<pallas_src>
import numpy as np
import jax
import jax.numpy as jnp
from jax import lax
from jax.experimental import pallas as pl
from jax.experimental.pallas import tpu as pltpu

NEG_SLOPE = 0.01   # nn.LeakyReLU() default negative_slope
BN_EPS = 1e-5      # nn.BatchNorm2d default eps
LANE = 128
SUB = 8


def _leaky(y):
    return jnp.where(y > 0, y, NEG_SLOPE * y)


def _round_up(x, m):
    return (x + m - 1) // m * m


def _pick_row_tile(h, w, max_m=2048):
    """Largest divisor TH of h with TH*w <= max_m (targets MXU-filling M>=256)."""
    best = 1
    for t in range(1, h + 1):
        if h % t == 0 and t * w <= max_m:
            best = t
    return best


def _pick_channel_tile(c_pad, target=512):
    """Largest multiple-of-128 divisor of c_pad that is <= target."""
    best = min(c_pad, LANE)
    t = LANE
    while t <= min(c_pad, target):
        if c_pad % t == 0:
            best = t
        t += LANE
    return best


def _tpu_vmem_capacity_bytes():
    try:
        info = pltpu.get_tpu_info()
        for name in ("vmem_capacity_bytes", "vmem_bytes", "vmem_size_bytes"):
            v = getattr(info, name, None)
            if v:
                return int(v)
    except Exception:
        pass
    return 128 << 20


def _vmem_limit_bytes(*block_bytes):
    """Double-buffered blocks + headroom, capped below the physical VMEM of the
    current generation (v7x: 64 MiB -> ~52 MiB; v5e/v6e: 128 MiB -> 100 MiB)."""
    need = 2 * sum(int(b) for b in block_bytes) + (4 << 20)
    cap = _tpu_vmem_capacity_bytes()
    hi = max(32 << 20, min(cap - (12 << 20), 100 << 20))
    return int(min(max(need, 32 << 20), hi))


# --------------------------------------------------------------------------
# Kernel 1: all pyramid stages + channel concat + spatial zero-pad (one pass)
# --------------------------------------------------------------------------
def run_fused_stages(x_flat, p_packed, a_all, w_all, scale_all, bias_all,
                     hw, sizes, cin, cout, c_cat_pad, wp_pad):
    N, HW, cin_pad = x_flat.shape
    H, W = hw
    S = len(sizes)
    s2_pad = p_packed.shape[0]
    smax2 = a_all.shape[-1]
    Hp = H + 2
    c_cat = S * cout + cin

    def kernel(x_ref, p_ref, a_ref, w_ref, scale_ref, bias_ref, o_ref):
        xb = x_ref[...]                                               # (HW, cin_pad) bf16
        # one packed pooling matmul for every pyramid level (bf16 operands, f32 acc)
        pooled = jnp.dot(p_ref[...], xb,
                         preferred_element_type=jnp.float32).astype(jnp.bfloat16)

        off = 0
        for j, s in enumerate(sizes):
            ss = s * s
            # rows beyond `ss` in this window hold other stages' bins; they are
            # nullified by the exactly-zero padded columns of a_ref[j].
            pj = pooled[off:off + smax2]                              # (smax2, cin_pad)
            z = jnp.dot(pj, w_ref[j], preferred_element_type=jnp.float32)
            z = _leaky(z * scale_ref[j] + bias_ref[j]).astype(jnp.bfloat16)
            up = jnp.dot(a_ref[j], z, preferred_element_type=jnp.float32)  # (HW, cout)
            # store this stage's channel slice of the concat directly (no concat temp)
            o_ref[pl.ds(1, H), pl.ds(1, W), pl.ds(j * cout, cout)] = (
                up.reshape(H, W, cout).astype(o_ref.dtype))
            off += ss

        # feats tail of the concat (+ lane-padding channels, which are already
        # exact zeros in x's padded columns)
        tail = c_cat_pad - S * cout
        if tail <= cin_pad:
            o_ref[pl.ds(1, H), pl.ds(1, W), pl.ds(S * cout, tail)] = (
                xb[:, :tail].reshape(H, W, tail).astype(o_ref.dtype))
        else:
            o_ref[pl.ds(1, H), pl.ds(1, W), pl.ds(S * cout, cin)] = (
                xb[:, :cin].reshape(H, W, cin).astype(o_ref.dtype))
            o_ref[pl.ds(1, H), pl.ds(1, W), pl.ds(S * cout + cin, tail - cin)] = (
                jnp.zeros((H, W, tail - cin), o_ref.dtype))

        # 1-pixel zero ring (the 3x3 conv 'SAME' padding) + right alignment
        # columns; the interior is never written twice.
        zrow = jnp.zeros((1, wp_pad, c_cat_pad), o_ref.dtype)
        o_ref[pl.ds(0, 1), :, :] = zrow
        o_ref[pl.ds(Hp - 1, 1), :, :] = zrow
        o_ref[pl.ds(1, H), pl.ds(0, 1), :] = jnp.zeros((H, 1, c_cat_pad), o_ref.dtype)
        o_ref[pl.ds(1, H), pl.ds(W + 1, wp_pad - (W + 1)), :] = jnp.zeros(
            (H, wp_pad - (W + 1), c_cat_pad), o_ref.dtype)

    block_bytes = (HW * cin_pad * 2, s2_pad * HW * 2, S * HW * smax2 * 2,
                   S * cin_pad * cout * 2, Hp * wp_pad * c_cat_pad * 2)
    flops = 2 * N * (s2_pad * HW * cin_pad
                     + S * (smax2 * cin_pad * cout + HW * smax2 * cout))
    bytes_accessed = (N * (HW * cin_pad * 2 + Hp * wp_pad * c_cat_pad * 2)
                      + sum(block_bytes[1:4]))

    return pl.pallas_call(
        kernel,
        out_shape=jax.ShapeDtypeStruct((N, Hp, wp_pad, c_cat_pad), jnp.bfloat16),
        grid=(N,),
        in_specs=[
            pl.BlockSpec((None, HW, cin_pad), lambda n: (n, 0, 0)),
            pl.BlockSpec((s2_pad, HW), lambda n: (0, 0)),
            pl.BlockSpec((S, HW, smax2), lambda n: (0, 0, 0)),
            pl.BlockSpec((S, cin_pad, cout), lambda n: (0, 0, 0)),
            pl.BlockSpec((S, 1, cout), lambda n: (0, 0, 0)),
            pl.BlockSpec((S, 1, cout), lambda n: (0, 0, 0)),
        ],
        out_specs=pl.BlockSpec((None, Hp, wp_pad, c_cat_pad), lambda n: (n, 0, 0, 0)),
        compiler_params=pltpu.CompilerParams(
            dimension_semantics=("parallel",),
            vmem_limit_bytes=_vmem_limit_bytes(*block_bytes)),
        cost_estimate=pl.CostEstimate(flops=flops, transcendentals=0,
                                      bytes_accessed=bytes_accessed),
    )(x_flat, p_packed, a_all, w_all, scale_all, bias_all)


# --------------------------------------------------------------------------
# Kernel 2: 3x3 conv (padding pre-materialized) + folded BN + LeakyReLU
# --------------------------------------------------------------------------
def run_bottleneck(cat_pad, w9_pad, scale_pad, bias_pad, h, w):
    N, Hp, Wp_pad, c_cat_pad = cat_pad.shape
    H, W = h, w
    co_pad = w9_pad.shape[-1]
    TH = _pick_row_tile(H, W)
    assert H % TH == 0, (H, TH)
    TC = _pick_channel_tile(c_cat_pad)
    assert c_cat_pad % TC == 0, (c_cat_pad, TC)
    KC = c_cat_pad // TC

    def kernel(x_ref, w_ref, scale_ref, bias_ref, o_ref, acc_ref):
        k = pl.program_id(2)
        row0 = pl.multiple_of(pl.program_id(1) * TH, TH)

        @pl.when(k == 0)
        def _init():
            acc_ref[...] = jnp.zeros_like(acc_ref)

        contrib = None
        for ky in range(3):
            # one aligned full-width slab load + flatten per ky (Wp_pad % 8 == 0,
            # TC % 128 == 0 -> layout-preserving reshape)
            slab = x_ref[pl.ds(row0 + ky, TH), :, :].reshape(TH * Wp_pad, TC)
            for kx in range(3):
                y = jnp.dot(slab, w_ref[3 * ky + kx],
                            preferred_element_type=jnp.float32)       # (TH*Wp_pad, Co)
                # kx shift applied on the Co-wide output (cheap) rather than on
                # the Cc-wide input slab.
                c = y.reshape(TH, Wp_pad, co_pad)[:, kx:kx + W, :]
                contrib = c if contrib is None else contrib + c
        acc_ref[...] += contrib

        @pl.when(k == pl.num_programs(2) - 1)
        def _finalize():
            yout = _leaky(acc_ref[...] * scale_ref[0] + bias_ref[0])
            o_ref[...] = yout.astype(o_ref.dtype)
            # TODO(synk): nn.Dropout2d(0.1) follows in the reference; identity in eval.

    block_bytes = (Hp * Wp_pad * TC * 2, 9 * TC * co_pad * 2,
                   TH * W * co_pad * 2, TH * W * co_pad * 4)
    flops = 2 * N * (H // TH) * KC * 9 * (TH * Wp_pad) * TC * co_pad
    bytes_accessed = (N * (H // TH) * KC * Hp * Wp_pad * TC * 2
                      + N * H * W * co_pad * 2 + 9 * c_cat_pad * co_pad * 2)

    return pl.pallas_call(
        kernel,
        out_shape=jax.ShapeDtypeStruct((N, H, W, co_pad), jnp.bfloat16),
        grid=(N, H // TH, KC),
        in_specs=[
            pl.BlockSpec((None, Hp, Wp_pad, TC), lambda n, i, k: (n, 0, 0, k)),
            pl.BlockSpec((9, TC, co_pad), lambda n, i, k: (0, k, 0)),
            pl.BlockSpec((1, co_pad), lambda n, i, k: (0, 0)),
            pl.BlockSpec((1, co_pad), lambda n, i, k: (0, 0)),
        ],
        out_specs=pl.BlockSpec((None, TH, W, co_pad), lambda n, i, k: (n, i, 0, 0)),
        scratch_shapes=[pltpu.VMEM((TH, W, co_pad), jnp.float32)],
        compiler_params=pltpu.CompilerParams(
            dimension_semantics=("parallel", "parallel", "arbitrary"),
            vmem_limit_bytes=_vmem_limit_bytes(*block_bytes)),
        cost_estimate=pl.CostEstimate(flops=flops, transcendentals=0,
                                      bytes_accessed=bytes_accessed),
    )(cat_pad, w9_pad, scale_pad, bias_pad)


# --------------------------------------------------------------------------
# Helpers (glue): pooling / interpolation matrices, BN folding, params
# --------------------------------------------------------------------------
def adaptive_pool_matrix(s, n):
    """P[i, j] = 1/binsize if j in adaptive-pool bin i (PyTorch bin rule)."""
    P = np.zeros((s, n), np.float32)
    for i in range(s):
        start = (i * n) // s
        end = -(-((i + 1) * n) // s)      # ceil
        P[i, start:end] = 1.0 / (end - start)
    return P


def bilinear_matrix(out_size, in_size):
    """Linear interpolation matrix, align_corners=True."""
    A = np.zeros((out_size, in_size), np.float32)
    for i in range(out_size):
        if out_size == 1 or in_size == 1:
            coord = 0.0
        else:
            coord = i * (in_size - 1) / (out_size - 1)
        f = min(int(np.floor(coord)), in_size - 1)
        c = min(f + 1, in_size - 1)
        frac = coord - f
        A[i, f] += 1.0 - frac
        A[i, c] += frac
    return A


def fold_bn(gamma, beta, mean, var):
    scale = gamma / jnp.sqrt(var + BN_EPS)
    bias = beta - mean * scale
    return (scale.reshape(1, -1).astype(jnp.float32),
            bias.reshape(1, -1).astype(jnp.float32))


def make_bn_params(key, c):
    k1, k2, k3, k4 = jax.random.split(key, 4)
    gamma = 1.0 + 0.1 * jax.random.normal(k1, (c,), jnp.float32)
    beta = 0.1 * jax.random.normal(k2, (c,), jnp.float32)
    mean = 0.1 * jax.random.normal(k3, (c,), jnp.float32)
    var = 0.9 + 0.1 * jnp.abs(jax.random.normal(k4, (c,), jnp.float32))
    return fold_bn(gamma, beta, mean, var)


def init_params(key, features, out_features, sizes):
    params = {"stages": [], "sizes": tuple(sizes)}
    keys = jax.random.split(key, len(sizes) + 1)
    for i, _ in enumerate(sizes):
        kw, kbn = jax.random.split(keys[i])
        w = jax.random.normal(kw, (features, out_features), jnp.float32) / np.sqrt(features)
        scale, bias = make_bn_params(kbn, out_features)
        params["stages"].append((w, scale, bias))
    c_cat = features + len(sizes) * out_features
    kw, kbn = jax.random.split(keys[-1])
    w9 = jax.random.normal(kw, (9, c_cat, out_features), jnp.float32) / np.sqrt(9 * c_cat)
    scale, bias = make_bn_params(kbn, out_features)
    params["bottleneck"] = (w9, scale, bias)
    return params


# --------------------------------------------------------------------------
# Forward (Pallas) and pure-JAX reference
# --------------------------------------------------------------------------
def psp_forward(x_nchw, params):
    """Pallas forward: NCHW in, NCHW out (matches the PyTorch module)."""
    sizes = params["sizes"]
    S = len(sizes)
    x = jnp.transpose(x_nchw, (0, 2, 3, 1))                   # -> NHWC
    N, H, W, Cin = x.shape
    HW = H * W
    Cout = params["stages"][0][0].shape[1]
    smax2 = max(sizes) ** 2

    offs, off = [], 0
    for s in sizes:
        offs.append(off)
        off += s * s
    s2_pad = _round_up(max(o + smax2 for o in offs), 16)

    cin_pad = _round_up(Cin, LANE)
    c_cat = S * Cout + Cin
    c_cat_pad = _round_up(c_cat, LANE)
    co_pad = _round_up(Cout, LANE)
    wp_pad = _round_up(W + 2, SUB)

    # Host-side constants: Kronecker pool matrices for all stages packed into a
    # single MXU operand; per-stage upsample matrices with zero-padded columns.
    P_packed = np.zeros((s2_pad, HW), np.float32)
    A_all = np.zeros((S, HW, smax2), np.float32)
    for j, s in enumerate(sizes):
        P_packed[offs[j]:offs[j] + s * s] = np.kron(adaptive_pool_matrix(s, H),
                                                    adaptive_pool_matrix(s, W))
        A_all[j, :, :s * s] = np.kron(bilinear_matrix(H, s), bilinear_matrix(W, s))
    p_packed = jnp.asarray(P_packed).astype(jnp.bfloat16)
    a_all = jnp.asarray(A_all).astype(jnp.bfloat16)

    w_stack = jnp.stack([w for (w, _, _) in params["stages"]])          # (S, Cin, Cout)
    w_all = (jnp.zeros((S, cin_pad, Cout), jnp.float32)
             .at[:, :Cin, :].set(w_stack).astype(jnp.bfloat16))
    scale_all = jnp.stack([s for (_, s, _) in params["stages"]])        # (S, 1, Cout)
    bias_all = jnp.stack([b for (_, _, b) in params["stages"]])

    x_bf = x.astype(jnp.bfloat16)
    if cin_pad > Cin:
        x_bf = jnp.pad(x_bf, ((0, 0), (0, 0), (0, 0), (0, cin_pad - Cin)))
    x_flat = x_bf.reshape(N, HW, cin_pad)

    # stages + concat + zero-pad fused into one pass (bf16 activations in HBM)
    cat_pad = run_fused_stages(x_flat, p_packed, a_all, w_all, scale_all, bias_all,
                               (H, W), sizes, Cin, Cout, c_cat_pad, wp_pad)

    # bottleneck 3x3 conv + BN + LeakyReLU, channels padded to lane width
    w9, scale, bias = params["bottleneck"]
    w9_pad = (jnp.zeros((9, c_cat_pad, co_pad), jnp.float32)
              .at[:, :c_cat, :Cout].set(w9).astype(jnp.bfloat16))
    scale_pad = jnp.zeros((1, co_pad), jnp.float32).at[:, :Cout].set(scale)
    bias_pad = jnp.zeros((1, co_pad), jnp.float32).at[:, :Cout].set(bias)

    out_pad = run_bottleneck(cat_pad, w9_pad, scale_pad, bias_pad, H, W)
    out = out_pad[..., :Cout]                                  # drop lane padding
    return jnp.transpose(out, (0, 3, 1, 2))                    # back to NCHW


def psp_forward_ref(x_nchw, params):
    """Pure-JAX reference (separable pool/upsample via einsum), mirroring the
    kernel's bf16 roundings of the data path so only accumulation order and the
    bf16 representation of the pool/upsample constants differ."""
    hi = lax.Precision.HIGHEST

    def r(v):  # bf16 rounding mirror
        return v.astype(jnp.bfloat16).astype(jnp.float32)

    x = r(jnp.transpose(x_nchw, (0, 2, 3, 1)))
    N, H, W, Cin = x.shape
    priors = []
    for (w, scale, bias), s in zip(params["stages"], params["sizes"]):
        ph, pw = adaptive_pool_matrix(s, H), adaptive_pool_matrix(s, W)
        ah, aw = bilinear_matrix(H, s), bilinear_matrix(W, s)
        p = r(jnp.einsum('sh,nhwc,tw->nstc', ph, x, pw, precision=hi))
        z = _leaky(jnp.einsum('nstc,co->nsto', p, r(w), precision=hi)
                   * scale[0] + bias[0])
        z = r(z)
        priors.append(jnp.einsum('hs,nsto,wt->nhwo', ah, z, aw, precision=hi))
    priors.append(x)
    cat = r(jnp.concatenate(priors, axis=-1))
    w9, scale, bias = params["bottleneck"]
    w3 = r(w9).reshape(3, 3, w9.shape[1], w9.shape[2])            # HWIO
    y = lax.conv_general_dilated(cat, w3, (1, 1), 'SAME',
                                 dimension_numbers=('NHWC', 'HWIO', 'NHWC'),
                                 precision=hi)
    y = _leaky(y * scale[0] + bias[0])
    return jnp.transpose(y, (0, 3, 1, 2))


# --------------------------------------------------------------------------
if __name__ == "__main__":
    features, out_features, sizes = 4, 8, (1, 2, 3, 6)
    N, H, W = 2, 16, 16

    root = jax.random.PRNGKey(0)
    kx, kp = jax.random.split(root)
    x = jax.random.normal(kx, (N, features, H, W), jnp.float32)   # NCHW like PyTorch
    params = init_params(kp, features, out_features, sizes)

    out = jax.block_until_ready(psp_forward(x, params))
    assert out.shape == (N, out_features, H, W), out.shape

    ref = jax.block_until_ready(psp_forward_ref(x, params))
    np.testing.assert_allclose(np.asarray(out.astype(jnp.float32)), np.asarray(ref),
                               rtol=2e-2, atol=2e-2)

    print("KERNEL_OK")
</pallas_src>

<mosaic_0001>
module attributes {stable_mosaic.version = 11 : i64} {
  func.func @kernel(%arg0: i32, %arg1: memref<1x256x128xbf16, #tpu.memory_space<vmem>>, %arg2: memref<64x256xbf16, #tpu.memory_space<vmem>>, %arg3: memref<4x256x36xbf16, #tpu.memory_space<vmem>>, %arg4: memref<4x128x8xbf16, #tpu.memory_space<vmem>>, %arg5: memref<4x1x8xf32, #tpu.memory_space<vmem>>, %arg6: memref<4x1x8xf32, #tpu.memory_space<vmem>>, %arg7: memref<1x18x24x128xbf16, #tpu.memory_space<vmem>>) attributes {dimension_semantics = [#tpu.dimension_semantics<parallel>], iteration_bounds = array<i64: 2>, scalar_prefetch = 0 : i64, scratch_operands = 0 : i64, tpu.core_type = #tpu.core_type<tc>, window_params = [{transform_indices = @transform_0, window_bounds = array<i64: 1, 256, 128>}, {pipeline_mode = #tpu.pipeline_mode<synchronous>, transform_indices = @transform_1, window_bounds = array<i64: 64, 256>}, {pipeline_mode = #tpu.pipeline_mode<synchronous>, transform_indices = @transform_2, window_bounds = array<i64: 4, 256, 36>}, {pipeline_mode = #tpu.pipeline_mode<synchronous>, transform_indices = @transform_3, window_bounds = array<i64: 4, 128, 8>}, {pipeline_mode = #tpu.pipeline_mode<synchronous>, transform_indices = @transform_4, window_bounds = array<i64: 4, 1, 8>}, {pipeline_mode = #tpu.pipeline_mode<synchronous>, transform_indices = @transform_5, window_bounds = array<i64: 4, 1, 8>}, {transform_indices = @transform_6, window_bounds = array<i64: 1, 18, 24, 128>}]} {
    %c0 = arith.constant 0 : index
    %c0_0 = arith.constant 0 : index
    %c0_1 = arith.constant 0 : index
    %0 = vector.load %arg1[%c0, %c0_0, %c0_1] : memref<1x256x128xbf16, #tpu.memory_space<vmem>>, vector<1x256x128xbf16>
    %1 = vector.shape_cast %0 : vector<1x256x128xbf16> to vector<256x128xbf16>
    %c0_2 = arith.constant 0 : index
    %c0_3 = arith.constant 0 : index
    %2 = vector.load %arg2[%c0_2, %c0_3] : memref<64x256xbf16, #tpu.memory_space<vmem>>, vector<64x256xbf16>
    %cst = arith.constant dense<0.000000e+00> : vector<64x128xf32>
    %3 = tpu.matmul %2, %1, %cst {dimension_numbers = #tpu.dot_dimension_numbers<[1], [0], [0], [1], [0, 0, 1, 1], [], []>} : vector<64x256xbf16>, vector<256x128xbf16>, vector<64x128xf32> -> vector<64x128xf32>
    %4 = arith.truncf %3 : vector<64x128xf32> to vector<64x128xbf16>
    %5 = vector.extract_strided_slice %4 {offsets = [0, 0], sizes = [36, 128], strides = [1, 1]} : vector<64x128xbf16> to vector<36x128xbf16>
    %c0_4 = arith.constant 0 : index
    %c0_5 = arith.constant 0 : index
    %c0_6 = arith.constant 0 : index
    %6 = vector.load %arg4[%c0_4, %c0_5, %c0_6] : memref<4x128x8xbf16, #tpu.memory_space<vmem>>, vector<1x128x8xbf16>
    %7 = vector.shape_cast %6 : vector<1x128x8xbf16> to vector<128x8xbf16>
    %cst_7 = arith.constant dense<0.000000e+00> : vector<36x8xf32>
    %8 = tpu.matmul %5, %7, %cst_7 {dimension_numbers = #tpu.dot_dimension_numbers<[1], [0], [0], [1], [0, 0, 1, 1], [], []>} : vector<36x128xbf16>, vector<128x8xbf16>, vector<36x8xf32> -> vector<36x8xf32>
    %c0_8 = arith.constant 0 : index
    %c0_9 = arith.constant 0 : index
    %c0_10 = arith.constant 0 : index
    %9 = vector.load %arg5[%c0_8, %c0_9, %c0_10] : memref<4x1x8xf32, #tpu.memory_space<vmem>>, vector<1x1x8xf32>
    %10 = vector.shape_cast %9 : vector<1x1x8xf32> to vector<1x8xf32>
    %11 = vector.broadcast %10 : vector<1x8xf32> to vector<36x8xf32>
    %12 = arith.mulf %8, %11 : vector<36x8xf32>
    %c0_11 = arith.constant 0 : index
    %c0_12 = arith.constant 0 : index
    %c0_13 = arith.constant 0 : index
    %13 = vector.load %arg6[%c0_11, %c0_12, %c0_13] : memref<4x1x8xf32, #tpu.memory_space<vmem>>, vector<1x1x8xf32>
    %14 = vector.shape_cast %13 : vector<1x1x8xf32> to vector<1x8xf32>
    %15 = vector.broadcast %14 : vector<1x8xf32> to vector<36x8xf32>
    %16 = arith.addf %12, %15 : vector<36x8xf32>
    %cst_14 = arith.constant 0.000000e+00 : f32
    %17 = vector.broadcast %cst_14 : f32 to vector<36x8xf32>
    %18 = arith.cmpf ogt, %16, %17 : vector<36x8xf32>
    %cst_15 = arith.constant 0.00999999977 : f32
    %19 = vector.broadcast %cst_15 : f32 to vector<36x8xf32>
    %20 = arith.mulf %19, %16 : vector<36x8xf32>
    %21 = arith.select %18, %16, %20 : vector<36x8xi1>, vector<36x8xf32>
    %22 = arith.truncf %21 : vector<36x8xf32> to vector<36x8xbf16>
    %c0_16 = arith.constant 0 : index
    %c0_17 = arith.constant 0 : index
    %c0_18 = arith.constant 0 : index
    %23 = vector.load %arg3[%c0_16, %c0_17, %c0_18] : memref<4x256x36xbf16, #tpu.memory_space<vmem>>, vector<1x256x36xbf16>
    %24 = vector.shape_cast %23 : vector<1x256x36xbf16> to vector<256x36xbf16>
    %cst_19 = arith.constant dense<0.000000e+00> : vector<256x8xf32>
    %25 = tpu.matmul %24, %22, %cst_19 {dimension_numbers = #tpu.dot_dimension_numbers<[1], [0], [0], [1], [0, 0, 1, 1], [], []>} : vector<256x36xbf16>, vector<36x8xbf16>, vector<256x8xf32> -> vector<256x8xf32>
    %26 = vector.shape_cast %25 : vector<256x8xf32> to vector<16x16x8xf32>
    %27 = arith.truncf %26 : vector<16x16x8xf32> to vector<16x16x8xbf16>
    %c0_20 = arith.constant 0 : index
    %c1 = arith.constant 1 : index
    %c1_21 = arith.constant 1 : index
    %c0_22 = arith.constant 0 : index
    %28 = vector.load %arg7[%c0_20, %c1, %c1_21, %c0_22] : memref<1x18x24x128xbf16, #tpu.memory_space<vmem>>, vector<1x16x16x8xbf16>
    %29 = vector.shape_cast %28 : vector<1x16x16x8xbf16> to vector<16x16x8xbf16>
    %30 = vector.shape_cast %27 : vector<16x16x8xbf16> to vector<1x16x16x8xbf16>
    tpu.vector_store %arg7[%c0_20, %c1, %c1_21, %c0_22], %30 {strides = array<i32>} : memref<1x18x24x128xbf16, #tpu.memory_space<vmem>>, vector<1x16x16x8xbf16>,
    %31 = vector.extract_strided_slice %4 {offsets = [1, 0], sizes = [36, 128], strides = [1, 1]} : vector<64x128xbf16> to vector<36x128xbf16>
    %c1_23 = arith.constant 1 : index
    %c0_24 = arith.constant 0 : index
    %c0_25 = arith.constant 0 : index
    %32 = vector.load %arg4[%c1_23, %c0_24, %c0_25] : memref<4x128x8xbf16, #tpu.memory_space<vmem>>, vector<1x128x8xbf16>
    %33 = vector.shape_cast %32 : vector<1x128x8xbf16> to vector<128x8xbf16>
    %cst_26 = arith.constant dense<0.000000e+00> : vector<36x8xf32>
    %34 = tpu.matmul %31, %33, %cst_26 {dimension_numbers = #tpu.dot_dimension_numbers<[1], [0], [0], [1], [0, 0, 1, 1], [], []>} : vector<36x128xbf16>, vector<128x8xbf16>, vector<36x8xf32> -> vector<36x8xf32>
    %c1_27 = arith.constant 1 : index
    %c0_28 = arith.constant 0 : index
    %c0_29 = arith.constant 0 : index
    %35 = vector.load %arg5[%c1_27, %c0_28, %c0_29] : memref<4x1x8xf32, #tpu.memory_space<vmem>>, vector<1x1x8xf32>
    %36 = vector.shape_cast %35 : vector<1x1x8xf32> to vector<1x8xf32>
    %37 = vector.broadcast %36 : vector<1x8xf32> to vector<36x8xf32>
    %38 = arith.mulf %34, %37 : vector<36x8xf32>
    %c1_30 = arith.constant 1 : index
    %c0_31 = arith.constant 0 : index
    %c0_32 = arith.constant 0 : index
    %39 = vector.load %arg6[%c1_30, %c0_31, %c0_32] : memref<4x1x8xf32, #tpu.memory_space<vmem>>, vector<1x1x8xf32>
    %40 = vector.shape_cast %39 : vector<1x1x8xf32> to vector<1x8xf32>
    %41 = vector.broadcast %40 : vector<1x8xf32> to vector<36x8xf32>
    %42 = arith.addf %38, %41 : vector<36x8xf32>
    %cst_33 = arith.constant 0.000000e+00 : f32
    %43 = vector.broadcast %cst_33 : f32 to vector<36x8xf32>
    %44 = arith.cmpf ogt, %42, %43 : vector<36x8xf32>
    %cst_34 = arith.constant 0.00999999977 : f32
    %45 = vector.broadcast %cst_34 : f32 to vector<36x8xf32>
    %46 = arith.mulf %45, %42 : vector<36x8xf32>
    %47 = arith.select %44, %42, %46 : vector<36x8xi1>, vector<36x8xf32>
    %48 = arith.truncf %47 : vector<36x8xf32> to vector<36x8xbf16>
    %c1_35 = arith.constant 1 : index
    %c0_36 = arith.constant 0 : index
    %c0_37 = arith.constant 0 : index
    %49 = vector.load %arg3[%c1_35, %c0_36, %c0_37] : memref<4x256x36xbf16, #tpu.memory_space<vmem>>, vector<1x256x36xbf16>
    %50 = vector.shape_cast %49 : vector<1x256x36xbf16> to vector<256x36xbf16>
    %cst_38 = arith.constant dense<0.000000e+00> : vector<256x8xf32>
    %51 = tpu.matmul %50, %48, %cst_38 {dimension_numbers = #tpu.dot_dimension_numbers<[1], [0], [0], [1], [0, 0, 1, 1], [], []>} : vector<256x36xbf16>, vector<36x8xbf16>, vector<256x8xf32> -> vector<256x8xf32>
    %52 = vector.shape_cast %51 : vector<256x8xf32> to vector<16x16x8xf32>
    %53 = arith.truncf %52 : vector<16x16x8xf32> to vector<16x16x8xbf16>
    %c0_39 = arith.constant 0 : index
    %c1_40 = arith.constant 1 : index
    %c1_41 = arith.constant 1 : index
    %c8 = arith.constant 8 : index
    %54 = vector.load %arg7[%c0_39, %c1_40, %c1_41, %c8] : memref<1x18x24x128xbf16, #tpu.memory_space<vmem>>, vector<1x16x16x8xbf16>
    %55 = vector.shape_cast %54 : vector<1x16x16x8xbf16> to vector<16x16x8xbf16>
    %56 = vector.shape_cast %53 : vector<16x16x8xbf16> to vector<1x16x16x8xbf16>
    tpu.vector_store %arg7[%c0_39, %c1_40, %c1_41, %c8], %56 {strides = array<i32>} : memref<1x18x24x128xbf16, #tpu.memory_space<vmem>>, vector<1x16x16x8xbf16>,
    %57 = vector.extract_strided_slice %4 {offsets = [5, 0], sizes = [36, 128], strides = [1, 1]} : vector<64x128xbf16> to vector<36x128xbf16>
    %c2 = arith.constant 2 : index
    %c0_42 = arith.constant 0 : index
    %c0_43 = arith.constant 0 : index
    %58 = vector.load %arg4[%c2, %c0_42, %c0_43] : memref<4x128x8xbf16, #tpu.memory_space<vmem>>, vector<1x128x8xbf16>
    %59 = vector.shape_cast %58 : vector<1x128x8xbf16> to vector<128x8xbf16>
    %cst_44 = arith.constant dense<0.000000e+00> : vector<36x8xf32>
    %60 = tpu.matmul %57, %59, %cst_44 {dimension_numbers = #tpu.dot_dimension_numbers<[1], [0], [0], [1], [0, 0, 1, 1], [], []>} : vector<36x128xbf16>, vector<128x8xbf16>, vector<36x8xf32> -> vector<36x8xf32>
    %c2_45 = arith.constant 2 : index
    %c0_46 = arith.constant 0 : index
    %c0_47 = arith.constant 0 : index
    %61 = vector.load %arg5[%c2_45, %c0_46, %c0_47] : memref<4x1x8xf32, #tpu.memory_space<vmem>>, vector<1x1x8xf32>
    %62 = vector.shape_cast %61 : vector<1x1x8xf32> to vector<1x8xf32>
    %63 = vector.broadcast %62 : vector<1x8xf32> to vector<36x8xf32>
    %64 = arith.mulf %60, %63 : vector<36x8xf32>
    %c2_48 = arith.constant 2 : index
    %c0_49 = arith.constant 0 : index
    %c0_50 = arith.constant 0 : index
    %65 = vector.load %arg6[%c2_48, %c0_49, %c0_50] : memref<4x1x8xf32, #tpu.memory_space<vmem>>, vector<1x1x8xf32>
    %66 = vector.shape_cast %65 : vector<1x1x8xf32> to vector<1x8xf32>
    %67 = vector.broadcast %66 : vector<1x8xf32> to vector<36x8xf32>
    %68 = arith.addf %64, %67 : vector<36x8xf32>
    %cst_51 = arith.constant 0.000000e+00 : f32
    %69 = vector.broadcast %cst_51 : f32 to vector<36x8xf32>
    %70 = arith.cmpf ogt, %68, %69 : vector<36x8xf32>
    %cst_52 = arith.constant 0.00999999977 : f32
    %71 = vector.broadcast %cst_52 : f32 to vector<36x8xf32>
    %72 = arith.mulf %71, %68 : vector<36x8xf32>
    %73 = arith.select %70, %68, %72 : vector<36x8xi1>, vector<36x8xf32>
    %74 = arith.truncf %73 : vector<36x8xf32> to vector<36x8xbf16>
    %c2_53 = arith.constant 2 : index
    %c0_54 = arith.constant 0 : index
    %c0_55 = arith.constant 0 : index
    %75 = vector.load %arg3[%c2_53, %c0_54, %c0_55] : memref<4x256x36xbf16, #tpu.memory_space<vmem>>, vector<1x256x36xbf16>
    %76 = vector.shape_cast %75 : vector<1x256x36xbf16> to vector<256x36xbf16>
    %cst_56 = arith.constant dense<0.000000e+00> : vector<256x8xf32>
    %77 = tpu.matmul %76, %74, %cst_56 {dimension_numbers = #tpu.dot_dimension_numbers<[1], [0], [0], [1], [0, 0, 1, 1], [], []>} : vector<256x36xbf16>, vector<36x8xbf16>, vector<256x8xf32> -> vector<256x8xf32>
    %78 = vector.shape_cast %77 : vector<256x8xf32> to vector<16x16x8xf32>
    %79 = arith.truncf %78 : vector<16x16x8xf32> to vector<16x16x8xbf16>
    %c0_57 = arith.constant 0 : index
    %c1_58 = arith.constant 1 : index
    %c1_59 = arith.constant 1 : index
    %c16 = arith.constant 16 : index
    %80 = vector.load %arg7[%c0_57, %c1_58, %c1_59, %c16] : memref<1x18x24x128xbf16, #tpu.memory_space<vmem>>, vector<1x16x16x8xbf16>
    %81 = vector.shape_cast %80 : vector<1x16x16x8xbf16> to vector<16x16x8xbf16>
    %82 = vector.shape_cast %79 : vector<16x16x8xbf16> to vector<1x16x16x8xbf16>
    tpu.vector_store %arg7[%c0_57, %c1_58, %c1_59, %c16], %82 {strides = array<i32>} : memref<1x18x24x128xbf16, #tpu.memory_space<vmem>>, vector<1x16x16x8xbf16>,
    %83 = vector.extract_strided_slice %4 {offsets = [14, 0], sizes = [36, 128], strides = [1, 1]} : vector<64x128xbf16> to vector<36x128xbf16>
    %c3 = arith.constant 3 : index
    %c0_60 = arith.constant 0 : index
    %c0_61 = arith.constant 0 : index
    %84 = vector.load %arg4[%c3, %c0_60, %c0_61] : memref<4x128x8xbf16, #tpu.memory_space<vmem>>, vector<1x128x8xbf16>
    %85 = vector.shape_cast %84 : vector<1x128x8xbf16> to vector<128x8xbf16>
    %cst_62 = arith.constant dense<0.000000e+00> : vector<36x8xf32>
    %86 = tpu.matmul %83, %85, %cst_62 {dimension_numbers = #tpu.dot_dimension_numbers<[1], [0], [0], [1], [0, 0, 1, 1], [], []>} : vector<36x128xbf16>, vector<128x8xbf16>, vector<36x8xf32> -> vector<36x8xf32>
    %c3_63 = arith.constant 3 : index
    %c0_64 = arith.constant 0 : index
    %c0_65 = arith.constant 0 : index
    %87 = vector.load %arg5[%c3_63, %c0_64, %c0_65] : memref<4x1x8xf32, #tpu.memory_space<vmem>>, vector<1x1x8xf32>
    %88 = vector.shape_cast %87 : vector<1x1x8xf32> to vector<1x8xf32>
    %89 = vector.broadcast %88 : vector<1x8xf32> to vector<36x8xf32>
    %90 = arith.mulf %86, %89 : vector<36x8xf32>
    %c3_66 = arith.constant 3 : index
    %c0_67 = arith.constant 0 : index
    %c0_68 = arith.constant 0 : index
    %91 = vector.load %arg6[%c3_66, %c0_67, %c0_68] : memref<4x1x8xf32, #tpu.memory_space<vmem>>, vector<1x1x8xf32>
    %92 = vector.shape_cast %91 : vector<1x1x8xf32> to vector<1x8xf32>
    %93 = vector.broadcast %92 : vector<1x8xf32> to vector<36x8xf32>
    %94 = arith.addf %90, %93 : vector<36x8xf32>
    %cst_69 = arith.constant 0.000000e+00 : f32
    %95 = vector.broadcast %cst_69 : f32 to vector<36x8xf32>
    %96 = arith.cmpf ogt, %94, %95 : vector<36x8xf32>
    %cst_70 = arith.constant 0.00999999977 : f32
    %97 = vector.broadcast %cst_70 : f32 to vector<36x8xf32>
    %98 = arith.mulf %97, %94 : vector<36x8xf32>
    %99 = arith.select %96, %94, %98 : vector<36x8xi1>, vector<36x8xf32>
    %100 = arith.truncf %99 : vector<36x8xf32> to vector<36x8xbf16>
    %c3_71 = arith.constant 3 : index
    %c0_72 = arith.constant 0 : index
    %c0_73 = arith.constant 0 : index
    %101 = vector.load %arg3[%c3_71, %c0_72, %c0_73] : memref<4x256x36xbf16, #tpu.memory_space<vmem>>, vector<1x256x36xbf16>
    %102 = vector.shape_cast %101 : vector<1x256x36xbf16> to vector<256x36xbf16>
    %cst_74 = arith.constant dense<0.000000e+00> : vector<256x8xf32>
    %103 = tpu.matmul %102, %100, %cst_74 {dimension_numbers = #tpu.dot_dimension_numbers<[1], [0], [0], [1], [0, 0, 1, 1], [], []>} : vector<256x36xbf16>, vector<36x8xbf16>, vector<256x8xf32> -> vector<256x8xf32>
    %104 = vector.shape_cast %103 : vector<256x8xf32> to vector<16x16x8xf32>
    %105 = arith.truncf %104 : vector<16x16x8xf32> to vector<16x16x8xbf16>
    %c0_75 = arith.constant 0 : index
    %c1_76 = arith.constant 1 : index
    %c1_77 = arith.constant 1 : index
    %c24 = arith.constant 24 : index
    %106 = vector.load %arg7[%c0_75, %c1_76, %c1_77, %c24] : memref<1x18x24x128xbf16, #tpu.memory_space<vmem>>, vector<1x16x16x8xbf16>
    %107 = vector.shape_cast %106 : vector<1x16x16x8xbf16> to vector<16x16x8xbf16>
    %108 = vector.shape_cast %105 : vector<16x16x8xbf16> to vector<1x16x16x8xbf16>
    tpu.vector_store %arg7[%c0_75, %c1_76, %c1_77, %c24], %108 {strides = array<i32>} : memref<1x18x24x128xbf16, #tpu.memory_space<vmem>>, vector<1x16x16x8xbf16>,
    %109 = vector.extract_strided_slice %1 {offsets = [0, 0], sizes = [256, 96], strides = [1, 1]} : vector<256x128xbf16> to vector<256x96xbf16>
    %110 = vector.shape_cast %109 : vector<256x96xbf16> to vector<16x16x96xbf16>
    %c0_78 = arith.constant 0 : index
    %c1_79 = arith.constant 1 : index
    %c1_80 = arith.constant 1 : index
    %c32 = arith.constant 32 : index
    %111 = vector.load %arg7[%c0_78, %c1_79, %c1_80, %c32] : memref<1x18x24x128xbf16, #tpu.memory_space<vmem>>, vector<1x16x16x96xbf16>
    %112 = vector.shape_cast %111 : vector<1x16x16x96xbf16> to vector<16x16x96xbf16>
    %113 = vector.shape_cast %110 : vector<16x16x96xbf16> to vector<1x16x16x96xbf16>
    tpu.vector_store %arg7[%c0_78, %c1_79, %c1_80, %c32], %113 {strides = array<i32>} : memref<1x18x24x128xbf16, #tpu.memory_space<vmem>>, vector<1x16x16x96xbf16>,
    %cst_81 = arith.constant 0.000000e+00 : bf16
    %114 = vector.broadcast %cst_81 : bf16 to vector<1x24x128xbf16>
    %c0_82 = arith.constant 0 : index
    %c0_83 = arith.constant 0 : index
    %c0_84 = arith.constant 0 : index
    %c0_85 = arith.constant 0 : index
    %115 = vector.load %arg7[%c0_82, %c0_83, %c0_84, %c0_85] : memref<1x18x24x128xbf16, #tpu.memory_space<vmem>>, vector<1x1x24x128xbf16>
    %116 = vector.shape_cast %115 : vector<1x1x24x128xbf16> to vector<1x24x128xbf16>
    %117 = vector.shape_cast %114 : vector<1x24x128xbf16> to vector<1x1x24x128xbf16>
    tpu.vector_store %arg7[%c0_82, %c0_83, %c0_84, %c0_85], %117 {strides = array<i32>} : memref<1x18x24x128xbf16, #tpu.memory_space<vmem>>, vector<1x1x24x128xbf16>,
    %c0_86 = arith.constant 0 : index
    %c17 = arith.constant 17 : index
    %c0_87 = arith.constant 0 : index
    %c0_88 = arith.constant 0 : index
    %118 = vector.load %arg7[%c0_86, %c17, %c0_87, %c0_88] : memref<1x18x24x128xbf16, #tpu.memory_space<vmem>>, vector<1x1x24x128xbf16>
    %119 = vector.shape_cast %118 : vector<1x1x24x128xbf16> to vector<1x24x128xbf16>
    %120 = vector.shape_cast %114 : vector<1x24x128xbf16> to vector<1x1x24x128xbf16>
    tpu.vector_store %arg7[%c0_86, %c17, %c0_87, %c0_88], %120 {strides = array<i32>} : memref<1x18x24x128xbf16, #tpu.memory_space<vmem>>, vector<1x1x24x128xbf16>,
    %cst_89 = arith.constant 0.000000e+00 : bf16
    %121 = vector.broadcast %cst_89 : bf16 to vector<16x1x128xbf16>
    %c0_90 = arith.constant 0 : index
    %c1_91 = arith.constant 1 : index
    %c0_92 = arith.constant 0 : index
    %c0_93 = arith.constant 0 : index
    %122 = vector.load %arg7[%c0_90, %c1_91, %c0_92, %c0_93] : memref<1x18x24x128xbf16, #tpu.memory_space<vmem>>, vector<1x16x1x128xbf16>
    %123 = vector.shape_cast %122 : vector<1x16x1x128xbf16> to vector<16x1x128xbf16>
    %124 = vector.shape_cast %121 : vector<16x1x128xbf16> to vector<1x16x1x128xbf16>
    tpu.vector_store %arg7[%c0_90, %c1_91, %c0_92, %c0_93], %124 {strides = array<i32>} : memref<1x18x24x128xbf16, #tpu.memory_space<vmem>>, vector<1x16x1x128xbf16>,
    %cst_94 = arith.constant 0.000000e+00 : bf16
    %125 = vector.broadcast %cst_94 : bf16 to vector<16x7x128xbf16>
    %c0_95 = arith.constant 0 : index
    %c1_96 = arith.constant 1 : index
    %c17_97 = arith.constant 17 : index
    %c0_98 = arith.constant 0 : index
    %126 = vector.load %arg7[%c0_95, %c1_96, %c17_97, %c0_98] : memref<1x18x24x128xbf16, #tpu.memory_space<vmem>>, vector<1x16x7x128xbf16>
    %127 = vector.shape_cast %126 : vector<1x16x7x128xbf16> to vector<16x7x128xbf16>
    %128 = vector.shape_cast %125 : vector<16x7x128xbf16> to vector<1x16x7x128xbf16>
    tpu.vector_store %arg7[%c0_95, %c1_96, %c17_97, %c0_98], %128 {strides = array<i32>} : memref<1x18x24x128xbf16, #tpu.memory_space<vmem>>, vector<1x16x7x128xbf16>,
    return
  }
  func.func @transform_0(%arg0: i32) -> (i32, i32, i32) {
    %c0_i32 = arith.constant 0 : i32
    %c0_i32_0 = arith.constant 0 : i32
    %c0_i32_1 = arith.constant 0 : i32
    return %arg0, %c0_i32, %c0_i32_0 : i32, i32, i32
  }
  func.func @transform_1(%arg0: i32) -> (i32, i32) {
    %c0_i32 = arith.constant 0 : i32
    %c0_i32_0 = arith.constant 0 : i32
    %c0_i32_1 = arith.constant 0 : i32
    return %c0_i32, %c0_i32_0 : i32, i32
  }
  func.func @transform_2(%arg0: i32) -> (i32, i32, i32) {
    %c0_i32 = arith.constant 0 : i32
    %c0_i32_0 = arith.constant 0 : i32
    %c0_i32_1 = arith.constant 0 : i32
    %c0_i32_2 = arith.constant 0 : i32
    return %c0_i32, %c0_i32_0, %c0_i32_1 : i32, i32, i32
  }
  func.func @transform_3(%arg0: i32) -> (i32, i32, i32) {
    %c0_i32 = arith.constant 0 : i32
    %c0_i32_0 = arith.constant 0 : i32
    %c0_i32_1 = arith.constant 0 : i32
    %c0_i32_2 = arith.constant 0 : i32
    return %c0_i32, %c0_i32_0, %c0_i32_1 : i32, i32, i32
  }
  func.func @transform_4(%arg0: i32) -> (i32, i32, i32) {
    %c0_i32 = arith.constant 0 : i32
    %c0_i32_0 = arith.constant 0 : i32
    %c0_i32_1 = arith.constant 0 : i32
    %c0_i32_2 = arith.constant 0 : i32
    return %c0_i32, %c0_i32_0, %c0_i32_1 : i32, i32, i32
  }
  func.func @transform_5(%arg0: i32) -> (i32, i32, i32) {
    %c0_i32 = arith.constant 0 : i32
    %c0_i32_0 = arith.constant 0 : i32
    %c0_i32_1 = arith.constant 0 : i32
    %c0_i32_2 = arith.constant 0 : i32
    return %c0_i32, %c0_i32_0, %c0_i32_1 : i32, i32, i32
  }
  func.func @transform_6(%arg0: i32) -> (i32, i32, i32, i32) {
    %c0_i32 = arith.constant 0 : i32
    %c0_i32_0 = arith.constant 0 : i32
    %c0_i32_1 = arith.constant 0 : i32
    %c0_i32_2 = arith.constant 0 : i32
    return %arg0, %c0_i32, %c0_i32_0, %c0_i32_1 : i32, i32, i32, i32
  }
}

</mosaic_0001>

<llo_original>
// kernel: tpu_custom_call.1
$region0: #{tpu_custom_call.1}
  #allocation0 [shape = 'u32[]', space=smem, size = 0x4, offset = 0x4, fixed_abs, tag = 'smem constant byte address 0x4 - core index']
  #allocation1 [shape = 'u32[72,128]{1,0:T(1,128)}', space=vmem, size = 0x9000, scoped, tag = 'internal scratch']
  %s0 = inlined_call_operand.vmem [shape: bf16[2,256,128], index: 0, kind: input, shape index: {}]
  %s1 = inlined_call_operand.vmem [shape: bf16[64,256], index: 1, kind: input, shape index: {}]
  %s2 = inlined_call_operand.vmem [shape: bf16[4,256,36], index: 2, kind: input, shape index: {}]
  %s3 = inlined_call_operand.vmem [shape: bf16[4,128,8], index: 3, kind: input, shape index: {}]
  %s4 = inlined_call_operand.vmem [shape: f32[4,1,8], index: 4, kind: input, shape index: {}]
  %s5 = inlined_call_operand.vmem [shape: f32[4,1,8], index: 5, kind: input, shape index: {}]
  %s6 = inlined_call_operand.hbm [shape: bf16[2,18,24,128], index: 6, kind: output, shape index: {}]
  %s7 = sld [smem:[#allocation0]]
  $region57: #{tpu_custom_call.1} parent=0
    _
  %s9 = ssub.s32 1, %s7
  %s10 = scalar_select 0, %s9, %s7
  $region1: #{tpu_custom_call.1} parent=0
    #allocation2 [shape = 'u8[221184]{0}', space=vmem, size = 0x36000, scoped, tag = 'output window, operand 0']
    #allocation3 [shape = 's32[2]{0}', space=sflag, size = 0x8, scoped, tag = 'scoped memory for tpu_custom_call.1']
    %11 = vsyncpa [#allocation3], 0
    %s12 = scalar_lea.sflag [#allocation3], 1
    %13 = vsyncpa %s12, 0
    loop: start=0, step=1, limit=4
    $region2: #{tpu_custom_call.1} parent=1 // loop_pre_header
      _
    $region3: #{tpu_custom_call.1} parent=1 // loop_header
      %s15 = sphi 0, %s19
      %p16 = scmp.ge.s32.totalorder %s15, 4
      %s25 = sphi 0, %s27
      %s28 = sphi 0, %s25
      %s29 = sphi 0, %s28
      %s45 = sphi 0, %s29
      %s49 = sphi 0, %s49
      %s51 = sphi 0, %s49
      %s52 = sphi 0, %s51
      %s66 = sphi 0, %s52
      %s70 = sphi 0, %s70
      %s72 = sphi 0, %s70
      %s73 = sphi 0, %s72
      %s87 = sphi 0, %s73
      %s91 = sphi 0, %s91
      %s93 = sphi 0, %s91
      %s94 = sphi 0, %s93
      %s108 = sphi 0, %s94
      %s112 = sphi 0, %s112
      %s114 = sphi 0, %s112
      %s115 = sphi 0, %s114
      %s129 = sphi 0, %s115
      %s133 = sphi 0, %s133
      %s135 = sphi 0, %s133
      %s136 = sphi 0, %s135
      %s150 = sphi 0, %s136
      %s156 = sphi 0, %s158
      %s159 = sphi 0, %s156
      %s160 = sphi 0, %s159
      %s176 = sphi 0, %s160
    $region4: #{tpu_custom_call.1} parent=1 // loop_header_branch
      %18 = sbr.rel (%p16) target = $region8
    $region5: #{tpu_custom_call.1} parent=1 // loop_body
      %s20 = ssub.s32 %s15, 1
      %s21 = ssub.s32 %s15, 2
      %s22 = sadd.s32 %s15, 1
      %s23 = ssub.s32 %s15, %s22
      %p24 = scmp.eq.s32.totalorder %s23, 0
      %s26 = sadd.s32 %s25, 1
      %s27 = scalar_select %p24, %s25, %s26
      %p30 = pneg %p24
      %p31 = scmp.eq.s32.totalorder %s15, 1
      %p32 = por %p30, %p31
      %p33 = scmp.ne.s32.totalorder %s25, %s28
      %p34 = scmp.eq.s32.totalorder %s15, 0
      %p35 = por %p33, %p34
      %p36 = scmp.ne.s32.totalorder %s25, %s28
      %p37 = scmp.eq.s32.totalorder %s20, 1
      %p38 = por %p36, %p37
      %p39 = scmp.ne.s32.totalorder %s28, %s29
      %p40 = scmp.eq.s32.totalorder %s20, 0
      %p41 = por %p39, %p40
      %p42 = scmp.ne.s32.totalorder %s28, %s29
      %p43 = scmp.eq.s32.totalorder %s21, 1
      %p44 = por %p42, %p43
      %p46 = scmp.ne.s32.totalorder %s29, %s45
      %p47 = scmp.eq.s32.totalorder %s21, 0
      %p48 = por %p46, %p47
      %s50 = sadd.s32 %s49, 1
      %p53 = scmp.eq.s32.totalorder %s15, 1
      %p54 = scmp.ne.s32.totalorder %s49, %s51
      %p55 = scmp.eq.s32.totalorder %s15, 0
      %p56 = por %p54, %p55
      %p57 = scmp.ne.s32.totalorder %s49, %s51
      %p58 = scmp.eq.s32.totalorder %s20, 1
      %p59 = por %p57, %p58
      %p60 = scmp.ne.s32.totalorder %s51, %s52
      %p61 = scmp.eq.s32.totalorder %s20, 0
      %p62 = por %p60, %p61
      %p63 = scmp.ne.s32.totalorder %s51, %s52
      %p64 = scmp.eq.s32.totalorder %s21, 1
      %p65 = por %p63, %p64
      %p67 = scmp.ne.s32.totalorder %s52, %s66
      %p68 = scmp.eq.s32.totalorder %s21, 0
      %p69 = por %p67, %p68
      %s71 = sadd.s32 %s70, 1
      %p74 = scmp.eq.s32.totalorder %s15, 1
      %p75 = scmp.ne.s32.totalorder %s70, %s72
      %p76 = scmp.eq.s32.totalorder %s15, 0
      %p77 = por %p75, %p76
      %p78 = scmp.ne.s32.totalorder %s70, %s72
      %p79 = scmp.eq.s32.totalorder %s20, 1
      %p80 = por %p78, %p79
      %p81 = scmp.ne.s32.totalorder %s72, %s73
      %p82 = scmp.eq.s32.totalorder %s20, 0
      %p83 = por %p81, %p82
      %p84 = scmp.ne.s32.totalorder %s72, %s73
      %p85 = scmp.eq.s32.totalorder %s21, 1
      %p86 = por %p84, %p85
      %p88 = scmp.ne.s32.totalorder %s73, %s87
      %p89 = scmp.eq.s32.totalorder %s21, 0
      %p90 = por %p88, %p89
      %s92 = sadd.s32 %s91, 1
      %p95 = scmp.eq.s32.totalorder %s15, 1
      %p96 = scmp.ne.s32.totalorder %s91, %s93
      %p97 = scmp.eq.s32.totalorder %s15, 0
      %p98 = por %p96, %p97
      %p99 = scmp.ne.s32.totalorder %s91, %s93
      %p100 = scmp.eq.s32.totalorder %s20, 1
      %p101 = por %p99, %p100
      %p102 = scmp.ne.s32.totalorder %s93, %s94
      %p103 = scmp.eq.s32.totalorder %s20, 0
      %p104 = por %p102, %p103
      %p105 = scmp.ne.s32.totalorder %s93, %s94
      %p106 = scmp.eq.s32.totalorder %s21, 1
      %p107 = por %p105, %p106
      %p109 = scmp.ne.s32.totalorder %s94, %s108
      %p110 = scmp.eq.s32.totalorder %s21, 0
      %p111 = por %p109, %p110
      %s113 = sadd.s32 %s112, 1
      %p116 = scmp.eq.s32.totalorder %s15, 1
      %p117 = scmp.ne.s32.totalorder %s112, %s114
      %p118 = scmp.eq.s32.totalorder %s15, 0
      %p119 = por %p117, %p118
      %p120 = scmp.ne.s32.totalorder %s112, %s114
      %p121 = scmp.eq.s32.totalorder %s20, 1
      %p122 = por %p120, %p121
      %p123 = scmp.ne.s32.totalorder %s114, %s115
      %p124 = scmp.eq.s32.totalorder %s20, 0
      %p125 = por %p123, %p124
      %p126 = scmp.ne.s32.totalorder %s114, %s115
      %p127 = scmp.eq.s32.totalorder %s21, 1
      %p128 = por %p126, %p127
      %p130 = scmp.ne.s32.totalorder %s115, %s129
      %p131 = scmp.eq.s32.totalorder %s21, 0
      %p132 = por %p130, %p131
      %s134 = sadd.s32 %s133, 1
      %p137 = scmp.eq.s32.totalorder %s15, 1
      %p138 = scmp.ne.s32.totalorder %s133, %s135
      %p139 = scmp.eq.s32.totalorder %s15, 0
      %p140 = por %p138, %p139
      %p141 = scmp.ne.s32.totalorder %s133, %s135
      %p142 = scmp.eq.s32.totalorder %s20, 1
      %p143 = por %p141, %p142
      %p144 = scmp.ne.s32.totalorder %s135, %s136
      %p145 = scmp.eq.s32.totalorder %s20, 0
      %p146 = por %p144, %p145
      %p147 = scmp.ne.s32.totalorder %s135, %s136
      %p148 = scmp.eq.s32.totalorder %s21, 1
      %p149 = por %p147, %p148
      %p151 = scmp.ne.s32.totalorder %s136, %s150
      %p152 = scmp.eq.s32.totalorder %s21, 0
      %p153 = por %p151, %p152
      %s154 = ssub.s32 %s15, %s22
      %p155 = scmp.eq.s32.totalorder %s154, 0
      %s157 = sadd.s32 %s156, 1
      %s158 = scalar_select %p155, %s156, %s157
      %p161 = pneg %p155
      %p162 = scmp.eq.s32.totalorder %s15, 1
      %p163 = por %p161, %p162
      %p164 = scmp.ne.s32.totalorder %s156, %s159
      %p165 = scmp.eq.s32.totalorder %s15, 0
      %p166 = por %p164, %p165
      %p167 = scmp.ne.s32.totalorder %s156, %s159
      %p168 = scmp.eq.s32.totalorder %s20, 1
      %p169 = por %p167, %p168
      %p170 = scmp.ne.s32.totalorder %s159, %s160
      %p171 = scmp.eq.s32.totalorder %s20, 0
      %p172 = por %p170, %p171
      %p173 = scmp.ne.s32.totalorder %s159, %s160
      %p174 = scmp.eq.s32.totalorder %s21, 1
      %p175 = por %p173, %p174
      %p177 = scmp.ne.s32.totalorder %s160, %s176
      %p178 = scmp.eq.s32.totalorder %s21, 0
      %p179 = por %p177, %p178
      %p180 = scmp.le.s32.totalorder 1, %s15
      %p181 = scmp.lt.s32.totalorder %s15, 3
      %p182 = pnand %p180, %p181
      %p183 = pneg %p182
      // Predicated region
      $region9: #{tpu_custom_call.1} parent=5 // pred_check
        _
      $region10: #{tpu_custom_call.1} parent=5 // pred_check_branch
        %185 = sbr.rel (%p182) target = $region12
      $region11: #{tpu_custom_call.1} parent=5 // pred_region
        %s186 = ssub.s32 %s15, 1
        // Predicated region
        $region13: #{tpu_custom_call.1} parent=11 // pred_check
          %p187 = pneg %p62
        $region14: #{tpu_custom_call.1} parent=11 // pred_check_branch
          %189 = sbr.rel (%p187) target = $region16
        $region15: #{tpu_custom_call.1} parent=11 // pred_region
          _
        $region16: #{tpu_custom_call.1} parent=11 // pred_fallthru
          _
        // Predicated region
        $region17: #{tpu_custom_call.1} parent=11 // pred_check
          %p190 = pneg %p83
        $region18: #{tpu_custom_call.1} parent=11 // pred_check_branch
          %192 = sbr.rel (%p190) target = $region20
        $region19: #{tpu_custom_call.1} parent=11 // pred_region
          _
        $region20: #{tpu_custom_call.1} parent=11 // pred_fallthru
          _
        // Predicated region
        $region21: #{tpu_custom_call.1} parent=11 // pred_check
          %p193 = pneg %p104
        $region22: #{tpu_custom_call.1} parent=11 // pred_check_branch
          %195 = sbr.rel (%p193) target = $region24
        $region23: #{tpu_custom_call.1} parent=11 // pred_region
          _
        $region24: #{tpu_custom_call.1} parent=11 // pred_fallthru
          _
        // Predicated region
        $region25: #{tpu_custom_call.1} parent=11 // pred_check
          %p196 = pneg %p125
        $region26: #{tpu_custom_call.1} parent=11 // pred_check_branch
          %198 = sbr.rel (%p196) target = $region28
        $region27: #{tpu_custom_call.1} parent=11 // pred_region
          _
        $region28: #{tpu_custom_call.1} parent=11 // pred_fallthru
          _
        // Predicated region
        $region29: #{tpu_custom_call.1} parent=11 // pred_check
          %p199 = pneg %p146
        $region30: #{tpu_custom_call.1} parent=11 // pred_check_branch
          %201 = sbr.rel (%p199) target = $region32
        $region31: #{tpu_custom_call.1} parent=11 // pred_region
          _
        $region32: #{tpu_custom_call.1} parent=11 // pred_fallthru
          _
      $region12: #{tpu_custom_call.1} parent=5 // pred_fallthru
        _
      %p202 = scmp.lt.s32.totalorder %s15, 2
      // Predicated region
      $region33: #{tpu_custom_call.1} parent=5 // pred_check
        %p203 = pneg %p202
      $region34: #{tpu_custom_call.1} parent=5 // pred_check_branch
        %205 = sbr.rel (%p203) target = $region36
      $region35: #{tpu_custom_call.1} parent=5 // pred_region
        // Predicated region
        $region37: #{tpu_custom_call.1} parent=35 // pred_check
          %p206 = pneg %p35
        $region38: #{tpu_custom_call.1} parent=35 // pred_check_branch
          %208 = sbr.rel (%p206) target = $region40
        $region39: #{tpu_custom_call.1} parent=35 // pred_region
          %p209 = scmp.lt.s32.totalorder %s15, 1
          %s210 = scalar_select %p209, %s15, 1
          %s211 = smul.addr %s210, 32
          %s212 = smul.addr %s211, 4
          %s213 = scalar_lea.vmem %s0, %s212
        $region40: #{tpu_custom_call.1} parent=35 // pred_fallthru
          _
      $region36: #{tpu_custom_call.1} parent=5 // pred_fallthru
        _
      %p214 = scmp.le.s32.totalorder 1, %s15
      %p215 = scmp.lt.s32.totalorder %s15, 3
      %p216 = pnand %p214, %p215
      %p217 = pneg %p216
      // Predicated region
      $region41: #{tpu_custom_call.1} parent=5 // pred_check
        _
      $region42: #{tpu_custom_call.1} parent=5 // pred_check_branch
        %219 = sbr.rel (%p216) target = $region44
      $region43: #{tpu_custom_call.1} parent=5 // pred_region
        %s220 = ssub.s32 %s15, 1
        %p221 = scmp.lt.s32.totalorder %s20, 1
        %s222 = scalar_select %p221, %s20, 1
        %s223 = smul.addr %s222, 32
        %s224 = smul.addr %s223, 4
        %s225 = scalar_lea.vmem %s0, %s224
        %p226 = pneg %p41
        %p227 = pneg %p38
        %p228 = pneg %p62
        %p229 = pneg %p59
        %p230 = pneg %p83
        %p231 = pneg %p80
        %p232 = pneg %p104
        %p233 = pneg %p101
        %p234 = pneg %p125
        %p235 = pneg %p122
        %p236 = pneg %p146
        %p237 = pneg %p143
        %p238 = pneg %p172
        %p239 = pneg %p169
        %s240 = sand.u32 %s159, 1
        %s241 = scalar_lea.sflag [#allocation3], %s240
        %s242 = sand.u32 %s159, 1
        %s243 = smul.addr %s242, 216
        %s244 = scalar_lea.vmem [#allocation2], %s243
        %p245 = scmp.lt.s32.totalorder %s20, 1
        %s246 = scalar_select %p245, %s20, 1
        %s247 = smul.addr %s246, 32
        %s248 = smul.addr %s247, 4
        %s249 = scalar_lea.vmem %s0, %s248
        %v251 = vld [vmem:[%s249] sm:$0xf]
        %v252 = vld [vmem:[%s249 + $0x4] sm:$0xf]
        %v253 = vld [vmem:[%s249 + $0x8] sm:$0xf]
        %v254 = vld [vmem:[%s249 + $0xc] sm:$0xf]
        %v255 = vld [vmem:[%s249 + $0x10] sm:$0xf]
        %v256 = vld [vmem:[%s249 + $0x14] sm:$0xf]
        %v257 = vld [vmem:[%s249 + $0x18] sm:$0xf]
        %v258 = vld [vmem:[%s249 + $0x1c] sm:$0xf]
        %v259 = vld [vmem:[%s249 + $0x20] sm:$0xf]
        %v260 = vld [vmem:[%s249 + $0x24] sm:$0xf]
        %v261 = vld [vmem:[%s249 + $0x28] sm:$0xf]
        %v262 = vld [vmem:[%s249 + $0x2c] sm:$0xf]
        %v263 = vld [vmem:[%s249 + $0x30] sm:$0xf]
        %v264 = vld [vmem:[%s249 + $0x34] sm:$0xf]
        %v265 = vld [vmem:[%s249 + $0x38] sm:$0xf]
        %v266 = vld [vmem:[%s249 + $0x3c] sm:$0xf]
        %v267 = vld [vmem:[%s249 + $0x40] sm:$0xf]
        %v268 = vld [vmem:[%s249 + $0x44] sm:$0xf]
        %v269 = vld [vmem:[%s249 + $0x48] sm:$0xf]
        %v270 = vld [vmem:[%s249 + $0x4c] sm:$0xf]
        %v271 = vld [vmem:[%s249 + $0x50] sm:$0xf]
        %v272 = vld [vmem:[%s249 + $0x54] sm:$0xf]
        %v273 = vld [vmem:[%s249 + $0x58] sm:$0xf]
        %v274 = vld [vmem:[%s249 + $0x5c] sm:$0xf]
        %v275 = vld [vmem:[%s249 + $0x60] sm:$0xf]
        %v276 = vld [vmem:[%s249 + $0x64] sm:$0xf]
        %v277 = vld [vmem:[%s249 + $0x68] sm:$0xf]
        %v278 = vld [vmem:[%s249 + $0x6c] sm:$0xf]
        %v279 = vld [vmem:[%s249 + $0x70] sm:$0xf]
        %v280 = vld [vmem:[%s249 + $0x74] sm:$0xf]
        %v281 = vld [vmem:[%s249 + $0x78] sm:$0xf]
        %v282 = vld [vmem:[%s249 + $0x7c] sm:$0xf]
        %v283 = vld [vmem:[%s1] sm:$0xff]
        %v284 = vld [vmem:[%s1 + $0x8] sm:$0xff]
        %v285 = vld [vmem:[%s1 + $0x10] sm:$0xff]
        %v286 = vld [vmem:[%s1 + $0x18] sm:$0xff]
        %v287 = vld [vmem:[%s1 + $0x20] sm:$0xff]
        %v288 = vld [vmem:[%s1 + $0x28] sm:$0xff]
        %v289 = vld [vmem:[%s1 + $0x30] sm:$0xff]
        %v290 = vld [vmem:[%s1 + $0x38] sm:$0xff]
        %v299 = vunpack.c.l.b16 %v283
        %v300 = vunpack.c.h.b16 %v283
        %v301 = vunpack.c.l.b16 %v284
        %v302 = vunpack.c.h.b16 %v284
        %v303 = vunpack.c.l.b16 %v285
        %v304 = vunpack.c.h.b16 %v285
        %v305 = vunpack.c.l.b16 %v286
        %v306 = vunpack.c.h.b16 %v286
        %v307 = vunpack.c.l.b16 %v287
        %v308 = vunpack.c.h.b16 %v287
        %v309 = vunpack.c.l.b16 %v288
        %v310 = vunpack.c.h.b16 %v288
        %v311 = vunpack.c.l.b16 %v289
        %v312 = vunpack.c.h.b16 %v289
        %v313 = vunpack.c.l.b16 %v290
        %v314 = vunpack.c.h.b16 %v290
        %v315 = vpack.c.b16 %v301, %v299
        %v316 = vpack.c.b16 %v302, %v300
        %v317 = vpack.c.b16 %v305, %v303
        %v318 = vpack.c.b16 %v306, %v304
        %v319 = vpack.c.b16 %v309, %v307
        %v320 = vpack.c.b16 %v310, %v308
        %v321 = vpack.c.b16 %v313, %v311
        %v322 = vpack.c.b16 %v314, %v312
        %v363 = vunpack.c.l.b16 %v251
        %v364 = vunpack.c.l.b16 %v252
        %v365 = vunpack.c.l.b16 %v253
        %v366 = vunpack.c.l.b16 %v254
        %v367 = vunpack.c.l.b16 %v255
        %v368 = vunpack.c.l.b16 %v256
        %v369 = vunpack.c.l.b16 %v257
        %v370 = vunpack.c.l.b16 %v258
        %v371 = vunpack.c.l.b16 %v259
        %v372 = vunpack.c.l.b16 %v260
        %v373 = vunpack.c.l.b16 %v261
        %v374 = vunpack.c.l.b16 %v262
        %v375 = vunpack.c.l.b16 %v263
        %v376 = vunpack.c.l.b16 %v264
        %v377 = vunpack.c.l.b16 %v265
        %v378 = vunpack.c.l.b16 %v266
        %v379 = vunpack.c.l.b16 %v267
        %v380 = vunpack.c.l.b16 %v268
        %v381 = vunpack.c.l.b16 %v269
        %v382 = vunpack.c.l.b16 %v270
        %v383 = vunpack.c.l.b16 %v271
        %v384 = vunpack.c.l.b16 %v272
        %v385 = vunpack.c.l.b16 %v273
        %v386 = vunpack.c.l.b16 %v274
        %v387 = vunpack.c.l.b16 %v275
        %v388 = vunpack.c.l.b16 %v276
        %v389 = vunpack.c.l.b16 %v277
        %v390 = vunpack.c.l.b16 %v278
        %v391 = vunpack.c.l.b16 %v279
        %v392 = vunpack.c.l.b16 %v280
        %v393 = vunpack.c.l.b16 %v281
        %v394 = vunpack.c.l.b16 %v282
        %v395 = vpack.c.b16 %v364, %v363
        %v396 = vpack.c.b16 %v366, %v365
        %v397 = vpack.c.b16 %v368, %v367
        %v398 = vpack.c.b16 %v370, %v369
        %v399 = vpack.c.b16 %v372, %v371
        %v400 = vpack.c.b16 %v374, %v373
        %v401 = vpack.c.b16 %v376, %v375
        %v402 = vpack.c.b16 %v378, %v377
        %v403 = vpack.c.b16 %v380, %v379
        %v404 = vpack.c.b16 %v382, %v381
        %v405 = vpack.c.b16 %v384, %v383
        %v406 = vpack.c.b16 %v386, %v385
        %v407 = vpack.c.b16 %v388, %v387
        %v408 = vpack.c.b16 %v390, %v389
        %v409 = vpack.c.b16 %v392, %v391
        %v410 = vpack.c.b16 %v394, %v393
        %427 = vmatpush.bf16.msra.mxu0 %v402
        %428 = vmatpush.bf16.msra.mxu0 %v401
        %429 = vmatpush.bf16.msra.mxu0 %v400
        %430 = vmatpush.bf16.msra.mxu0 %v399
        %431 = vmatpush.bf16.msra.mxu0 %v398
        %432 = vmatpush.bf16.msra.mxu0 %v397
        %433 = vmatpush.bf16.msra.mxu0 %v396
        %434 = vmatpush.bf16.msra.mxu0 %v395
        %435 = vmatmul.bf16.gmra.mxu0 %v315
        %v436 = vpop.f32.mrf.mxu0
        %v437 = vadd.f32 0.0, %v436
        %v438 = vpop.f32.mrf.mxu0
        %v439 = vadd.f32 0.0, %v438
        %440 = vmatmul.bf16.gmra.mxu0 %v317
        %v441 = vpop.f32.mrf.mxu0
        %v442 = vadd.f32 0.0, %v441
        %v443 = vpop.f32.mrf.mxu0
        %v444 = vadd.f32 0.0, %v443
        %445 = vmatmul.bf16.gmra.mxu0 %v319
        %v446 = vpop.f32.mrf.mxu0
        %v447 = vadd.f32 0.0, %v446
        %v448 = vpop.f32.mrf.mxu0
        %v449 = vadd.f32 0.0, %v448
        %450 = vmatmul.bf16.gmra.mxu0 %v321
        %v451 = vpop.f32.mrf.mxu0
        %v452 = vadd.f32 0.0, %v451
        %v453 = vpop.f32.mrf.mxu0
        %454 = vdwg.mxu0
        %455 = vmatpush.bf16.msra.mxu0 %v410
        %456 = vmatpush.bf16.msra.mxu0 %v409
        %457 = vmatpush.bf16.msra.mxu0 %v408
        %458 = vmatpush.bf16.msra.mxu0 %v407
        %459 = vmatpush.bf16.msra.mxu0 %v406
        %460 = vmatpush.bf16.msra.mxu0 %v405
        %461 = vmatpush.bf16.msra.mxu0 %v404
        %462 = vmatpush.bf16.msra.mxu0 %v403
        %463 = vmatmul.bf16.gmra.mxu0 %v316
        %v464 = vpop.f32.mrf.mxu0
        %v465 = vadd.f32 %v437, %v464
        %v466 = vpop.f32.mrf.mxu0
        %v467 = vadd.f32 %v439, %v466
        %468 = vmatmul.bf16.gmra.mxu0 %v318
        %v469 = vpop.f32.mrf.mxu0
        %v470 = vadd.f32 %v442, %v469
        %v471 = vpop.f32.mrf.mxu0
        %v472 = vadd.f32 %v444, %v471
        %473 = vmatmul.bf16.gmra.mxu0 %v320
        %v474 = vpop.f32.mrf.mxu0
        %v475 = vadd.f32 %v447, %v474
        %v476 = vpop.f32.mrf.mxu0
        %v477 = vadd.f32 %v449, %v476
        %478 = vmatmul.bf16.gmra.mxu0 %v322
        %v479 = vpop.f32.mrf.mxu0
        %v480 = vadd.f32 %v452, %v479
        %v481 = vpop.f32.mrf.mxu0
        %482 = vdwg.mxu0
        %v483 = vpack.c.bf16 %v465, %v465
        %v484 = vpack.c.bf16 %v467, %v467
        %v485 = vpack.c.bf16 %v470, %v470
        %v486 = vpack.c.bf16 %v472, %v472
        %v487 = vpack.c.bf16 %v475, %v475
        %v488 = vpack.c.bf16 %v477, %v477
        %v489 = vpack.c.bf16 %v480, %v480
        %v490 = vld [vmem:[%s3] sm:$0xf]
        %v491 = vld [vmem:[%s3 + $0x4] sm:$0xf]
        %v492 = vld [vmem:[%s3 + $0x8] sm:$0xf]
        %v493 = vld [vmem:[%s3 + $0xc] sm:$0xf]
        %v494 = vld [vmem:[%s3 + $0x10] sm:$0xf]
        %v495 = vld [vmem:[%s3 + $0x14] sm:$0xf]
        %v496 = vld [vmem:[%s3 + $0x18] sm:$0xf]
        %v497 = vld [vmem:[%s3 + $0x1c] sm:$0xf]
        %v498 = vld [vmem:[%s3 + $0x20] sm:$0xf]
        %v499 = vld [vmem:[%s3 + $0x24] sm:$0xf]
        %v500 = vld [vmem:[%s3 + $0x28] sm:$0xf]
        %v501 = vld [vmem:[%s3 + $0x2c] sm:$0xf]
        %v502 = vld [vmem:[%s3 + $0x30] sm:$0xf]
        %v503 = vld [vmem:[%s3 + $0x34] sm:$0xf]
        %v504 = vld [vmem:[%s3 + $0x38] sm:$0xf]
        %v505 = vld [vmem:[%s3 + $0x3c] sm:$0xf]
        %v511 = vunpack.c.l.b16 %v483
        %v512 = vunpack.c.l.b16 %v484
        %v513 = vunpack.c.l.b16 %v485
        %v514 = vunpack.c.l.b16 %v486
        %v515 = vunpack.c.l.b16 %v487
        %v516 = vpack.c.b16 %v512, %v511
        %v517 = vpack.c.b16 %v514, %v513
        %v518 = vpack.c.b16 %v515, %v515
        %v538 = vunpack.c.l.b16 %v490
        %v539 = vunpack.c.l.b16 %v491
        %v540 = vunpack.c.l.b16 %v492
        %v541 = vunpack.c.l.b16 %v493
        %v542 = vunpack.c.l.b16 %v494
        %v543 = vunpack.c.l.b16 %v495
        %v544 = vunpack.c.l.b16 %v496
        %v545 = vunpack.c.l.b16 %v497
        %v546 = vunpack.c.l.b16 %v498
        %v547 = vunpack.c.l.b16 %v499
        %v548 = vunpack.c.l.b16 %v500
        %v549 = vunpack.c.l.b16 %v501
        %v550 = vunpack.c.l.b16 %v502
        %v551 = vunpack.c.l.b16 %v503
        %v552 = vunpack.c.l.b16 %v504
        %v553 = vunpack.c.l.b16 %v505
        %v554 = vpack.c.b16 %v539, %v538
        %v555 = vpack.c.b16 %v541, %v540
        %v556 = vpack.c.b16 %v543, %v542
        %v557 = vpack.c.b16 %v545, %v544
        %v558 = vpack.c.b16 %v547, %v546
        %v559 = vpack.c.b16 %v549, %v548
        %v560 = vpack.c.b16 %v551, %v550
        %v561 = vpack.c.b16 %v553, %v552
        %570 = vmatpush.bf16.msra.mxu0 %v561
        %571 = vmatpush.bf16.msra.mxu0 %v560
        %572 = vmatpush.bf16.msra.mxu0 %v559
        %573 = vmatpush.bf16.msra.mxu0 %v558
        %574 = vmatpush.bf16.msra.mxu0 %v557
        %575 = vmatpush.bf16.msra.mxu0 %v556
        %576 = vmatpush.bf16.msra.mxu0 %v555
        %577 = vmatpush.bf16.msra.mxu0 %v554
        %578 = vmatmul.bf16.gmra.mxu0 %v516
        %v579 = vpop.f32.mrf.mxu0
        %v580 = vadd.f32 0.0, %v579
        %v581 = vpop.f32.mrf.mxu0
        %v582 = vadd.f32 0.0, %v581
        %583 = vmatmul.bf16.gmra.mxu0 %v517
        %v584 = vpop.f32.mrf.mxu0
        %v585 = vadd.f32 0.0, %v584
        %v586 = vpop.f32.mrf.mxu0
        %v587 = vadd.f32 0.0, %v586
        %588 = vmatmul.bf16.gmra.mxu0 %v518
        %v589 = vpop.f32.mrf.mxu0
        %v590 = vadd.f32 0.0, %v589
        %v591 = vpop.f32.mrf.mxu0
        %592 = vdwg.mxu0
        %v593 = vld [vmem:[%s4] sm:$0x1]
        %v595 = vperm.slane %v593, 0
        %v597 = vmul.f32 %v580, %v595
        %v598 = vmul.f32 %v582, %v595
        %v599 = vmul.f32 %v585, %v595
        %v600 = vmul.f32 %v587, %v595
        %v601 = vmul.f32 %v590, %v595
        %v602 = vld [vmem:[%s5] sm:$0x1]
        %v604 = vperm.slane %v602, 0
        %v606 = vadd.f32 %v597, %v604
        %v607 = vadd.f32 %v598, %v604
        %v608 = vadd.f32 %v599, %v604
        %v609 = vadd.f32 %v600, %v604
        %v610 = vadd.f32 %v601, %v604
        %vm611 = vcmp.gt.f32.partialorder %v606, 0.0
        %vm612 = vcmp.gt.f32.partialorder %v607, 0.0
        %vm613 = vcmp.gt.f32.partialorder %v608, 0.0
        %vm614 = vcmp.gt.f32.partialorder %v609, 0.0
        %vm615 = vcmp.gt.f32.partialorder %v610, 0.0
        %v616 = vmul.f32 %v606, 0.01
        %v617 = vmul.f32 %v607, 0.01
        %v618 = vmul.f32 %v608, 0.01
        %v619 = vmul.f32 %v609, 0.01
        %v620 = vmul.f32 %v610, 0.01
        %v621 = vsel %vm611, %v606, %v616
        %v622 = vsel %vm612, %v607, %v617
        %v623 = vsel %vm613, %v608, %v618
        %v624 = vsel %vm614, %v609, %v619
        %v625 = vsel %vm615, %v610, %v620
        %v626 = vpack.c.bf16 %v622, %v621
        %v627 = vpack.c.bf16 %v624, %v623
        %v628 = vpack.c.bf16 %v625, %v625
        %v629 = vld [vmem:[%s2] sm:$0xf]
        %v630 = vld [vmem:[%s2 + $0x4] sm:$0xf]
        %v631 = vld [vmem:[%s2 + $0x8] sm:$0xf]
        %v632 = vld [vmem:[%s2 + $0xc] sm:$0xf]
        %v633 = vld [vmem:[%s2 + $0x10] sm:$0xf]
        %v634 = vld [vmem:[%s2 + $0x14] sm:$0xf]
        %v635 = vld [vmem:[%s2 + $0x18] sm:$0xf]
        %v636 = vld [vmem:[%s2 + $0x1c] sm:$0xf]
        %v637 = vld [vmem:[%s2 + $0x20] sm:$0xf]
        %v638 = vld [vmem:[%s2 + $0x24] sm:$0xf]
        %v639 = vld [vmem:[%s2 + $0x28] sm:$0xf]
        %v640 = vld [vmem:[%s2 + $0x2c] sm:$0xf]
        %v641 = vld [vmem:[%s2 + $0x30] sm:$0xf]
        %v642 = vld [vmem:[%s2 + $0x34] sm:$0xf]
        %v643 = vld [vmem:[%s2 + $0x38] sm:$0xf]
        %v644 = vld [vmem:[%s2 + $0x3c] sm:$0xf]
        %v645 = vld [vmem:[%s2 + $0x40] sm:$0xf]
        %v646 = vld [vmem:[%s2 + $0x44] sm:$0xf]
        %v647 = vld [vmem:[%s2 + $0x48] sm:$0xf]
        %v648 = vld [vmem:[%s2 + $0x4c] sm:$0xf]
        %v649 = vld [vmem:[%s2 + $0x50] sm:$0xf]
        %v650 = vld [vmem:[%s2 + $0x54] sm:$0xf]
        %v651 = vld [vmem:[%s2 + $0x58] sm:$0xf]
        %v652 = vld [vmem:[%s2 + $0x5c] sm:$0xf]
        %v653 = vld [vmem:[%s2 + $0x60] sm:$0xf]
        %v654 = vld [vmem:[%s2 + $0x64] sm:$0xf]
        %v655 = vld [vmem:[%s2 + $0x68] sm:$0xf]
        %v656 = vld [vmem:[%s2 + $0x6c] sm:$0xf]
        %v657 = vld [vmem:[%s2 + $0x70] sm:$0xf]
        %v658 = vld [vmem:[%s2 + $0x74] sm:$0xf]
        %v659 = vld [vmem:[%s2 + $0x78] sm:$0xf]
        %v660 = vld [vmem:[%s2 + $0x7c] sm:$0xf]
        %v693 = vunpack.c.l.b16 %v629
        %v694 = vunpack.c.l.b16 %v630
        %v695 = vunpack.c.l.b16 %v631
        %v696 = vunpack.c.l.b16 %v632
        %v697 = vunpack.c.l.b16 %v633
        %v698 = vunpack.c.l.b16 %v634
        %v699 = vunpack.c.l.b16 %v635
        %v700 = vunpack.c.l.b16 %v636
        %v701 = vunpack.c.l.b16 %v637
        %v702 = vunpack.c.l.b16 %v638
        %v703 = vunpack.c.l.b16 %v639
        %v704 = vunpack.c.l.b16 %v640
        %v705 = vunpack.c.l.b16 %v641
        %v706 = vunpack.c.l.b16 %v642
        %v707 = vunpack.c.l.b16 %v643
        %v708 = vunpack.c.l.b16 %v644
        %v709 = vunpack.c.l.b16 %v645
        %v710 = vunpack.c.l.b16 %v646
        %v711 = vunpack.c.l.b16 %v647
        %v712 = vunpack.c.l.b16 %v648
        %v713 = vunpack.c.l.b16 %v649
        %v714 = vunpack.c.l.b16 %v650
        %v715 = vunpack.c.l.b16 %v651
        %v716 = vunpack.c.l.b16 %v652
        %v717 = vunpack.c.l.b16 %v653
        %v718 = vunpack.c.l.b16 %v654
        %v719 = vunpack.c.l.b16 %v655
        %v720 = vunpack.c.l.b16 %v656
        %v721 = vunpack.c.l.b16 %v657
        %v722 = vunpack.c.l.b16 %v658
        %v723 = vunpack.c.l.b16 %v659
        %v724 = vunpack.c.l.b16 %v660
        %v725 = vpack.c.b16 %v694, %v693
        %v726 = vpack.c.b16 %v696, %v695
        %v727 = vpack.c.b16 %v698, %v697
        %v728 = vpack.c.b16 %v700, %v699
        %v729 = vpack.c.b16 %v702, %v701
        %v730 = vpack.c.b16 %v704, %v703
        %v731 = vpack.c.b16 %v706, %v705
        %v732 = vpack.c.b16 %v708, %v707
        %v733 = vpack.c.b16 %v710, %v709
        %v734 = vpack.c.b16 %v712, %v711
        %v735 = vpack.c.b16 %v714, %v713
        %v736 = vpack.c.b16 %v716, %v715
        %v737 = vpack.c.b16 %v718, %v717
        %v738 = vpack.c.b16 %v720, %v719
        %v739 = vpack.c.b16 %v722, %v721
        %v740 = vpack.c.b16 %v724, %v723
        %vm741 = vcmask 293888
        %v743 = vsel %vm741, %v725, 0
        %v746 = vsel %vm741, %v726, 0
        %v749 = vsel %vm741, %v727, 0
        %v752 = vsel %vm741, %v728, 0
        %v755 = vsel %vm741, %v729, 0
        %v758 = vsel %vm741, %v730, 0
        %v761 = vsel %vm741, %v731, 0
        %v764 = vsel %vm741, %v732, 0
        %v767 = vsel %vm741, %v733, 0
        %v770 = vsel %vm741, %v734, 0
        %v773 = vsel %vm741, %v735, 0
        %v776 = vsel %vm741, %v736, 0
        %v779 = vsel %vm741, %v737, 0
        %v782 = vsel %vm741, %v738, 0
        %v785 = vsel %vm741, %v739, 0
        %v788 = vsel %vm741, %v740, 0
        %vm790 = vcmask 1041408
        %v792 = vsel %vm790, %v628, 0
        %794 = vmatpush.bf16.msra.mxu0 0
        %795 = vmatpush.bf16.msra.mxu0 0
        %796 = vmatpush.bf16.msra.mxu0 0
        %797 = vmatpush.bf16.msra.mxu0 0
        %798 = vmatpush.bf16.msra.mxu0 0
        %799 = vmatpush.bf16.msra.mxu0 %v792
        %800 = vmatpush.bf16.msra.mxu0 %v627
        %801 = vmatpush.bf16.msra.mxu0 %v626
        %802 = vmatmul.bf16.gmra.mxu0 %v743
        %v803 = vpop.f32.mrf.mxu0
        %v804 = vadd.f32 0.0, %v803
        %v805 = vpop.f32.mrf.mxu0
        %v806 = vadd.f32 0.0, %v805
        %807 = vmatmul.bf16.gmra.mxu0 %v746
        %v808 = vpop.f32.mrf.mxu0
        %v809 = vadd.f32 0.0, %v808
        %v810 = vpop.f32.mrf.mxu0
        %v811 = vadd.f32 0.0, %v810
        %812 = vmatmul.bf16.gmra.mxu0 %v749
        %v813 = vpop.f32.mrf.mxu0
        %v814 = vadd.f32 0.0, %v813
        %v815 = vpop.f32.mrf.mxu0
        %v816 = vadd.f32 0.0, %v815
        %817 = vmatmul.bf16.gmra.mxu0 %v752
        %v818 = vpop.f32.mrf.mxu0
        %v819 = vadd.f32 0.0, %v818
        %v820 = vpop.f32.mrf.mxu0
        %v821 = vadd.f32 0.0, %v820
        %822 = vmatmul.bf16.gmra.mxu0 %v755
        %v823 = vpop.f32.mrf.mxu0
        %v824 = vadd.f32 0.0, %v823
        %v825 = vpop.f32.mrf.mxu0
        %v826 = vadd.f32 0.0, %v825
        %827 = vmatmul.bf16.gmra.mxu0 %v758
        %v828 = vpop.f32.mrf.mxu0
        %v829 = vadd.f32 0.0, %v828
        %v830 = vpop.f32.mrf.mxu0
        %v831 = vadd.f32 0.0, %v830
        %832 = vmatmul.bf16.gmra.mxu0 %v761
        %v833 = vpop.f32.mrf.mxu0
        %v834 = vadd.f32 0.0, %v833
        %v835 = vpop.f32.mrf.mxu0
        %v836 = vadd.f32 0.0, %v835
        %837 = vmatmul.bf16.gmra.mxu0 %v764
        %v838 = vpop.f32.mrf.mxu0
        %v839 = vadd.f32 0.0, %v838
        %v840 = vpop.f32.mrf.mxu0
        %v841 = vadd.f32 0.0, %v840
        %842 = vmatmul.bf16.gmra.mxu0 %v767
        %v843 = vpop.f32.mrf.mxu0
        %v844 = vadd.f32 0.0, %v843
        %v845 = vpop.f32.mrf.mxu0
        %v846 = vadd.f32 0.0, %v845
        %847 = vmatmul.bf16.gmra.mxu0 %v770
        %v848 = vpop.f32.mrf.mxu0
        %v849 = vadd.f32 0.0, %v848
        %v850 = vpop.f32.mrf.mxu0
        %v851 = vadd.f32 0.0, %v850
        %852 = vmatmul.bf16.gmra.mxu0 %v773
        %v853 = vpop.f32.mrf.mxu0
        %v854 = vadd.f32 0.0, %v853
        %v855 = vpop.f32.mrf.mxu0
        %v856 = vadd.f32 0.0, %v855
        %857 = vmatmul.bf16.gmra.mxu0 %v776
        %v858 = vpop.f32.mrf.mxu0
        %v859 = vadd.f32 0.0, %v858
        %v860 = vpop.f32.mrf.mxu0
        %v861 = vadd.f32 0.0, %v860
        %862 = vmatmul.bf16.gmra.mxu0 %v779
        %v863 = vpop.f32.mrf.mxu0
        %v864 = vadd.f32 0.0, %v863
        %v865 = vpop.f32.mrf.mxu0
        %v866 = vadd.f32 0.0, %v865
        %867 = vmatmul.bf16.gmra.mxu0 %v782
        %v868 = vpop.f32.mrf.mxu0
        %v869 = vadd.f32 0.0, %v868
        %v870 = vpop.f32.mrf.mxu0
        %v871 = vadd.f32 0.0, %v870
        %872 = vmatmul.bf16.gmra.mxu0 %v785
        %v873 = vpop.f32.mrf.mxu0
        %v874 = vadd.f32 0.0, %v873
        %v875 = vpop.f32.mrf.mxu0
        %v876 = vadd.f32 0.0, %v875
        %877 = vmatmul.bf16.gmra.mxu0 %v788
        %v878 = vpop.f32.mrf.mxu0
        %v879 = vadd.f32 0.0, %v878
        %v880 = vpop.f32.mrf.mxu0
        %v881 = vadd.f32 0.0, %v880
        %882 = vdwg.mxu0
        %v883 = vpack.c.bf16 %v804, %v804
        %v884 = vpack.c.bf16 %v806, %v806
        %v885 = vpack.c.bf16 %v809, %v809
        %v886 = vpack.c.bf16 %v811, %v811
        %v887 = vpack.c.bf16 %v814, %v814
        %v888 = vpack.c.bf16 %v816, %v816
        %v889 = vpack.c.bf16 %v819, %v819
        %v890 = vpack.c.bf16 %v821, %v821
        %v891 = vpack.c.bf16 %v824, %v824
        %v892 = vpack.c.bf16 %v826, %v826
        %v893 = vpack.c.bf16 %v829, %v829
        %v894 = vpack.c.bf16 %v831, %v831
        %v895 = vpack.c.bf16 %v834, %v834
        %v896 = vpack.c.bf16 %v836, %v836
        %v897 = vpack.c.bf16 %v839, %v839
        %v898 = vpack.c.bf16 %v841, %v841
        %v899 = vpack.c.bf16 %v844, %v844
        %v900 = vpack.c.bf16 %v846, %v846
        %v901 = vpack.c.bf16 %v849, %v849
        %v902 = vpack.c.bf16 %v851, %v851
        %v903 = vpack.c.bf16 %v854, %v854
        %v904 = vpack.c.bf16 %v856, %v856
        %v905 = vpack.c.bf16 %v859, %v859
        %v906 = vpack.c.bf16 %v861, %v861
        %v907 = vpack.c.bf16 %v864, %v864
        %v908 = vpack.c.bf16 %v866, %v866
        %v909 = vpack.c.bf16 %v869, %v869
        %v910 = vpack.c.bf16 %v871, %v871
        %v911 = vpack.c.bf16 %v874, %v874
        %v912 = vpack.c.bf16 %v876, %v876
        %v913 = vpack.c.bf16 %v879, %v879
        %v914 = vpack.c.bf16 %v881, %v881
        %vm915 = vsmask.f32 256
        %vm916 = vsmask.f32 4368
        %vm917 = vmor %vm915, %vm916
        %v919 = vshrl.u32 %v883, 16
        %v921 = vrot.slane %v919, 7
        %v922 = vshll.u32 %v883, 16
        %v924 = vor.u32 %v921, %v922
        %v925 = vrot.slane %v921, 4
        %v927 = vshrl.u32 %v884, 16
        %v929 = vrot.slane %v927, 7
        %v930 = vshll.u32 %v884, 16
        %v932 = vor.u32 %v929, %v930
        %v933 = vsel %vm917, %v925, %v932
        %v934 = vrot.slane %v929, 4
        %v936 = vshrl.u32 %v885, 16
        %v938 = vrot.slane %v936, 7
        %v939 = vshll.u32 %v885, 16
        %v941 = vor.u32 %v938, %v939
        %v942 = vrot.slane %v938, 4
        %v944 = vshrl.u32 %v886, 16
        %v946 = vrot.slane %v944, 7
        %v947 = vshll.u32 %v886, 16
        %v949 = vor.u32 %v946, %v947
        %v950 = vsel %vm917, %v942, %v949
        %v951 = vrot.slane %v946, 4
        %v953 = vshrl.u32 %v887, 16
        %v955 = vrot.slane %v953, 7
        %v956 = vshll.u32 %v887, 16
        %v958 = vor.u32 %v955, %v956
        %v959 = vrot.slane %v955, 4
        %v961 = vshrl.u32 %v888, 16
        %v963 = vrot.slane %v961, 7
        %v964 = vshll.u32 %v888, 16
        %v966 = vor.u32 %v963, %v964
        %v967 = vsel %vm917, %v959, %v966
        %v968 = vrot.slane %v963, 4
        %v970 = vshrl.u32 %v889, 16
        %v972 = vrot.slane %v970, 7
        %v973 = vshll.u32 %v889, 16
        %v975 = vor.u32 %v972, %v973
        %v976 = vrot.slane %v972, 4
        %v978 = vshrl.u32 %v890, 16
        %v980 = vrot.slane %v978, 7
        %v981 = vshll.u32 %v890, 16
        %v983 = vor.u32 %v980, %v981
        %v984 = vsel %vm917, %v976, %v983
        %v985 = vrot.slane %v980, 4
        %v987 = vshrl.u32 %v891, 16
        %v989 = vrot.slane %v987, 7
        %v990 = vshll.u32 %v891, 16
        %v992 = vor.u32 %v989, %v990
        %v993 = vrot.slane %v989, 4
        %v995 = vshrl.u32 %v892, 16
        %v997 = vrot.slane %v995, 7
        %v998 = vshll.u32 %v892, 16
        %v1000 = vor.u32 %v997, %v998
        %v1001 = vsel %vm917, %v993, %v1000
        %v1002 = vrot.slane %v997, 4
        %v1004 = vshrl.u32 %v893, 16
        %v1006 = vrot.slane %v1004, 7
        %v1007 = vshll.u32 %v893, 16
        %v1009 = vor.u32 %v1006, %v1007
        %v1010 = vrot.slane %v1006, 4
        %v1012 = vshrl.u32 %v894, 16
        %v1014 = vrot.slane %v1012, 7
        %v1015 = vshll.u32 %v894, 16
        %v1017 = vor.u32 %v1014, %v1015
        %v1018 = vsel %vm917, %v1010, %v1017
        %v1019 = vrot.slane %v1014, 4
        %v1021 = vshrl.u32 %v895, 16
        %v1023 = vrot.slane %v1021, 7
        %v1024 = vshll.u32 %v895, 16
        %v1026 = vor.u32 %v1023, %v1024
        %v1027 = vrot.slane %v1023, 4
        %v1029 = vshrl.u32 %v896, 16
        %v1031 = vrot.slane %v1029, 7
        %v1032 = vshll.u32 %v896, 16
        %v1034 = vor.u32 %v1031, %v1032
        %v1035 = vsel %vm917, %v1027, %v1034
        %v1036 = vrot.slane %v1031, 4
        %v1038 = vshrl.u32 %v897, 16
        %v1040 = vrot.slane %v1038, 7
        %v1041 = vshll.u32 %v897, 16
        %v1043 = vor.u32 %v1040, %v1041
        %v1044 = vrot.slane %v1040, 4
        %v1046 = vshrl.u32 %v898, 16
        %v1048 = vrot.slane %v1046, 7
        %v1049 = vshll.u32 %v898, 16
        %v1051 = vor.u32 %v1048, %v1049
        %v1052 = vsel %vm917, %v1044, %v1051
        %v1053 = vrot.slane %v1048, 4
        %v1055 = vshrl.u32 %v899, 16
        %v1057 = vrot.slane %v1055, 7
        %v1058 = vshll.u32 %v899, 16
        %v1060 = vor.u32 %v1057, %v1058
        %v1061 = vrot.slane %v1057, 4
        %v1063 = vshrl.u32 %v900, 16
        %v1065 = vrot.slane %v1063, 7
        %v1066 = vshll.u32 %v900, 16
        %v1068 = vor.u32 %v1065, %v1066
        %v1069 = vsel %vm917, %v1061, %v1068
        %v1070 = vrot.slane %v1065, 4
        %v1072 = vshrl.u32 %v901, 16
        %v1074 = vrot.slane %v1072, 7
        %v1075 = vshll.u32 %v901, 16
        %v1077 = vor.u32 %v1074, %v1075
        %v1078 = vrot.slane %v1074, 4
        %v1080 = vshrl.u32 %v902, 16
        %v1082 = vrot.slane %v1080, 7
        %v1083 = vshll.u32 %v902, 16
        %v1085 = vor.u32 %v1082, %v1083
        %v1086 = vsel %vm917, %v1078, %v1085
        %v1087 = vrot.slane %v1082, 4
        %v1089 = vshrl.u32 %v903, 16
        %v1091 = vrot.slane %v1089, 7
        %v1092 = vshll.u32 %v903, 16
        %v1094 = vor.u32 %v1091, %v1092
        %v1095 = vrot.slane %v1091, 4
        %v1097 = vshrl.u32 %v904, 16
        %v1099 = vrot.slane %v1097, 7
        %v1100 = vshll.u32 %v904, 16
        %v1102 = vor.u32 %v1099, %v1100
        %v1103 = vsel %vm917, %v1095, %v1102
        %v1104 = vrot.slane %v1099, 4
        %v1106 = vshrl.u32 %v905, 16
        %v1108 = vrot.slane %v1106, 7
        %v1109 = vshll.u32 %v905, 16
        %v1111 = vor.u32 %v1108, %v1109
        %v1112 = vrot.slane %v1108, 4
        %v1114 = vshrl.u32 %v906, 16
        %v1116 = vrot.slane %v1114, 7
        %v1117 = vshll.u32 %v906, 16
        %v1119 = vor.u32 %v1116, %v1117
        %v1120 = vsel %vm917, %v1112, %v1119
        %v1121 = vrot.slane %v1116, 4
        %v1123 = vshrl.u32 %v907, 16
        %v1125 = vrot.slane %v1123, 7
        %v1126 = vshll.u32 %v907, 16
        %v1128 = vor.u32 %v1125, %v1126
        %v1129 = vrot.slane %v1125, 4
        %v1131 = vshrl.u32 %v908, 16
        %v1133 = vrot.slane %v1131, 7
        %v1134 = vshll.u32 %v908, 16
        %v1136 = vor.u32 %v1133, %v1134
        %v1137 = vsel %vm917, %v1129, %v1136
        %v1138 = vrot.slane %v1133, 4
        %v1140 = vshrl.u32 %v909, 16
        %v1142 = vrot.slane %v1140, 7
        %v1143 = vshll.u32 %v909, 16
        %v1145 = vor.u32 %v1142, %v1143
        %v1146 = vrot.slane %v1142, 4
        %v1148 = vshrl.u32 %v910, 16
        %v1150 = vrot.slane %v1148, 7
        %v1151 = vshll.u32 %v910, 16
        %v1153 = vor.u32 %v1150, %v1151
        %v1154 = vsel %vm917, %v1146, %v1153
        %v1155 = vrot.slane %v1150, 4
        %v1157 = vshrl.u32 %v911, 16
        %v1159 = vrot.slane %v1157, 7
        %v1160 = vshll.u32 %v911, 16
        %v1162 = vor.u32 %v1159, %v1160
        %v1163 = vrot.slane %v1159, 4
        %v1165 = vshrl.u32 %v912, 16
        %v1167 = vrot.slane %v1165, 7
        %v1168 = vshll.u32 %v912, 16
        %v1170 = vor.u32 %v1167, %v1168
        %v1171 = vsel %vm917, %v1163, %v1170
        %v1172 = vrot.slane %v1167, 4
        %v1174 = vshrl.u32 %v913, 16
        %v1176 = vrot.slane %v1174, 7
        %v1177 = vshll.u32 %v913, 16
        %v1179 = vor.u32 %v1176, %v1177
        %v1180 = vrot.slane %v1176, 4
        %v1182 = vshrl.u32 %v914, 16
        %v1184 = vrot.slane %v1182, 7
        %v1185 = vshll.u32 %v914, 16
        %v1187 = vor.u32 %v1184, %v1185
        %v1188 = vsel %vm917, %v1180, %v1187
        %v1189 = vrot.slane %v1184, 4
        %s1238 = scalar_lea.vmem %s244, 12 [#allocation2]
        %vm1239 = vcmask 60416
        %vm1240 = vsmask.f32 7938
        %vm1241 = vmand %vm1239, %vm1240
        %v1242 = vld [vmem:[%s1238] sm:$0xf]
        %v1243 = vsel %vm1241, %v924, %v1242
        %1244 = vst [vmem:[%s1238] sm:$0xf] %v1243
        %vm1245 = vcmask 60416
        %1246 = vst.msk [vmem:[%s1238 + $0x4] sm:$0xf] %vm1245, %v933
        %vm1247 = vcmask 57344
        %vm1248 = vmand %vm1247, %vm915
        %v1249 = vld [vmem:[%s1238 + $0x8] sm:$0x1]
        %v1250 = vsel %vm1248, %v934, %v1249
        %1251 = vst [vmem:[%s1238 + $0x8] sm:$0x1] %v1250
        %v1252 = vld [vmem:[%s1238 + $0xc] sm:$0xf]
        %v1253 = vsel %vm1241, %v941, %v1252
        %1254 = vst [vmem:[%s1238 + $0xc] sm:$0xf] %v1253
        %1255 = vst.msk [vmem:[%s1238 + $0x10] sm:$0xf] %vm1245, %v950
        %v1256 = vld [vmem:[%s1238 + $0x14] sm:$0x1]
        %v1257 = vsel %vm1248, %v951, %v1256
        %1258 = vst [vmem:[%s1238 + $0x14] sm:$0x1] %v1257
        %v1259 = vld [vmem:[%s1238 + $0x18] sm:$0xf]
        %v1260 = vsel %vm1241, %v958, %v1259
        %1261 = vst [vmem:[%s1238 + $0x18] sm:$0xf] %v1260
        %1262 = vst.msk [vmem:[%s1238 + $0x1c] sm:$0xf] %vm1245, %v967
        %v1263 = vld [vmem:[%s1238 + $0x20] sm:$0x1]
        %v1264 = vsel %vm1248, %v968, %v1263
        %1265 = vst [vmem:[%s1238 + $0x20] sm:$0x1] %v1264
        %v1266 = vld [vmem:[%s1238 + $0x24] sm:$0xf]
        %v1267 = vsel %vm1241, %v975, %v1266
        %1268 = vst [vmem:[%s1238 + $0x24] sm:$0xf] %v1267
        %1269 = vst.msk [vmem:[%s1238 + $0x28] sm:$0xf] %vm1245, %v984
        %v1270 = vld [vmem:[%s1238 + $0x2c] sm:$0x1]
        %v1271 = vsel %vm1248, %v985, %v1270
        %1272 = vst [vmem:[%s1238 + $0x2c] sm:$0x1] %v1271
        %v1273 = vld [vmem:[%s1238 + $0x30] sm:$0xf]
        %v1274 = vsel %vm1241, %v992, %v1273
        %1275 = vst [vmem:[%s1238 + $0x30] sm:$0xf] %v1274
        %1276 = vst.msk [vmem:[%s1238 + $0x34] sm:$0xf] %vm1245, %v1001
        %v1277 = vld [vmem:[%s1238 + $0x38] sm:$0x1]
        %v1278 = vsel %vm1248, %v1002, %v1277
        %1279 = vst [vmem:[%s1238 + $0x38] sm:$0x1] %v1278
        %v1280 = vld [vmem:[%s1238 + $0x3c] sm:$0xf]
        %v1281 = vsel %vm1241, %v1009, %v1280
        %1282 = vst [vmem:[%s1238 + $0x3c] sm:$0xf] %v1281
        %1283 = vst.msk [vmem:[%s1238 + $0x40] sm:$0xf] %vm1245, %v1018
        %v1284 = vld [vmem:[%s1238 + $0x44] sm:$0x1]
        %v1285 = vsel %vm1248, %v1019, %v1284
        %1286 = vst [vmem:[%s1238 + $0x44] sm:$0x1] %v1285
        %v1287 = vld [vmem:[%s1238 + $0x48] sm:$0xf]
        %v1288 = vsel %vm1241, %v1026, %v1287
        %1289 = vst [vmem:[%s1238 + $0x48] sm:$0xf] %v1288
        %1290 = vst.msk [vmem:[%s1238 + $0x4c] sm:$0xf] %vm1245, %v1035
        %v1291 = vld [vmem:[%s1238 + $0x50] sm:$0x1]
        %v1292 = vsel %vm1248, %v1036, %v1291
        %1293 = vst [vmem:[%s1238 + $0x50] sm:$0x1] %v1292
        %v1294 = vld [vmem:[%s1238 + $0x54] sm:$0xf]
        %v1295 = vsel %vm1241, %v1043, %v1294
        %1296 = vst [vmem:[%s1238 + $0x54] sm:$0xf] %v1295
        %1297 = vst.msk [vmem:[%s1238 + $0x58] sm:$0xf] %vm1245, %v1052
        %v1298 = vld [vmem:[%s1238 + $0x5c] sm:$0x1]
        %v1299 = vsel %vm1248, %v1053, %v1298
        %1300 = vst [vmem:[%s1238 + $0x5c] sm:$0x1] %v1299
        %v1301 = vld [vmem:[%s1238 + $0x60] sm:$0xf]
        %v1302 = vsel %vm1241, %v1060, %v1301
        %1303 = vst [vmem:[%s1238 + $0x60] sm:$0xf] %v1302
        %1304 = vst.msk [vmem:[%s1238 + $0x64] sm:$0xf] %vm1245, %v1069
        %v1305 = vld [vmem:[%s1238 + $0x68] sm:$0x1]
        %v1306 = vsel %vm1248, %v1070, %v1305
        %1307 = vst [vmem:[%s1238 + $0x68] sm:$0x1] %v1306
        %v1308 = vld [vmem:[%s1238 + $0x6c] sm:$0xf]
        %v1309 = vsel %vm1241, %v1077, %v1308
        %1310 = vst [vmem:[%s1238 + $0x6c] sm:$0xf] %v1309
        %1311 = vst.msk [vmem:[%s1238 + $0x70] sm:$0xf] %vm1245, %v1086
        %v1312 = vld [vmem:[%s1238 + $0x74] sm:$0x1]
        %v1313 = vsel %vm1248, %v1087, %v1312
        %1314 = vst [vmem:[%s1238 + $0x74] sm:$0x1] %v1313
        %v1315 = vld [vmem:[%s1238 + $0x78] sm:$0xf]
        %v1316 = vsel %vm1241, %v1094, %v1315
        %1317 = vst [vmem:[%s1238 + $0x78] sm:$0xf] %v1316
        %1318 = vst.msk [vmem:[%s1238 + $0x7c] sm:$0xf] %vm1245, %v1103
        %v1319 = vld [vmem:[%s1238 + $0x80] sm:$0x1]
        %v1320 = vsel %vm1248, %v1104, %v1319
        %1321 = vst [vmem:[%s1238 + $0x80] sm:$0x1] %v1320
        %v1322 = vld [vmem:[%s1238 + $0x84] sm:$0xf]
        %v1323 = vsel %vm1241, %v1111, %v1322
        %1324 = vst [vmem:[%s1238 + $0x84] sm:$0xf] %v1323
        %1325 = vst.msk [vmem:[%s1238 + $0x88] sm:$0xf] %vm1245, %v1120
        %v1326 = vld [vmem:[%s1238 + $0x8c] sm:$0x1]
        %v1327 = vsel %vm1248, %v1121, %v1326
        %1328 = vst [vmem:[%s1238 + $0x8c] sm:$0x1] %v1327
        %v1329 = vld [vmem:[%s1238 + $0x90] sm:$0xf]
        %v1330 = vsel %vm1241, %v1128, %v1329
        %1331 = vst [vmem:[%s1238 + $0x90] sm:$0xf] %v1330
        %1332 = vst.msk [vmem:[%s1238 + $0x94] sm:$0xf] %vm1245, %v1137
        %v1333 = vld [vmem:[%s1238 + $0x98] sm:$0x1]
        %v1334 = vsel %vm1248, %v1138, %v1333
        %1335 = vst [vmem:[%s1238 + $0x98] sm:$0x1] %v1334
        %v1336 = vld [vmem:[%s1238 + $0x9c] sm:$0xf]
        %v1337 = vsel %vm1241, %v1145, %v1336
        %1338 = vst [vmem:[%s1238 + $0x9c] sm:$0xf] %v1337
        %1339 = vst.msk [vmem:[%s1238 + $0xa0] sm:$0xf] %vm1245, %v1154
        %v1340 = vld [vmem:[%s1238 + $0xa4] sm:$0x1]
        %v1341 = vsel %vm1248, %v1155, %v1340
        %1342 = vst [vmem:[%s1238 + $0xa4] sm:$0x1] %v1341
        %v1343 = vld [vmem:[%s1238 + $0xa8] sm:$0xf]
        %v1344 = vsel %vm1241, %v1162, %v1343
        %1345 = vst [vmem:[%s1238 + $0xa8] sm:$0xf] %v1344
        %1346 = vst.msk [vmem:[%s1238 + $0xac] sm:$0xf] %vm1245, %v1171
        %v1347 = vld [vmem:[%s1238 + $0xb0] sm:$0x1]
        %v1348 = vsel %vm1248, %v1172, %v1347
        %1349 = vst [vmem:[%s1238 + $0xb0] sm:$0x1] %v1348
        %v1350 = vld [vmem:[%s1238 + $0xb4] sm:$0xf]
        %v1351 = vsel %vm1241, %v1179, %v1350
        %1352 = vst [vmem:[%s1238 + $0xb4] sm:$0xf] %v1351
        %1353 = vst.msk [vmem:[%s1238 + $0xb8] sm:$0xf] %vm1245, %v1188
        %v1354 = vld [vmem:[%s1238 + $0xbc] sm:$0x1]
        %v1355 = vsel %vm1248, %v1189, %v1354
        %1356 = vst [vmem:[%s1238 + $0xbc] sm:$0x1] %v1355
        %s1357 = scalar_lea.vmem %s3, 64
        %v1358 = vld [vmem:[%s1357] sm:$0xf]
        %v1359 = vld [vmem:[%s1357 + $0x4] sm:$0xf]
        %v1360 = vld [vmem:[%s1357 + $0x8] sm:$0xf]
        %v1361 = vld [vmem:[%s1357 + $0xc] sm:$0xf]
        %v1362 = vld [vmem:[%s1357 + $0x10] sm:$0xf]
        %v1363 = vld [vmem:[%s1357 + $0x14] sm:$0xf]
        %v1364 = vld [vmem:[%s1357 + $0x18] sm:$0xf]
        %v1365 = vld [vmem:[%s1357 + $0x1c] sm:$0xf]
        %v1366 = vld [vmem:[%s1357 + $0x20] sm:$0xf]
        %v1367 = vld [vmem:[%s1357 + $0x24] sm:$0xf]
        %v1368 = vld [vmem:[%s1357 + $0x28] sm:$0xf]
        %v1369 = vld [vmem:[%s1357 + $0x2c] sm:$0xf]
        %v1370 = vld [vmem:[%s1357 + $0x30] sm:$0xf]
        %v1371 = vld [vmem:[%s1357 + $0x34] sm:$0xf]
        %v1372 = vld [vmem:[%s1357 + $0x38] sm:$0xf]
        %v1373 = vld [vmem:[%s1357 + $0x3c] sm:$0xf]
        %vm1374 = vsmask.f32 7424
        %v1376 = vshrl.u32 %v516, 16
        %v1378 = vshll.u32 %v516, 16
        %v1380 = vrot.slane %v1378, 1
        %v1381 = vor.u32 %v1376, %v1380
        %v1383 = vshll.u32 %v517, 16
        %v1385 = vrot.slane %v1383, 1
        %v1386 = vsel %vm1374, %v1381, %v1385
        %v1387 = vshrl.u32 %v517, 16
        %v1389 = vor.u32 %v1387, %v1385
        %v1391 = vshll.u32 %v518, 16
        %v1393 = vrot.slane %v1391, 1
        %v1394 = vsel %vm1374, %v1389, %v1393
        %v1395 = vshrl.u32 %v518, 16
        %v1397 = vor.u32 %v1395, %v1393
        %v1417 = vunpack.c.l.b16 %v1358
        %v1418 = vunpack.c.l.b16 %v1359
        %v1419 = vunpack.c.l.b16 %v1360
        %v1420 = vunpack.c.l.b16 %v1361
        %v1421 = vunpack.c.l.b16 %v1362
        %v1422 = vunpack.c.l.b16 %v1363
        %v1423 = vunpack.c.l.b16 %v1364
        %v1424 = vunpack.c.l.b16 %v1365
        %v1425 = vunpack.c.l.b16 %v1366
        %v1426 = vunpack.c.l.b16 %v1367
        %v1427 = vunpack.c.l.b16 %v1368
        %v1428 = vunpack.c.l.b16 %v1369
        %v1429 = vunpack.c.l.b16 %v1370
        %v1430 = vunpack.c.l.b16 %v1371
        %v1431 = vunpack.c.l.b16 %v1372
        %v1432 = vunpack.c.l.b16 %v1373
        %v1433 = vpack.c.b16 %v1418, %v1417
        %v1434 = vpack.c.b16 %v1420, %v1419
        %v1435 = vpack.c.b16 %v1422, %v1421
        %v1436 = vpack.c.b16 %v1424, %v1423
        %v1437 = vpack.c.b16 %v1426, %v1425
        %v1438 = vpack.c.b16 %v1428, %v1427
        %v1439 = vpack.c.b16 %v1430, %v1429
        %v1440 = vpack.c.b16 %v1432, %v1431
        %1449 = vmatpush.bf16.msra.mxu0 %v1440
        %1450 = vmatpush.bf16.msra.mxu0 %v1439
        %1451 = vmatpush.bf16.msra.mxu0 %v1438
        %1452 = vmatpush.bf16.msra.mxu0 %v1437
        %1453 = vmatpush.bf16.msra.mxu0 %v1436
        %1454 = vmatpush.bf16.msra.mxu0 %v1435
        %1455 = vmatpush.bf16.msra.mxu0 %v1434
        %1456 = vmatpush.bf16.msra.mxu0 %v1433
        %1457 = vmatmul.bf16.gmra.mxu0 %v1386
        %v1458 = vpop.f32.mrf.mxu0
        %v1459 = vadd.f32 0.0, %v1458
        %v1460 = vpop.f32.mrf.mxu0
        %v1461 = vadd.f32 0.0, %v1460
        %1462 = vmatmul.bf16.gmra.mxu0 %v1394
        %v1463 = vpop.f32.mrf.mxu0
        %v1464 = vadd.f32 0.0, %v1463
        %v1465 = vpop.f32.mrf.mxu0
        %v1466 = vadd.f32 0.0, %v1465
        %1467 = vmatmul.bf16.gmra.mxu0 %v1397
        %v1468 = vpop.f32.mrf.mxu0
        %v1469 = vadd.f32 0.0, %v1468
        %v1470 = vpop.f32.mrf.mxu0
        %1471 = vdwg.mxu0
        %s1472 = scalar_lea.vmem %s4, 1
        %v1473 = vld [vmem:[%s1472] sm:$0x1]
        %v1475 = vperm.slane %v1473, 0
        %v1477 = vmul.f32 %v1459, %v1475
        %v1478 = vmul.f32 %v1461, %v1475
        %v1479 = vmul.f32 %v1464, %v1475
        %v1480 = vmul.f32 %v1466, %v1475
        %v1481 = vmul.f32 %v1469, %v1475
        %s1482 = scalar_lea.vmem %s5, 1
        %v1483 = vld [vmem:[%s1482] sm:$0x1]
        %v1485 = vperm.slane %v1483, 0
        %v1487 = vadd.f32 %v1477, %v1485
        %v1488 = vadd.f32 %v1478, %v1485
        %v1489 = vadd.f32 %v1479, %v1485
        %v1490 = vadd.f32 %v1480, %v1485
        %v1491 = vadd.f32 %v1481, %v1485
        %vm1492 = vcmp.gt.f32.partialorder %v1487, 0.0
        %vm1493 = vcmp.gt.f32.partialorder %v1488, 0.0
        %vm1494 = vcmp.gt.f32.partialorder %v1489, 0.0
        %vm1495 = vcmp.gt.f32.partialorder %v1490, 0.0
        %vm1496 = vcmp.gt.f32.partialorder %v1491, 0.0
        %v1497 = vmul.f32 %v1487, 0.01
        %v1498 = vmul.f32 %v1488, 0.01
        %v1499 = vmul.f32 %v1489, 0.01
        %v1500 = vmul.f32 %v1490, 0.01
        %v1501 = vmul.f32 %v1491, 0.01
        %v1502 = vsel %vm1492, %v1487, %v1497
        %v1503 = vsel %vm1493, %v1488, %v1498
        %v1504 = vsel %vm1494, %v1489, %v1499
        %v1505 = vsel %vm1495, %v1490, %v1500
        %v1506 = vsel %vm1496, %v1491, %v1501
        %v1507 = vpack.c.bf16 %v1503, %v1502
        %v1508 = vpack.c.bf16 %v1505, %v1504
        %v1509 = vpack.c.bf16 %v1506, %v1506
        %s1510 = scalar_lea.vmem %s2, 128
        %v1511 = vld [vmem:[%s1510] sm:$0xf]
        %v1512 = vld [vmem:[%s1510 + $0x4] sm:$0xf]
        %v1513 = vld [vmem:[%s1510 + $0x8] sm:$0xf]
        %v1514 = vld [vmem:[%s1510 + $0xc] sm:$0xf]
        %v1515 = vld [vmem:[%s1510 + $0x10] sm:$0xf]
        %v1516 = vld [vmem:[%s1510 + $0x14] sm:$0xf]
        %v1517 = vld [vmem:[%s1510 + $0x18] sm:$0xf]
        %v1518 = vld [vmem:[%s1510 + $0x1c] sm:$0xf]
        %v1519 = vld [vmem:[%s1510 + $0x20] sm:$0xf]
        %v1520 = vld [vmem:[%s1510 + $0x24] sm:$0xf]
        %v1521 = vld [vmem:[%s1510 + $0x28] sm:$0xf]
        %v1522 = vld [vmem:[%s1510 + $0x2c] sm:$0xf]
        %v1523 = vld [vmem:[%s1510 + $0x30] sm:$0xf]
        %v1524 = vld [vmem:[%s1510 + $0x34] sm:$0xf]
        %v1525 = vld [vmem:[%s1510 + $0x38] sm:$0xf]
        %v1526 = vld [vmem:[%s1510 + $0x3c] sm:$0xf]
        %v1527 = vld [vmem:[%s1510 + $0x40] sm:$0xf]
        %v1528 = vld [vmem:[%s1510 + $0x44] sm:$0xf]
        %v1529 = vld [vmem:[%s1510 + $0x48] sm:$0xf]
        %v1530 = vld [vmem:[%s1510 + $0x4c] sm:$0xf]
        %v1531 = vld [vmem:[%s1510 + $0x50] sm:$0xf]
        %v1532 = vld [vmem:[%s1510 + $0x54] sm:$0xf]
        %v1533 = vld [vmem:[%s1510 + $0x58] sm:$0xf]
        %v1534 = vld [vmem:[%s1510 + $0x5c] sm:$0xf]
        %v1535 = vld [vmem:[%s1510 + $0x60] sm:$0xf]
        %v1536 = vld [vmem:[%s1510 + $0x64] sm:$0xf]
        %v1537 = vld [vmem:[%s1510 + $0x68] sm:$0xf]
        %v1538 = vld [vmem:[%s1510 + $0x6c] sm:$0xf]
        %v1539 = vld [vmem:[%s1510 + $0x70] sm:$0xf]
        %v1540 = vld [vmem:[%s1510 + $0x74] sm:$0xf]
        %v1541 = vld [vmem:[%s1510 + $0x78] sm:$0xf]
        %v1542 = vld [vmem:[%s1510 + $0x7c] sm:$0xf]
        %v1575 = vunpack.c.l.b16 %v1511
        %v1576 = vunpack.c.l.b16 %v1512
        %v1577 = vunpack.c.l.b16 %v1513
        %v1578 = vunpack.c.l.b16 %v1514
        %v1579 = vunpack.c.l.b16 %v1515
        %v1580 = vunpack.c.l.b16 %v1516
        %v1581 = vunpack.c.l.b16 %v1517
        %v1582 = vunpack.c.l.b16 %v1518
        %v1583 = vunpack.c.l.b16 %v1519
        %v1584 = vunpack.c.l.b16 %v1520
        %v1585 = vunpack.c.l.b16 %v1521
        %v1586 = vunpack.c.l.b16 %v1522
        %v1587 = vunpack.c.l.b16 %v1523
        %v1588 = vunpack.c.l.b16 %v1524
        %v1589 = vunpack.c.l.b16 %v1525
        %v1590 = vunpack.c.l.b16 %v1526
        %v1591 = vunpack.c.l.b16 %v1527
        %v1592 = vunpack.c.l.b16 %v1528
        %v1593 = vunpack.c.l.b16 %v1529
        %v1594 = vunpack.c.l.b16 %v1530
        %v1595 = vunpack.c.l.b16 %v1531
        %v1596 = vunpack.c.l.b16 %v1532
        %v1597 = vunpack.c.l.b16 %v1533
        %v1598 = vunpack.c.l.b16 %v1534
        %v1599 = vunpack.c.l.b16 %v1535
        %v1600 = vunpack.c.l.b16 %v1536
        %v1601 = vunpack.c.l.b16 %v1537
        %v1602 = vunpack.c.l.b16 %v1538
        %v1603 = vunpack.c.l.b16 %v1539
        %v1604 = vunpack.c.l.b16 %v1540
        %v1605 = vunpack.c.l.b16 %v1541
        %v1606 = vunpack.c.l.b16 %v1542
        %v1607 = vpack.c.b16 %v1576, %v1575
        %v1608 = vpack.c.b16 %v1578, %v1577
        %v1609 = vpack.c.b16 %v1580, %v1579
        %v1610 = vpack.c.b16 %v1582, %v1581
        %v1611 = vpack.c.b16 %v1584, %v1583
        %v1612 = vpack.c.b16 %v1586, %v1585
        %v1613 = vpack.c.b16 %v1588, %v1587
        %v1614 = vpack.c.b16 %v1590, %v1589
        %v1615 = vpack.c.b16 %v1592, %v1591
        %v1616 = vpack.c.b16 %v1594, %v1593
        %v1617 = vpack.c.b16 %v1596, %v1595
        %v1618 = vpack.c.b16 %v1598, %v1597
        %v1619 = vpack.c.b16 %v1600, %v1599
        %v1620 = vpack.c.b16 %v1602, %v1601
        %v1621 = vpack.c.b16 %v1604, %v1603
        %v1622 = vpack.c.b16 %v1606, %v1605
        %v1624 = vsel %vm741, %v1607, 0
        %v1627 = vsel %vm741, %v1608, 0
        %v1630 = vsel %vm741, %v1609, 0
        %v1633 = vsel %vm741, %v1610, 0
        %v1636 = vsel %vm741, %v1611, 0
        %v1639 = vsel %vm741, %v1612, 0
        %v1642 = vsel %vm741, %v1613, 0
        %v1645 = vsel %vm741, %v1614, 0
        %v1648 = vsel %vm741, %v1615, 0
        %v1651 = vsel %vm741, %v1616, 0
        %v1654 = vsel %vm741, %v1617, 0
        %v1657 = vsel %vm741, %v1618, 0
        %v1660 = vsel %vm741, %v1619, 0
        %v1663 = vsel %vm741, %v1620, 0
        %v1666 = vsel %vm741, %v1621, 0
        %v1669 = vsel %vm741, %v1622, 0
        %v1672 = vsel %vm790, %v1509, 0
        %1674 = vmatpush.bf16.msra.mxu0 0
        %1675 = vmatpush.bf16.msra.mxu0 0
        %1676 = vmatpush.bf16.msra.mxu0 0
        %1677 = vmatpush.bf16.msra.mxu0 0
        %1678 = vmatpush.bf16.msra.mxu0 0
        %1679 = vmatpush.bf16.msra.mxu0 %v1672
        %1680 = vmatpush.bf16.msra.mxu0 %v1508
        %1681 = vmatpush.bf16.msra.mxu0 %v1507
        %1682 = vmatmul.bf16.gmra.mxu0 %v1624
        %v1683 = vpop.f32.mrf.mxu0
        %v1684 = vadd.f32 0.0, %v1683
        %v1685 = vpop.f32.mrf.mxu0
        %v1686 = vadd.f32 0.0, %v1685
        %1687 = vmatmul.bf16.gmra.mxu0 %v1627
        %v1688 = vpop.f32.mrf.mxu0
        %v1689 = vadd.f32 0.0, %v1688
        %v1690 = vpop.f32.mrf.mxu0
        %v1691 = vadd.f32 0.0, %v1690
        %1692 = vmatmul.bf16.gmra.mxu0 %v1630
        %v1693 = vpop.f32.mrf.mxu0
        %v1694 = vadd.f32 0.0, %v1693
        %v1695 = vpop.f32.mrf.mxu0
        %v1696 = vadd.f32 0.0, %v1695
        %1697 = vmatmul.bf16.gmra.mxu0 %v1633
        %v1698 = vpop.f32.mrf.mxu0
        %v1699 = vadd.f32 0.0, %v1698
        %v1700 = vpop.f32.mrf.mxu0
        %v1701 = vadd.f32 0.0, %v1700
        %1702 = vmatmul.bf16.gmra.mxu0 %v1636
        %v1703 = vpop.f32.mrf.mxu0
        %v1704 = vadd.f32 0.0, %v1703
        %v1705 = vpop.f32.mrf.mxu0
        %v1706 = vadd.f32 0.0, %v1705
        %1707 = vmatmul.bf16.gmra.mxu0 %v1639
        %v1708 = vpop.f32.mrf.mxu0
        %v1709 = vadd.f32 0.0, %v1708
        %v1710 = vpop.f32.mrf.mxu0
        %v1711 = vadd.f32 0.0, %v1710
        %1712 = vmatmul.bf16.gmra.mxu0 %v1642
        %v1713 = vpop.f32.mrf.mxu0
        %v1714 = vadd.f32 0.0, %v1713
        %v1715 = vpop.f32.mrf.mxu0
        %v1716 = vadd.f32 0.0, %v1715
        %1717 = vmatmul.bf16.gmra.mxu0 %v1645
        %v1718 = vpop.f32.mrf.mxu0
        %v1719 = vadd.f32 0.0, %v1718
        %v1720 = vpop.f32.mrf.mxu0
        %v1721 = vadd.f32 0.0, %v1720
        %1722 = vmatmul.bf16.gmra.mxu0 %v1648
        %v1723 = vpop.f32.mrf.mxu0
        %v1724 = vadd.f32 0.0, %v1723
        %v1725 = vpop.f32.mrf.mxu0
        %v1726 = vadd.f32 0.0, %v1725
        %1727 = vmatmul.bf16.gmra.mxu0 %v1651
        %v1728 = vpop.f32.mrf.mxu0
        %v1729 = vadd.f32 0.0, %v1728
        %v1730 = vpop.f32.mrf.mxu0
        %v1731 = vadd.f32 0.0, %v1730
        %1732 = vmatmul.bf16.gmra.mxu0 %v1654
        %v1733 = vpop.f32.mrf.mxu0
        %v1734 = vadd.f32 0.0, %v1733
        %v1735 = vpop.f32.mrf.mxu0
        %v1736 = vadd.f32 0.0, %v1735
        %1737 = vmatmul.bf16.gmra.mxu0 %v1657
        %v1738 = vpop.f32.mrf.mxu0
        %v1739 = vadd.f32 0.0, %v1738
        %v1740 = vpop.f32.mrf.mxu0
        %v1741 = vadd.f32 0.0, %v1740
        %1742 = vmatmul.bf16.gmra.mxu0 %v1660
        %v1743 = vpop.f32.mrf.mxu0
        %v1744 = vadd.f32 0.0, %v1743
        %v1745 = vpop.f32.mrf.mxu0
        %v1746 = vadd.f32 0.0, %v1745
        %1747 = vmatmul.bf16.gmra.mxu0 %v1663
        %v1748 = vpop.f32.mrf.mxu0
        %v1749 = vadd.f32 0.0, %v1748
        %v1750 = vpop.f32.mrf.mxu0
        %v1751 = vadd.f32 0.0, %v1750
        %1752 = vmatmul.bf16.gmra.mxu0 %v1666
        %v1753 = vpop.f32.mrf.mxu0
        %v1754 = vadd.f32 0.0, %v1753
        %v1755 = vpop.f32.mrf.mxu0
        %v1756 = vadd.f32 0.0, %v1755
        %1757 = vmatmul.bf16.gmra.mxu0 %v1669
        %v1758 = vpop.f32.mrf.mxu0
        %v1759 = vadd.f32 0.0, %v1758
        %v1760 = vpop.f32.mrf.mxu0
        %v1761 = vadd.f32 0.0, %v1760
        %1762 = vdwg.mxu0
        %v1763 = vpack.c.bf16 %v1684, %v1684
        %v1764 = vpack.c.bf16 %v1686, %v1686
        %v1765 = vpack.c.bf16 %v1689, %v1689
        %v1766 = vpack.c.bf16 %v1691, %v1691
        %v1767 = vpack.c.bf16 %v1694, %v1694
        %v1768 = vpack.c.bf16 %v1696, %v1696
        %v1769 = vpack.c.bf16 %v1699, %v1699
        %v1770 = vpack.c.bf16 %v1701, %v1701
        %v1771 = vpack.c.bf16 %v1704, %v1704
        %v1772 = vpack.c.bf16 %v1706, %v1706
        %v1773 = vpack.c.bf16 %v1709, %v1709
        %v1774 = vpack.c.bf16 %v1711, %v1711
        %v1775 = vpack.c.bf16 %v1714, %v1714
        %v1776 = vpack.c.bf16 %v1716, %v1716
        %v1777 = vpack.c.bf16 %v1719, %v1719
        %v1778 = vpack.c.bf16 %v1721, %v1721
        %v1779 = vpack.c.bf16 %v1724, %v1724
        %v1780 = vpack.c.bf16 %v1726, %v1726
        %v1781 = vpack.c.bf16 %v1729, %v1729
        %v1782 = vpack.c.bf16 %v1731, %v1731
        %v1783 = vpack.c.bf16 %v1734, %v1734
        %v1784 = vpack.c.bf16 %v1736, %v1736
        %v1785 = vpack.c.bf16 %v1739, %v1739
        %v1786 = vpack.c.bf16 %v1741, %v1741
        %v1787 = vpack.c.bf16 %v1744, %v1744
        %v1788 = vpack.c.bf16 %v1746, %v1746
        %v1789 = vpack.c.bf16 %v1749, %v1749
        %v1790 = vpack.c.bf16 %v1751, %v1751
        %v1791 = vpack.c.bf16 %v1754, %v1754
        %v1792 = vpack.c.bf16 %v1756, %v1756
        %v1793 = vpack.c.bf16 %v1759, %v1759
        %v1794 = vpack.c.bf16 %v1761, %v1761
        %v1796 = vshrl.u32 %v1763, 16
        %v1798 = vrot.slane %v1796, 7
        %v1799 = vshll.u32 %v1763, 16
        %v1801 = vor.u32 %v1798, %v1799
        %v1802 = vrot.slane %v1798, 4
        %v1804 = vshrl.u32 %v1764, 16
        %v1806 = vrot.slane %v1804, 7
        %v1807 = vshll.u32 %v1764, 16
        %v1809 = vor.u32 %v1806, %v1807
        %v1810 = vsel %vm917, %v1802, %v1809
        %v1811 = vrot.slane %v1806, 4
        %v1813 = vshrl.u32 %v1765, 16
        %v1815 = vrot.slane %v1813, 7
        %v1816 = vshll.u32 %v1765, 16
        %v1818 = vor.u32 %v1815, %v1816
        %v1819 = vrot.slane %v1815, 4
        %v1821 = vshrl.u32 %v1766, 16
        %v1823 = vrot.slane %v1821, 7
        %v1824 = vshll.u32 %v1766, 16
        %v1826 = vor.u32 %v1823, %v1824
        %v1827 = vsel %vm917, %v1819, %v1826
        %v1828 = vrot.slane %v1823, 4
        %v1830 = vshrl.u32 %v1767, 16
        %v1832 = vrot.slane %v1830, 7
        %v1833 = vshll.u32 %v1767, 16
        %v1835 = vor.u32 %v1832, %v1833
        %v1836 = vrot.slane %v1832, 4
        %v1838 = vshrl.u32 %v1768, 16
        %v1840 = vrot.slane %v1838, 7
        %v1841 = vshll.u32 %v1768, 16
        %v1843 = vor.u32 %v1840, %v1841
        %v1844 = vsel %vm917, %v1836, %v1843
        %v1845 = vrot.slane %v1840, 4
        %v1847 = vshrl.u32 %v1769, 16
        %v1849 = vrot.slane %v1847, 7
        %v1850 = vshll.u32 %v1769, 16
        %v1852 = vor.u32 %v1849, %v1850
        %v1853 = vrot.slane %v1849, 4
        %v1855 = vshrl.u32 %v1770, 16
        %v1857 = vrot.slane %v1855, 7
        %v1858 = vshll.u32 %v1770, 16
        %v1860 = vor.u32 %v1857, %v1858
        %v1861 = vsel %vm917, %v1853, %v1860
        %v1862 = vrot.slane %v1857, 4
        %v1864 = vshrl.u32 %v1771, 16
        %v1866 = vrot.slane %v1864, 7
        %v1867 = vshll.u32 %v1771, 16
        %v1869 = vor.u32 %v1866, %v1867
        %v1870 = vrot.slane %v1866, 4
        %v1872 = vshrl.u32 %v1772, 16
        %v1874 = vrot.slane %v1872, 7
        %v1875 = vshll.u32 %v1772, 16
        %v1877 = vor.u32 %v1874, %v1875
        %v1878 = vsel %vm917, %v1870, %v1877
        %v1879 = vrot.slane %v1874, 4
        %v1881 = vshrl.u32 %v1773, 16
        %v1883 = vrot.slane %v1881, 7
        %v1884 = vshll.u32 %v1773, 16
        %v1886 = vor.u32 %v1883, %v1884
        %v1887 = vrot.slane %v1883, 4
        %v1889 = vshrl.u32 %v1774, 16
        %v1891 = vrot.slane %v1889, 7
        %v1892 = vshll.u32 %v1774, 16
        %v1894 = vor.u32 %v1891, %v1892
        %v1895 = vsel %vm917, %v1887, %v1894
        %v1896 = vrot.slane %v1891, 4
        %v1898 = vshrl.u32 %v1775, 16
        %v1900 = vrot.slane %v1898, 7
        %v1901 = vshll.u32 %v1775, 16
        %v1903 = vor.u32 %v1900, %v1901
        %v1904 = vrot.slane %v1900, 4
        %v1906 = vshrl.u32 %v1776, 16
        %v1908 = vrot.slane %v1906, 7
        %v1909 = vshll.u32 %v1776, 16
        %v1911 = vor.u32 %v1908, %v1909
        %v1912 = vsel %vm917, %v1904, %v1911
        %v1913 = vrot.slane %v1908, 4
        %v1915 = vshrl.u32 %v1777, 16
        %v1917 = vrot.slane %v1915, 7
        %v1918 = vshll.u32 %v1777, 16
        %v1920 = vor.u32 %v1917, %v1918
        %v1921 = vrot.slane %v1917, 4
        %v1923 = vshrl.u32 %v1778, 16
        %v1925 = vrot.slane %v1923, 7
        %v1926 = vshll.u32 %v1778, 16
        %v1928 = vor.u32 %v1925, %v1926
        %v1929 = vsel %vm917, %v1921, %v1928
        %v1930 = vrot.slane %v1925, 4
        %v1932 = vshrl.u32 %v1779, 16
        %v1934 = vrot.slane %v1932, 7
        %v1935 = vshll.u32 %v1779, 16
        %v1937 = vor.u32 %v1934, %v1935
        %v1938 = vrot.slane %v1934, 4
        %v1940 = vshrl.u32 %v1780, 16
        %v1942 = vrot.slane %v1940, 7
        %v1943 = vshll.u32 %v1780, 16
        %v1945 = vor.u32 %v1942, %v1943
        %v1946 = vsel %vm917, %v1938, %v1945
        %v1947 = vrot.slane %v1942, 4
        %v1949 = vshrl.u32 %v1781, 16
        %v1951 = vrot.slane %v1949, 7
        %v1952 = vshll.u32 %v1781, 16
        %v1954 = vor.u32 %v1951, %v1952
        %v1955 = vrot.slane %v1951, 4
        %v1957 = vshrl.u32 %v1782, 16
        %v1959 = vrot.slane %v1957, 7
        %v1960 = vshll.u32 %v1782, 16
        %v1962 = vor.u32 %v1959, %v1960
        %v1963 = vsel %vm917, %v1955, %v1962
        %v1964 = vrot.slane %v1959, 4
        %v1966 = vshrl.u32 %v1783, 16
        %v1968 = vrot.slane %v1966, 7
        %v1969 = vshll.u32 %v1783, 16
        %v1971 = vor.u32 %v1968, %v1969
        %v1972 = vrot.slane %v1968, 4
        %v1974 = vshrl.u32 %v1784, 16
        %v1976 = vrot.slane %v1974, 7
        %v1977 = vshll.u32 %v1784, 16
        %v1979 = vor.u32 %v1976, %v1977
        %v1980 = vsel %vm917, %v1972, %v1979
        %v1981 = vrot.slane %v1976, 4
        %v1983 = vshrl.u32 %v1785, 16
        %v1985 = vrot.slane %v1983, 7
        %v1986 = vshll.u32 %v1785, 16
        %v1988 = vor.u32 %v1985, %v1986
        %v1989 = vrot.slane %v1985, 4
        %v1991 = vshrl.u32 %v1786, 16
        %v1993 = vrot.slane %v1991, 7
        %v1994 = vshll.u32 %v1786, 16
        %v1996 = vor.u32 %v1993, %v1994
        %v1997 = vsel %vm917, %v1989, %v1996
        %v1998 = vrot.slane %v1993, 4
        %v2000 = vshrl.u32 %v1787, 16
        %v2002 = vrot.slane %v2000, 7
        %v2003 = vshll.u32 %v1787, 16
        %v2005 = vor.u32 %v2002, %v2003
        %v2006 = vrot.slane %v2002, 4
        %v2008 = vshrl.u32 %v1788, 16
        %v2010 = vrot.slane %v2008, 7
        %v2011 = vshll.u32 %v1788, 16
        %v2013 = vor.u32 %v2010, %v2011
        %v2014 = vsel %vm917, %v2006, %v2013
        %v2015 = vrot.slane %v2010, 4
        %v2017 = vshrl.u32 %v1789, 16
        %v2019 = vrot.slane %v2017, 7
        %v2020 = vshll.u32 %v1789, 16
        %v2022 = vor.u32 %v2019, %v2020
        %v2023 = vrot.slane %v2019, 4
        %v2025 = vshrl.u32 %v1790, 16
        %v2027 = vrot.slane %v2025, 7
        %v2028 = vshll.u32 %v1790, 16
        %v2030 = vor.u32 %v2027, %v2028
        %v2031 = vsel %vm917, %v2023, %v2030
        %v2032 = vrot.slane %v2027, 4
        %v2034 = vshrl.u32 %v1791, 16
        %v2036 = vrot.slane %v2034, 7
        %v2037 = vshll.u32 %v1791, 16
        %v2039 = vor.u32 %v2036, %v2037
        %v2040 = vrot.slane %v2036, 4
        %v2042 = vshrl.u32 %v1792, 16
        %v2044 = vrot.slane %v2042, 7
        %v2045 = vshll.u32 %v1792, 16
        %v2047 = vor.u32 %v2044, %v2045
        %v2048 = vsel %vm917, %v2040, %v2047
        %v2049 = vrot.slane %v2044, 4
        %v2051 = vshrl.u32 %v1793, 16
        %v2053 = vrot.slane %v2051, 7
        %v2054 = vshll.u32 %v1793, 16
        %v2056 = vor.u32 %v2053, %v2054
        %v2057 = vrot.slane %v2053, 4
        %v2059 = vshrl.u32 %v1794, 16
        %v2061 = vrot.slane %v2059, 7
        %v2062 = vshll.u32 %v1794, 16
        %v2064 = vor.u32 %v2061, %v2062
        %v2065 = vsel %vm917, %v2057, %v2064
        %v2066 = vrot.slane %v2061, 4
        %2067 = vrot.lane.b32.xlu0 %v1801, 8
        %v2068 = vpop.permute.xlu0 %2067
        %2069 = vrot.lane.b32.xlu0 %v1810, 8
        %v2070 = vpop.permute.xlu0 %2069
        %2071 = vrot.lane.b32.xlu0 %v1811, 8
        %v2072 = vpop.permute.xlu0 %2071
        %2073 = vrot.lane.b32.xlu0 %v1818, 8
        %v2074 = vpop.permute.xlu0 %2073
        %2075 = vrot.lane.b32.xlu0 %v1827, 8
        %v2076 = vpop.permute.xlu0 %2075
        %2077 = vrot.lane.b32.xlu0 %v1828, 8
        %v2078 = vpop.permute.xlu0 %2077
        %2079 = vrot.lane.b32.xlu0 %v1835, 8
        %v2080 = vpop.permute.xlu0 %2079
        %2081 = vrot.lane.b32.xlu0 %v1844, 8
        %v2082 = vpop.permute.xlu0 %2081
        %2083 = vrot.lane.b32.xlu0 %v1845, 8
        %v2084 = vpop.permute.xlu0 %2083
        %2085 = vrot.lane.b32.xlu0 %v1852, 8
        %v2086 = vpop.permute.xlu0 %2085
        %2087 = vrot.lane.b32.xlu0 %v1861, 8
        %v2088 = vpop.permute.xlu0 %2087
        %2089 = vrot.lane.b32.xlu0 %v1862, 8
        %v2090 = vpop.permute.xlu0 %2089
        %2091 = vrot.lane.b32.xlu0 %v1869, 8
        %v2092 = vpop.permute.xlu0 %2091
        %2093 = vrot.lane.b32.xlu0 %v1878, 8
        %v2094 = vpop.permute.xlu0 %2093
        %2095 = vrot.lane.b32.xlu0 %v1879, 8
        %v2096 = vpop.permute.xlu0 %2095
        %2097 = vrot.lane.b32.xlu0 %v1886, 8
        %v2098 = vpop.permute.xlu0 %2097
        %2099 = vrot.lane.b32.xlu0 %v1895, 8
        %v2100 = vpop.permute.xlu0 %2099
        %2101 = vrot.lane.b32.xlu0 %v1896, 8
        %v2102 = vpop.permute.xlu0 %2101
        %2103 = vrot.lane.b32.xlu0 %v1903, 8
        %v2104 = vpop.permute.xlu0 %2103
        %2105 = vrot.lane.b32.xlu0 %v1912, 8
        %v2106 = vpop.permute.xlu0 %2105
        %2107 = vrot.lane.b32.xlu0 %v1913, 8
        %v2108 = vpop.permute.xlu0 %2107
        %2109 = vrot.lane.b32.xlu0 %v1920, 8
        %v2110 = vpop.permute.xlu0 %2109
        %2111 = vrot.lane.b32.xlu0 %v1929, 8
        %v2112 = vpop.permute.xlu0 %2111
        %2113 = vrot.lane.b32.xlu0 %v1930, 8
        %v2114 = vpop.permute.xlu0 %2113
        %2115 = vrot.lane.b32.xlu0 %v1937, 8
        %v2116 = vpop.permute.xlu0 %2115
        %2117 = vrot.lane.b32.xlu0 %v1946, 8
        %v2118 = vpop.permute.xlu0 %2117
        %2119 = vrot.lane.b32.xlu0 %v1947, 8
        %v2120 = vpop.permute.xlu0 %2119
        %2121 = vrot.lane.b32.xlu0 %v1954, 8
        %v2122 = vpop.permute.xlu0 %2121
        %2123 = vrot.lane.b32.xlu0 %v1963, 8
        %v2124 = vpop.permute.xlu0 %2123
        %2125 = vrot.lane.b32.xlu0 %v1964, 8
        %v2126 = vpop.permute.xlu0 %2125
        %2127 = vrot.lane.b32.xlu0 %v1971, 8
        %v2128 = vpop.permute.xlu0 %2127
        %2129 = vrot.lane.b32.xlu0 %v1980, 8
        %v2130 = vpop.permute.xlu0 %2129
        %2131 = vrot.lane.b32.xlu0 %v1981, 8
        %v2132 = vpop.permute.xlu0 %2131
        %2133 = vrot.lane.b32.xlu0 %v1988, 8
        %v2134 = vpop.permute.xlu0 %2133
        %2135 = vrot.lane.b32.xlu0 %v1997, 8
        %v2136 = vpop.permute.xlu0 %2135
        %2137 = vrot.lane.b32.xlu0 %v1998, 8
        %v2138 = vpop.permute.xlu0 %2137
        %2139 = vrot.lane.b32.xlu0 %v2005, 8
        %v2140 = vpop.permute.xlu0 %2139
        %2141 = vrot.lane.b32.xlu0 %v2014, 8
        %v2142 = vpop.permute.xlu0 %2141
        %2143 = vrot.lane.b32.xlu0 %v2015, 8
        %v2144 = vpop.permute.xlu0 %2143
        %2145 = vrot.lane.b32.xlu0 %v2022, 8
        %v2146 = vpop.permute.xlu0 %2145
        %2147 = vrot.lane.b32.xlu0 %v2031, 8
        %v2148 = vpop.permute.xlu0 %2147
        %2149 = vrot.lane.b32.xlu0 %v2032, 8
        %v2150 = vpop.permute.xlu0 %2149
        %2151 = vrot.lane.b32.xlu0 %v2039, 8
        %v2152 = vpop.permute.xlu0 %2151
        %2153 = vrot.lane.b32.xlu0 %v2048, 8
        %v2154 = vpop.permute.xlu0 %2153
        %2155 = vrot.lane.b32.xlu0 %v2049, 8
        %v2156 = vpop.permute.xlu0 %2155
        %2157 = vrot.lane.b32.xlu0 %v2056, 8
        %v2158 = vpop.permute.xlu0 %2157
        %2159 = vrot.lane.b32.xlu0 %v2065, 8
        %v2160 = vpop.permute.xlu0 %2159
        %2161 = vrot.lane.b32.xlu0 %v2066, 8
        %v2162 = vpop.permute.xlu0 %2161
        %vm2211 = vcmask 126016
        %vm2212 = vmand %vm2211, %vm1240
        %v2213 = vld [vmem:[%s1238] sm:$0xf]
        %v2214 = vsel %vm2212, %v2068, %v2213
        %2215 = vst [vmem:[%s1238] sm:$0xf] %v2214
        %vm2216 = vcmask 126016
        %2217 = vst.msk [vmem:[%s1238 + $0x4] sm:$0xf] %vm2216, %v2070
        %vm2218 = vcmask 122944
        %vm2219 = vmand %vm2218, %vm915
        %v2220 = vld [vmem:[%s1238 + $0x8] sm:$0x1]
        %v2221 = vsel %vm2219, %v2072, %v2220
        %2222 = vst [vmem:[%s1238 + $0x8] sm:$0x1] %v2221
        %v2223 = vld [vmem:[%s1238 + $0xc] sm:$0xf]
        %v2224 = vsel %vm2212, %v2074, %v2223
        %2225 = vst [vmem:[%s1238 + $0xc] sm:$0xf] %v2224
        %2226 = vst.msk [vmem:[%s1238 + $0x10] sm:$0xf] %vm2216, %v2076
        %v2227 = vld [vmem:[%s1238 + $0x14] sm:$0x1]
        %v2228 = vsel %vm2219, %v2078, %v2227
        %2229 = vst [vmem:[%s1238 + $0x14] sm:$0x1] %v2228
        %v2230 = vld [vmem:[%s1238 + $0x18] sm:$0xf]
        %v2231 = vsel %vm2212, %v2080, %v2230
        %2232 = vst [vmem:[%s1238 + $0x18] sm:$0xf] %v2231
        %2233 = vst.msk [vmem:[%s1238 + $0x1c] sm:$0xf] %vm2216, %v2082
        %v2234 = vld [vmem:[%s1238 + $0x20] sm:$0x1]
        %v2235 = vsel %vm2219, %v2084, %v2234
        %2236 = vst [vmem:[%s1238 + $0x20] sm:$0x1] %v2235
        %v2237 = vld [vmem:[%s1238 + $0x24] sm:$0xf]
        %v2238 = vsel %vm2212, %v2086, %v2237
        %2239 = vst [vmem:[%s1238 + $0x24] sm:$0xf] %v2238
        %2240 = vst.msk [vmem:[%s1238 + $0x28] sm:$0xf] %vm2216, %v2088
        %v2241 = vld [vmem:[%s1238 + $0x2c] sm:$0x1]
        %v2242 = vsel %vm2219, %v2090, %v2241
        %2243 = vst [vmem:[%s1238 + $0x2c] sm:$0x1] %v2242
        %v2244 = vld [vmem:[%s1238 + $0x30] sm:$0xf]
        %v2245 = vsel %vm2212, %v2092, %v2244
        %2246 = vst [vmem:[%s1238 + $0x30] sm:$0xf] %v2245
        %2247 = vst.msk [vmem:[%s1238 + $0x34] sm:$0xf] %vm2216, %v2094
        %v2248 = vld [vmem:[%s1238 + $0x38] sm:$0x1]
        %v2249 = vsel %vm2219, %v2096, %v2248
        %2250 = vst [vmem:[%s1238 + $0x38] sm:$0x1] %v2249
        %v2251 = vld [vmem:[%s1238 + $0x3c] sm:$0xf]
        %v2252 = vsel %vm2212, %v2098, %v2251
        %2253 = vst [vmem:[%s1238 + $0x3c] sm:$0xf] %v2252
        %2254 = vst.msk [vmem:[%s1238 + $0x40] sm:$0xf] %vm2216, %v2100
        %v2255 = vld [vmem:[%s1238 + $0x44] sm:$0x1]
        %v2256 = vsel %vm2219, %v2102, %v2255
        %2257 = vst [vmem:[%s1238 + $0x44] sm:$0x1] %v2256
        %v2258 = vld [vmem:[%s1238 + $0x48] sm:$0xf]
        %v2259 = vsel %vm2212, %v2104, %v2258
        %2260 = vst [vmem:[%s1238 + $0x48] sm:$0xf] %v2259
        %2261 = vst.msk [vmem:[%s1238 + $0x4c] sm:$0xf] %vm2216, %v2106
        %v2262 = vld [vmem:[%s1238 + $0x50] sm:$0x1]
        %v2263 = vsel %vm2219, %v2108, %v2262
        %2264 = vst [vmem:[%s1238 + $0x50] sm:$0x1] %v2263
        %v2265 = vld [vmem:[%s1238 + $0x54] sm:$0xf]
        %v2266 = vsel %vm2212, %v2110, %v2265
        %2267 = vst [vmem:[%s1238 + $0x54] sm:$0xf] %v2266
        %2268 = vst.msk [vmem:[%s1238 + $0x58] sm:$0xf] %vm2216, %v2112
        %v2269 = vld [vmem:[%s1238 + $0x5c] sm:$0x1]
        %v2270 = vsel %vm2219, %v2114, %v2269
        %2271 = vst [vmem:[%s1238 + $0x5c] sm:$0x1] %v2270
        %v2272 = vld [vmem:[%s1238 + $0x60] sm:$0xf]
        %v2273 = vsel %vm2212, %v2116, %v2272
        %2274 = vst [vmem:[%s1238 + $0x60] sm:$0xf] %v2273
        %2275 = vst.msk [vmem:[%s1238 + $0x64] sm:$0xf] %vm2216, %v2118
        %v2276 = vld [vmem:[%s1238 + $0x68] sm:$0x1]
        %v2277 = vsel %vm2219, %v2120, %v2276
        %2278 = vst [vmem:[%s1238 + $0x68] sm:$0x1] %v2277
        %v2279 = vld [vmem:[%s1238 + $0x6c] sm:$0xf]
        %v2280 = vsel %vm2212, %v2122, %v2279
        %2281 = vst [vmem:[%s1238 + $0x6c] sm:$0xf] %v2280
        %2282 = vst.msk [vmem:[%s1238 + $0x70] sm:$0xf] %vm2216, %v2124
        %v2283 = vld [vmem:[%s1238 + $0x74] sm:$0x1]
        %v2284 = vsel %vm2219, %v2126, %v2283
        %2285 = vst [vmem:[%s1238 + $0x74] sm:$0x1] %v2284
        %v2286 = vld [vmem:[%s1238 + $0x78] sm:$0xf]
        %v2287 = vsel %vm2212, %v2128, %v2286
        %2288 = vst [vmem:[%s1238 + $0x78] sm:$0xf] %v2287
        %2289 = vst.msk [vmem:[%s1238 + $0x7c] sm:$0xf] %vm2216, %v2130
        %v2290 = vld [vmem:[%s1238 + $0x80] sm:$0x1]
        %v2291 = vsel %vm2219, %v2132, %v2290
        %2292 = vst [vmem:[%s1238 + $0x80] sm:$0x1] %v2291
        %v2293 = vld [vmem:[%s1238 + $0x84] sm:$0xf]
        %v2294 = vsel %vm2212, %v2134, %v2293
        %2295 = vst [vmem:[%s1238 + $0x84] sm:$0xf] %v2294
        %2296 = vst.msk [vmem:[%s1238 + $0x88] sm:$0xf] %vm2216, %v2136
        %v2297 = vld [vmem:[%s1238 + $0x8c] sm:$0x1]
        %v2298 = vsel %vm2219, %v2138, %v2297
        %2299 = vst [vmem:[%s1238 + $0x8c] sm:$0x1] %v2298
        %v2300 = vld [vmem:[%s1238 + $0x90] sm:$0xf]
        %v2301 = vsel %vm2212, %v2140, %v2300
        %2302 = vst [vmem:[%s1238 + $0x90] sm:$0xf] %v2301
        %2303 = vst.msk [vmem:[%s1238 + $0x94] sm:$0xf] %vm2216, %v2142
        %v2304 = vld [vmem:[%s1238 + $0x98] sm:$0x1]
        %v2305 = vsel %vm2219, %v2144, %v2304
        %2306 = vst [vmem:[%s1238 + $0x98] sm:$0x1] %v2305
        %v2307 = vld [vmem:[%s1238 + $0x9c] sm:$0xf]
        %v2308 = vsel %vm2212, %v2146, %v2307
        %2309 = vst [vmem:[%s1238 + $0x9c] sm:$0xf] %v2308
        %2310 = vst.msk [vmem:[%s1238 + $0xa0] sm:$0xf] %vm2216, %v2148
        %v2311 = vld [vmem:[%s1238 + $0xa4] sm:$0x1]
        %v2312 = vsel %vm2219, %v2150, %v2311
        %2313 = vst [vmem:[%s1238 + $0xa4] sm:$0x1] %v2312
        %v2314 = vld [vmem:[%s1238 + $0xa8] sm:$0xf]
        %v2315 = vsel %vm2212, %v2152, %v2314
        %2316 = vst [vmem:[%s1238 + $0xa8] sm:$0xf] %v2315
        %2317 = vst.msk [vmem:[%s1238 + $0xac] sm:$0xf] %vm2216, %v2154
        %v2318 = vld [vmem:[%s1238 + $0xb0] sm:$0x1]
        %v2319 = vsel %vm2219, %v2156, %v2318
        %2320 = vst [vmem:[%s1238 + $0xb0] sm:$0x1] %v2319
        %v2321 = vld [vmem:[%s1238 + $0xb4] sm:$0xf]
        %v2322 = vsel %vm2212, %v2158, %v2321
        %2323 = vst [vmem:[%s1238 + $0xb4] sm:$0xf] %v2322
        %2324 = vst.msk [vmem:[%s1238 + $0xb8] sm:$0xf] %vm2216, %v2160
        %v2325 = vld [vmem:[%s1238 + $0xbc] sm:$0x1]
        %v2326 = vsel %vm2219, %v2162, %v2325
        %2327 = vst [vmem:[%s1238 + $0xbc] sm:$0x1] %v2326
        %s2328 = scalar_lea.vmem %s3, 128
        %v2329 = vld [vmem:[%s2328] sm:$0xf]
        %v2330 = vld [vmem:[%s2328 + $0x4] sm:$0xf]
        %v2331 = vld [vmem:[%s2328 + $0x8] sm:$0xf]
        %v2332 = vld [vmem:[%s2328 + $0xc] sm:$0xf]
        %v2333 = vld [vmem:[%s2328 + $0x10] sm:$0xf]
        %v2334 = vld [vmem:[%s2328 + $0x14] sm:$0xf]
        %v2335 = vld [vmem:[%s2328 + $0x18] sm:$0xf]
        %v2336 = vld [vmem:[%s2328 + $0x1c] sm:$0xf]
        %v2337 = vld [vmem:[%s2328 + $0x20] sm:$0xf]
        %v2338 = vld [vmem:[%s2328 + $0x24] sm:$0xf]
        %v2339 = vld [vmem:[%s2328 + $0x28] sm:$0xf]
        %v2340 = vld [vmem:[%s2328 + $0x2c] sm:$0xf]
        %v2341 = vld [vmem:[%s2328 + $0x30] sm:$0xf]
        %v2342 = vld [vmem:[%s2328 + $0x34] sm:$0xf]
        %v2343 = vld [vmem:[%s2328 + $0x38] sm:$0xf]
        %v2344 = vld [vmem:[%s2328 + $0x3c] sm:$0xf]
        %v2346 = vunpack.c.l.b16 %v488
        %v2347 = vpack.c.b16 %v2346, %v515
        %vm2348 = vsmask.f32 5376
        %v2349 = vrot.slane %v1376, 2
        %v2350 = vrot.slane %v1378, 3
        %v2351 = vor.u32 %v2349, %v2350
        %v2352 = vrot.slane %v1387, 2
        %v2353 = vrot.slane %v1383, 3
        %v2354 = vor.u32 %v2352, %v2353
        %v2355 = vsel %vm2348, %v2351, %v2354
        %v2357 = vshrl.u32 %v2347, 16
        %v2359 = vrot.slane %v2357, 2
        %v2360 = vshll.u32 %v2347, 16
        %v2362 = vrot.slane %v2360, 3
        %v2363 = vor.u32 %v2359, %v2362
        %v2364 = vsel %vm2348, %v2354, %v2363
        %v2384 = vunpack.c.l.b16 %v2329
        %v2385 = vunpack.c.l.b16 %v2330
        %v2386 = vunpack.c.l.b16 %v2331
        %v2387 = vunpack.c.l.b16 %v2332
        %v2388 = vunpack.c.l.b16 %v2333
        %v2389 = vunpack.c.l.b16 %v2334
        %v2390 = vunpack.c.l.b16 %v2335
        %v2391 = vunpack.c.l.b16 %v2336
        %v2392 = vunpack.c.l.b16 %v2337
        %v2393 = vunpack.c.l.b16 %v2338
        %v2394 = vunpack.c.l.b16 %v2339
        %v2395 = vunpack.c.l.b16 %v2340
        %v2396 = vunpack.c.l.b16 %v2341
        %v2397 = vunpack.c.l.b16 %v2342
        %v2398 = vunpack.c.l.b16 %v2343
        %v2399 = vunpack.c.l.b16 %v2344
        %v2400 = vpack.c.b16 %v2385, %v2384
        %v2401 = vpack.c.b16 %v2387, %v2386
        %v2402 = vpack.c.b16 %v2389, %v2388
        %v2403 = vpack.c.b16 %v2391, %v2390
        %v2404 = vpack.c.b16 %v2393, %v2392
        %v2405 = vpack.c.b16 %v2395, %v2394
        %v2406 = vpack.c.b16 %v2397, %v2396
        %v2407 = vpack.c.b16 %v2399, %v2398
        %2416 = vmatpush.bf16.msra.mxu0 %v2407
        %2417 = vmatpush.bf16.msra.mxu0 %v2406
        %2418 = vmatpush.bf16.msra.mxu0 %v2405
        %2419 = vmatpush.bf16.msra.mxu0 %v2404
        %2420 = vmatpush.bf16.msra.mxu0 %v2403
        %2421 = vmatpush.bf16.msra.mxu0 %v2402
        %2422 = vmatpush.bf16.msra.mxu0 %v2401
        %2423 = vmatpush.bf16.msra.mxu0 %v2400
        %2424 = vmatmul.bf16.gmra.mxu0 %v2355
        %v2425 = vpop.f32.mrf.mxu0
        %v2426 = vadd.f32 0.0, %v2425
        %v2427 = vpop.f32.mrf.mxu0
        %v2428 = vadd.f32 0.0, %v2427
        %2429 = vmatmul.bf16.gmra.mxu0 %v2364
        %v2430 = vpop.f32.mrf.mxu0
        %v2431 = vadd.f32 0.0, %v2430
        %v2432 = vpop.f32.mrf.mxu0
        %v2433 = vadd.f32 0.0, %v2432
        %2434 = vmatmul.bf16.gmra.mxu0 %v2363
        %v2435 = vpop.f32.mrf.mxu0
        %v2436 = vadd.f32 0.0, %v2435
        %v2437 = vpop.f32.mrf.mxu0
        %2438 = vdwg.mxu0
        %s2439 = scalar_lea.vmem %s4, 2
        %v2440 = vld [vmem:[%s2439] sm:$0x1]
        %v2442 = vperm.slane %v2440, 0
        %v2444 = vmul.f32 %v2426, %v2442
        %v2445 = vmul.f32 %v2428, %v2442
        %v2446 = vmul.f32 %v2431, %v2442
        %v2447 = vmul.f32 %v2433, %v2442
        %v2448 = vmul.f32 %v2436, %v2442
        %s2449 = scalar_lea.vmem %s5, 2
        %v2450 = vld [vmem:[%s2449] sm:$0x1]
        %v2452 = vperm.slane %v2450, 0
        %v2454 = vadd.f32 %v2444, %v2452
        %v2455 = vadd.f32 %v2445, %v2452
        %v2456 = vadd.f32 %v2446, %v2452
        %v2457 = vadd.f32 %v2447, %v2452
        %v2458 = vadd.f32 %v2448, %v2452
        %vm2459 = vcmp.gt.f32.partialorder %v2454, 0.0
        %vm2460 = vcmp.gt.f32.partialorder %v2455, 0.0
        %vm2461 = vcmp.gt.f32.partialorder %v2456, 0.0
        %vm2462 = vcmp.gt.f32.partialorder %v2457, 0.0
        %vm2463 = vcmp.gt.f32.partialorder %v2458, 0.0
        %v2464 = vmul.f32 %v2454, 0.01
        %v2465 = vmul.f32 %v2455, 0.01
        %v2466 = vmul.f32 %v2456, 0.01
        %v2467 = vmul.f32 %v2457, 0.01
        %v2468 = vmul.f32 %v2458, 0.01
        %v2469 = vsel %vm2459, %v2454, %v2464
        %v2470 = vsel %vm2460, %v2455, %v2465
        %v2471 = vsel %vm2461, %v2456, %v2466
        %v2472 = vsel %vm2462, %v2457, %v2467
        %v2473 = vsel %vm2463, %v2458, %v2468
        %v2474 = vpack.c.bf16 %v2470, %v2469
        %v2475 = vpack.c.bf16 %v2472, %v2471
        %v2476 = vpack.c.bf16 %v2473, %v2473
        %s2477 = scalar_lea.vmem %s2, 256
        %v2478 = vld [vmem:[%s2477] sm:$0xf]
        %v2479 = vld [vmem:[%s2477 + $0x4] sm:$0xf]
        %v2480 = vld [vmem:[%s2477 + $0x8] sm:$0xf]
        %v2481 = vld [vmem:[%s2477 + $0xc] sm:$0xf]
        %v2482 = vld [vmem:[%s2477 + $0x10] sm:$0xf]
        %v2483 = vld [vmem:[%s2477 + $0x14] sm:$0xf]
        %v2484 = vld [vmem:[%s2477 + $0x18] sm:$0xf]
        %v2485 = vld [vmem:[%s2477 + $0x1c] sm:$0xf]
        %v2486 = vld [vmem:[%s2477 + $0x20] sm:$0xf]
        %v2487 = vld [vmem:[%s2477 + $0x24] sm:$0xf]
        %v2488 = vld [vmem:[%s2477 + $0x28] sm:$0xf]
        %v2489 = vld [vmem:[%s2477 + $0x2c] sm:$0xf]
        %v2490 = vld [vmem:[%s2477 + $0x30] sm:$0xf]
        %v2491 = vld [vmem:[%s2477 + $0x34] sm:$0xf]
        %v2492 = vld [vmem:[%s2477 + $0x38] sm:$0xf]
        %v2493 = vld [vmem:[%s2477 + $0x3c] sm:$0xf]
        %v2494 = vld [vmem:[%s2477 + $0x40] sm:$0xf]
        %v2495 = vld [vmem:[%s2477 + $0x44] sm:$0xf]
        %v2496 = vld [vmem:[%s2477 + $0x48] sm:$0xf]
        %v2497 = vld [vmem:[%s2477 + $0x4c] sm:$0xf]
        %v2498 = vld [vmem:[%s2477 + $0x50] sm:$0xf]
        %v2499 = vld [vmem:[%s2477 + $0x54] sm:$0xf]
        %v2500 = vld [vmem:[%s2477 + $0x58] sm:$0xf]
        %v2501 = vld [vmem:[%s2477 + $0x5c] sm:$0xf]
        %v2502 = vld [vmem:[%s2477 + $0x60] sm:$0xf]
        %v2503 = vld [vmem:[%s2477 + $0x64] sm:$0xf]
        %v2504 = vld [vmem:[%s2477 + $0x68] sm:$0xf]
        %v2505 = vld [vmem:[%s2477 + $0x6c] sm:$0xf]
        %v2506 = vld [vmem:[%s2477 + $0x70] sm:$0xf]
        %v2507 = vld [vmem:[%s2477 + $0x74] sm:$0xf]
        %v2508 = vld [vmem:[%s2477 + $0x78] sm:$0xf]
        %v2509 = vld [vmem:[%s2477 + $0x7c] sm:$0xf]
        %v2542 = vunpack.c.l.b16 %v2478
        %v2543 = vunpack.c.l.b16 %v2479
        %v2544 = vunpack.c.l.b16 %v2480
        %v2545 = vunpack.c.l.b16 %v2481
        %v2546 = vunpack.c.l.b16 %v2482
        %v2547 = vunpack.c.l.b16 %v2483
        %v2548 = vunpack.c.l.b16 %v2484
        %v2549 = vunpack.c.l.b16 %v2485
        %v2550 = vunpack.c.l.b16 %v2486
        %v2551 = vunpack.c.l.b16 %v2487
        %v2552 = vunpack.c.l.b16 %v2488
        %v2553 = vunpack.c.l.b16 %v2489
        %v2554 = vunpack.c.l.b16 %v2490
        %v2555 = vunpack.c.l.b16 %v2491
        %v2556 = vunpack.c.l.b16 %v2492
        %v2557 = vunpack.c.l.b16 %v2493
        %v2558 = vunpack.c.l.b16 %v2494
        %v2559 = vunpack.c.l.b16 %v2495
        %v2560 = vunpack.c.l.b16 %v2496
        %v2561 = vunpack.c.l.b16 %v2497
        %v2562 = vunpack.c.l.b16 %v2498
        %v2563 = vunpack.c.l.b16 %v2499
        %v2564 = vunpack.c.l.b16 %v2500
        %v2565 = vunpack.c.l.b16 %v2501
        %v2566 = vunpack.c.l.b16 %v2502
        %v2567 = vunpack.c.l.b16 %v2503
        %v2568 = vunpack.c.l.b16 %v2504
        %v2569 = vunpack.c.l.b16 %v2505
        %v2570 = vunpack.c.l.b16 %v2506
        %v2571 = vunpack.c.l.b16 %v2507
        %v2572 = vunpack.c.l.b16 %v2508
        %v2573 = vunpack.c.l.b16 %v2509
        %v2574 = vpack.c.b16 %v2543, %v2542
        %v2575 = vpack.c.b16 %v2545, %v2544
        %v2576 = vpack.c.b16 %v2547, %v2546
        %v2577 = vpack.c.b16 %v2549, %v2548
        %v2578 = vpack.c.b16 %v2551, %v2550
        %v2579 = vpack.c.b16 %v2553, %v2552
        %v2580 = vpack.c.b16 %v2555, %v2554
        %v2581 = vpack.c.b16 %v2557, %v2556
        %v2582 = vpack.c.b16 %v2559, %v2558
        %v2583 = vpack.c.b16 %v2561, %v2560
        %v2584 = vpack.c.b16 %v2563, %v2562
        %v2585 = vpack.c.b16 %v2565, %v2564
        %v2586 = vpack.c.b16 %v2567, %v2566
        %v2587 = vpack.c.b16 %v2569, %v2568
        %v2588 = vpack.c.b16 %v2571, %v2570
        %v2589 = vpack.c.b16 %v2573, %v2572
        %v2591 = vsel %vm741, %v2574, 0
        %v2594 = vsel %vm741, %v2575, 0
        %v2597 = vsel %vm741, %v2576, 0
        %v2600 = vsel %vm741, %v2577, 0
        %v2603 = vsel %vm741, %v2578, 0
        %v2606 = vsel %vm741, %v2579, 0
        %v2609 = vsel %vm741, %v2580, 0
        %v2612 = vsel %vm741, %v2581, 0
        %v2615 = vsel %vm741, %v2582, 0
        %v2618 = vsel %vm741, %v2583, 0
        %v2621 = vsel %vm741, %v2584, 0
        %v2624 = vsel %vm741, %v2585, 0
        %v2627 = vsel %vm741, %v2586, 0
        %v2630 = vsel %vm741, %v2587, 0
        %v2633 = vsel %vm741, %v2588, 0
        %v2636 = vsel %vm741, %v2589, 0
        %v2639 = vsel %vm790, %v2476, 0
        %2641 = vmatpush.bf16.msra.mxu0 0
        %2642 = vmatpush.bf16.msra.mxu0 0
        %2643 = vmatpush.bf16.msra.mxu0 0
        %2644 = vmatpush.bf16.msra.mxu0 0
        %2645 = vmatpush.bf16.msra.mxu0 0
        %2646 = vmatpush.bf16.msra.mxu0 %v2639
        %2647 = vmatpush.bf16.msra.mxu0 %v2475
        %2648 = vmatpush.bf16.msra.mxu0 %v2474
        %2649 = vmatmul.bf16.gmra.mxu0 %v2591
        %v2650 = vpop.f32.mrf.mxu0
        %v2651 = vadd.f32 0.0, %v2650
        %v2652 = vpop.f32.mrf.mxu0
        %v2653 = vadd.f32 0.0, %v2652
        %2654 = vmatmul.bf16.gmra.mxu0 %v2594
        %v2655 = vpop.f32.mrf.mxu0
        %v2656 = vadd.f32 0.0, %v2655
        %v2657 = vpop.f32.mrf.mxu0
        %v2658 = vadd.f32 0.0, %v2657
        %2659 = vmatmul.bf16.gmra.mxu0 %v2597
        %v2660 = vpop.f32.mrf.mxu0
        %v2661 = vadd.f32 0.0, %v2660
        %v2662 = vpop.f32.mrf.mxu0
        %v2663 = vadd.f32 0.0, %v2662
        %2664 = vmatmul.bf16.gmra.mxu0 %v2600
        %v2665 = vpop.f32.mrf.mxu0
        %v2666 = vadd.f32 0.0, %v2665
        %v2667 = vpop.f32.mrf.mxu0
        %v2668 = vadd.f32 0.0, %v2667
        %2669 = vmatmul.bf16.gmra.mxu0 %v2603
        %v2670 = vpop.f32.mrf.mxu0
        %v2671 = vadd.f32 0.0, %v2670
        %v2672 = vpop.f32.mrf.mxu0
        %v2673 = vadd.f32 0.0, %v2672
        %2674 = vmatmul.bf16.gmra.mxu0 %v2606
        %v2675 = vpop.f32.mrf.mxu0
        %v2676 = vadd.f32 0.0, %v2675
        %v2677 = vpop.f32.mrf.mxu0
        %v2678 = vadd.f32 0.0, %v2677
        %2679 = vmatmul.bf16.gmra.mxu0 %v2609
        %v2680 = vpop.f32.mrf.mxu0
        %v2681 = vadd.f32 0.0, %v2680
        %v2682 = vpop.f32.mrf.mxu0
        %v2683 = vadd.f32 0.0, %v2682
        %2684 = vmatmul.bf16.gmra.mxu0 %v2612
        %v2685 = vpop.f32.mrf.mxu0
        %v2686 = vadd.f32 0.0, %v2685
        %v2687 = vpop.f32.mrf.mxu0
        %v2688 = vadd.f32 0.0, %v2687
        %2689 = vmatmul.bf16.gmra.mxu0 %v2615
        %v2690 = vpop.f32.mrf.mxu0
        %v2691 = vadd.f32 0.0, %v2690
        %v2692 = vpop.f32.mrf.mxu0
        %v2693 = vadd.f32 0.0, %v2692
        %2694 = vmatmul.bf16.gmra.mxu0 %v2618
        %v2695 = vpop.f32.mrf.mxu0
        %v2696 = vadd.f32 0.0, %v2695
        %v2697 = vpop.f32.mrf.mxu0
        %v2698 = vadd.f32 0.0, %v2697
        %2699 = vmatmul.bf16.gmra.mxu0 %v2621
        %v2700 = vpop.f32.mrf.mxu0
        %v2701 = vadd.f32 0.0, %v2700
        %v2702 = vpop.f32.mrf.mxu0
        %v2703 = vadd.f32 0.0, %v2702
        %2704 = vmatmul.bf16.gmra.mxu0 %v2624
        %v2705 = vpop.f32.mrf.mxu0
        %v2706 = vadd.f32 0.0, %v2705
        %v2707 = vpop.f32.mrf.mxu0
        %v2708 = vadd.f32 0.0, %v2707
        %2709 = vmatmul.bf16.gmra.mxu0 %v2627
        %v2710 = vpop.f32.mrf.mxu0
        %v2711 = vadd.f32 0.0, %v2710
        %v2712 = vpop.f32.mrf.mxu0
        %v2713 = vadd.f32 0.0, %v2712
        %2714 = vmatmul.bf16.gmra.mxu0 %v2630
        %v2715 = vpop.f32.mrf.mxu0
        %v2716 = vadd.f32 0.0, %v2715
        %v2717 = vpop.f32.mrf.mxu0
        %v2718 = vadd.f32 0.0, %v2717
        %2719 = vmatmul.bf16.gmra.mxu0 %v2633
        %v2720 = vpop.f32.mrf.mxu0
        %v2721 = vadd.f32 0.0, %v2720
        %v2722 = vpop.f32.mrf.mxu0
        %v2723 = vadd.f32 0.0, %v2722
        %2724 = vmatmul.bf16.gmra.mxu0 %v2636
        %v2725 = vpop.f32.mrf.mxu0
        %v2726 = vadd.f32 0.0, %v2725
        %v2727 = vpop.f32.mrf.mxu0
        %v2728 = vadd.f32 0.0, %v2727
        %2729 = vdwg.mxu0
        %v2730 = vpack.c.bf16 %v2651, %v2651
        %v2731 = vpack.c.bf16 %v2653, %v2653
        %v2732 = vpack.c.bf16 %v2656, %v2656
        %v2733 = vpack.c.bf16 %v2658, %v2658
        %v2734 = vpack.c.bf16 %v2661, %v2661
        %v2735 = vpack.c.bf16 %v2663, %v2663
        %v2736 = vpack.c.bf16 %v2666, %v2666
        %v2737 = vpack.c.bf16 %v2668, %v2668
        %v2738 = vpack.c.bf16 %v2671, %v2671
        %v2739 = vpack.c.bf16 %v2673, %v2673
        %v2740 = vpack.c.bf16 %v2676, %v2676
        %v2741 = vpack.c.bf16 %v2678, %v2678
        %v2742 = vpack.c.bf16 %v2681, %v2681
        %v2743 = vpack.c.bf16 %v2683, %v2683
        %v2744 = vpack.c.bf16 %v2686, %v2686
        %v2745 = vpack.c.bf16 %v2688, %v2688
        %v2746 = vpack.c.bf16 %v2691, %v2691
        %v2747 = vpack.c.bf16 %v2693, %v2693
        %v2748 = vpack.c.bf16 %v2696, %v2696
        %v2749 = vpack.c.bf16 %v2698, %v2698
        %v2750 = vpack.c.bf16 %v2701, %v2701
        %v2751 = vpack.c.bf16 %v2703, %v2703
        %v2752 = vpack.c.bf16 %v2706, %v2706
        %v2753 = vpack.c.bf16 %v2708, %v2708
        %v2754 = vpack.c.bf16 %v2711, %v2711
        %v2755 = vpack.c.bf16 %v2713, %v2713
        %v2756 = vpack.c.bf16 %v2716, %v2716
        %v2757 = vpack.c.bf16 %v2718, %v2718
        %v2758 = vpack.c.bf16 %v2721, %v2721
        %v2759 = vpack.c.bf16 %v2723, %v2723
        %v2760 = vpack.c.bf16 %v2726, %v2726
        %v2761 = vpack.c.bf16 %v2728, %v2728
        %v2763 = vshrl.u32 %v2730, 16
        %v2765 = vrot.slane %v2763, 7
        %v2766 = vshll.u32 %v2730, 16
        %v2768 = vor.u32 %v2765, %v2766
        %v2769 = vrot.slane %v2765, 4
        %v2771 = vshrl.u32 %v2731, 16
        %v2773 = vrot.slane %v2771, 7
        %v2774 = vshll.u32 %v2731, 16
        %v2776 = vor.u32 %v2773, %v2774
        %v2777 = vsel %vm917, %v2769, %v2776
        %v2778 = vrot.slane %v2773, 4
        %v2780 = vshrl.u32 %v2732, 16
        %v2782 = vrot.slane %v2780, 7
        %v2783 = vshll.u32 %v2732, 16
        %v2785 = vor.u32 %v2782, %v2783
        %v2786 = vrot.slane %v2782, 4
        %v2788 = vshrl.u32 %v2733, 16
        %v2790 = vrot.slane %v2788, 7
        %v2791 = vshll.u32 %v2733, 16
        %v2793 = vor.u32 %v2790, %v2791
        %v2794 = vsel %vm917, %v2786, %v2793
        %v2795 = vrot.slane %v2790, 4
        %v2797 = vshrl.u32 %v2734, 16
        %v2799 = vrot.slane %v2797, 7
        %v2800 = vshll.u32 %v2734, 16
        %v2802 = vor.u32 %v2799, %v2800
        %v2803 = vrot.slane %v2799, 4
        %v2805 = vshrl.u32 %v2735, 16
        %v2807 = vrot.slane %v2805, 7
        %v2808 = vshll.u32 %v2735, 16
        %v2810 = vor.u32 %v2807, %v2808
        %v2811 = vsel %vm917, %v2803, %v2810
        %v2812 = vrot.slane %v2807, 4
        %v2814 = vshrl.u32 %v2736, 16
        %v2816 = vrot.slane %v2814, 7
        %v2817 = vshll.u32 %v2736, 16
        %v2819 = vor.u32 %v2816, %v2817
        %v2820 = vrot.slane %v2816, 4
        %v2822 = vshrl.u32 %v2737, 16
        %v2824 = vrot.slane %v2822, 7
        %v2825 = vshll.u32 %v2737, 16
        %v2827 = vor.u32 %v2824, %v2825
        %v2828 = vsel %vm917, %v2820, %v2827
        %v2829 = vrot.slane %v2824, 4
        %v2831 = vshrl.u32 %v2738, 16
        %v2833 = vrot.slane %v2831, 7
        %v2834 = vshll.u32 %v2738, 16
        %v2836 = vor.u32 %v2833, %v2834
        %v2837 = vrot.slane %v2833, 4
        %v2839 = vshrl.u32 %v2739, 16
        %v2841 = vrot.slane %v2839, 7
        %v2842 = vshll.u32 %v2739, 16
        %v2844 = vor.u32 %v2841, %v2842
        %v2845 = vsel %vm917, %v2837, %v2844
        %v2846 = vrot.slane %v2841, 4
        %v2848 = vshrl.u32 %v2740, 16
        %v2850 = vrot.slane %v2848, 7
        %v2851 = vshll.u32 %v2740, 16
        %v2853 = vor.u32 %v2850, %v2851
        %v2854 = vrot.slane %v2850, 4
        %v2856 = vshrl.u32 %v2741, 16
        %v2858 = vrot.slane %v2856, 7
        %v2859 = vshll.u32 %v2741, 16
        %v2861 = vor.u32 %v2858, %v2859
        %v2862 = vsel %vm917, %v2854, %v2861
        %v2863 = vrot.slane %v2858, 4
        %v2865 = vshrl.u32 %v2742, 16
        %v2867 = vrot.slane %v2865, 7
        %v2868 = vshll.u32 %v2742, 16
        %v2870 = vor.u32 %v2867, %v2868
        %v2871 = vrot.slane %v2867, 4
        %v2873 = vshrl.u32 %v2743, 16
        %v2875 = vrot.slane %v2873, 7
        %v2876 = vshll.u32 %v2743, 16
        %v2878 = vor.u32 %v2875, %v2876
        %v2879 = vsel %vm917, %v2871, %v2878
        %v2880 = vrot.slane %v2875, 4
        %v2882 = vshrl.u32 %v2744, 16
        %v2884 = vrot.slane %v2882, 7
        %v2885 = vshll.u32 %v2744, 16
        %v2887 = vor.u32 %v2884, %v2885
        %v2888 = vrot.slane %v2884, 4
        %v2890 = vshrl.u32 %v2745, 16
        %v2892 = vrot.slane %v2890, 7
        %v2893 = vshll.u32 %v2745, 16
        %v2895 = vor.u32 %v2892, %v2893
        %v2896 = vsel %vm917, %v2888, %v2895
        %v2897 = vrot.slane %v2892, 4
        %v2899 = vshrl.u32 %v2746, 16
        %v2901 = vrot.slane %v2899, 7
        %v2902 = vshll.u32 %v2746, 16
        %v2904 = vor.u32 %v2901, %v2902
        %v2905 = vrot.slane %v2901, 4
        %v2907 = vshrl.u32 %v2747, 16
        %v2909 = vrot.slane %v2907, 7
        %v2910 = vshll.u32 %v2747, 16
        %v2912 = vor.u32 %v2909, %v2910
        %v2913 = vsel %vm917, %v2905, %v2912
        %v2914 = vrot.slane %v2909, 4
        %v2916 = vshrl.u32 %v2748, 16
        %v2918 = vrot.slane %v2916, 7
        %v2919 = vshll.u32 %v2748, 16
        %v2921 = vor.u32 %v2918, %v2919
        %v2922 = vrot.slane %v2918, 4
        %v2924 = vshrl.u32 %v2749, 16
        %v2926 = vrot.slane %v2924, 7
        %v2927 = vshll.u32 %v2749, 16
        %v2929 = vor.u32 %v2926, %v2927
        %v2930 = vsel %vm917, %v2922, %v2929
        %v2931 = vrot.slane %v2926, 4
        %v2933 = vshrl.u32 %v2750, 16
        %v2935 = vrot.slane %v2933, 7
        %v2936 = vshll.u32 %v2750, 16
        %v2938 = vor.u32 %v2935, %v2936
        %v2939 = vrot.slane %v2935, 4
        %v2941 = vshrl.u32 %v2751, 16
        %v2943 = vrot.slane %v2941, 7
        %v2944 = vshll.u32 %v2751, 16
        %v2946 = vor.u32 %v2943, %v2944
        %v2947 = vsel %vm917, %v2939, %v2946
        %v2948 = vrot.slane %v2943, 4
        %v2950 = vshrl.u32 %v2752, 16
        %v2952 = vrot.slane %v2950, 7
        %v2953 = vshll.u32 %v2752, 16
        %v2955 = vor.u32 %v2952, %v2953
        %v2956 = vrot.slane %v2952, 4
        %v2958 = vshrl.u32 %v2753, 16
        %v2960 = vrot.slane %v2958, 7
        %v2961 = vshll.u32 %v2753, 16
        %v2963 = vor.u32 %v2960, %v2961
        %v2964 = vsel %vm917, %v2956, %v2963
        %v2965 = vrot.slane %v2960, 4
        %v2967 = vshrl.u32 %v2754, 16
        %v2969 = vrot.slane %v2967, 7
        %v2970 = vshll.u32 %v2754, 16
        %v2972 = vor.u32 %v2969, %v2970
        %v2973 = vrot.slane %v2969, 4
        %v2975 = vshrl.u32 %v2755, 16
        %v2977 = vrot.slane %v2975, 7
        %v2978 = vshll.u32 %v2755, 16
        %v2980 = vor.u32 %v2977, %v2978
        %v2981 = vsel %vm917, %v2973, %v2980
        %v2982 = vrot.slane %v2977, 4
        %v2984 = vshrl.u32 %v2756, 16
        %v2986 = vrot.slane %v2984, 7
        %v2987 = vshll.u32 %v2756, 16
        %v2989 = vor.u32 %v2986, %v2987
        %v2990 = vrot.slane %v2986, 4
        %v2992 = vshrl.u32 %v2757, 16
        %v2994 = vrot.slane %v2992, 7
        %v2995 = vshll.u32 %v2757, 16
        %v2997 = vor.u32 %v2994, %v2995
        %v2998 = vsel %vm917, %v2990, %v2997
        %v2999 = vrot.slane %v2994, 4
        %v3001 = vshrl.u32 %v2758, 16
        %v3003 = vrot.slane %v3001, 7
        %v3004 = vshll.u32 %v2758, 16
        %v3006 = vor.u32 %v3003, %v3004
        %v3007 = vrot.slane %v3003, 4
        %v3009 = vshrl.u32 %v2759, 16
        %v3011 = vrot.slane %v3009, 7
        %v3012 = vshll.u32 %v2759, 16
        %v3014 = vor.u32 %v3011, %v3012
        %v3015 = vsel %vm917, %v3007, %v3014
        %v3016 = vrot.slane %v3011, 4
        %v3018 = vshrl.u32 %v2760, 16
        %v3020 = vrot.slane %v3018, 7
        %v3021 = vshll.u32 %v2760, 16
        %v3023 = vor.u32 %v3020, %v3021
        %v3024 = vrot.slane %v3020, 4
        %v3026 = vshrl.u32 %v2761, 16
        %v3028 = vrot.slane %v3026, 7
        %v3029 = vshll.u32 %v2761, 16
        %v3031 = vor.u32 %v3028, %v3029
        %v3032 = vsel %vm917, %v3024, %v3031
        %v3033 = vrot.slane %v3028, 4
        %3034 = vrot.lane.b32.xlu0 %v2768, 16
        %v3035 = vpop.permute.xlu0 %3034
        %3036 = vrot.lane.b32.xlu0 %v2777, 16
        %v3037 = vpop.permute.xlu0 %3036
        %3038 = vrot.lane.b32.xlu0 %v2778, 16
        %v3039 = vpop.permute.xlu0 %3038
        %3040 = vrot.lane.b32.xlu0 %v2785, 16
        %v3041 = vpop.permute.xlu0 %3040
        %3042 = vrot.lane.b32.xlu0 %v2794, 16
        %v3043 = vpop.permute.xlu0 %3042
        %3044 = vrot.lane.b32.xlu0 %v2795, 16
        %v3045 = vpop.permute.xlu0 %3044
        %3046 = vrot.lane.b32.xlu0 %v2802, 16
        %v3047 = vpop.permute.xlu0 %3046
        %3048 = vrot.lane.b32.xlu0 %v2811, 16
        %v3049 = vpop.permute.xlu0 %3048
        %3050 = vrot.lane.b32.xlu0 %v2812, 16
        %v3051 = vpop.permute.xlu0 %3050
        %3052 = vrot.lane.b32.xlu0 %v2819, 16
        %v3053 = vpop.permute.xlu0 %3052
        %3054 = vrot.lane.b32.xlu0 %v2828, 16
        %v3055 = vpop.permute.xlu0 %3054
        %3056 = vrot.lane.b32.xlu0 %v2829, 16
        %v3057 = vpop.permute.xlu0 %3056
        %3058 = vrot.lane.b32.xlu0 %v2836, 16
        %v3059 = vpop.permute.xlu0 %3058
        %3060 = vrot.lane.b32.xlu0 %v2845, 16
        %v3061 = vpop.permute.xlu0 %3060
        %3062 = vrot.lane.b32.xlu0 %v2846, 16
        %v3063 = vpop.permute.xlu0 %3062
        %3064 = vrot.lane.b32.xlu0 %v2853, 16
        %v3065 = vpop.permute.xlu0 %3064
        %3066 = vrot.lane.b32.xlu0 %v2862, 16
        %v3067 = vpop.permute.xlu0 %3066
        %3068 = vrot.lane.b32.xlu0 %v2863, 16
        %v3069 = vpop.permute.xlu0 %3068
        %3070 = vrot.lane.b32.xlu0 %v2870, 16
        %v3071 = vpop.permute.xlu0 %3070
        %3072 = vrot.lane.b32.xlu0 %v2879, 16
        %v3073 = vpop.permute.xlu0 %3072
        %3074 = vrot.lane.b32.xlu0 %v2880, 16
        %v3075 = vpop.permute.xlu0 %3074
        %3076 = vrot.lane.b32.xlu0 %v2887, 16
        %v3077 = vpop.permute.xlu0 %3076
        %3078 = vrot.lane.b32.xlu0 %v2896, 16
        %v3079 = vpop.permute.xlu0 %3078
        %3080 = vrot.lane.b32.xlu0 %v2897, 16
        %v3081 = vpop.permute.xlu0 %3080
        %3082 = vrot.lane.b32.xlu0 %v2904, 16
        %v3083 = vpop.permute.xlu0 %3082
        %3084 = vrot.lane.b32.xlu0 %v2913, 16
        %v3085 = vpop.permute.xlu0 %3084
        %3086 = vrot.lane.b32.xlu0 %v2914, 16
        %v3087 = vpop.permute.xlu0 %3086
        %3088 = vrot.lane.b32.xlu0 %v2921, 16
        %v3089 = vpop.permute.xlu0 %3088
        %3090 = vrot.lane.b32.xlu0 %v2930, 16
        %v3091 = vpop.permute.xlu0 %3090
        %3092 = vrot.lane.b32.xlu0 %v2931, 16
        %v3093 = vpop.permute.xlu0 %3092
        %3094 = vrot.lane.b32.xlu0 %v2938, 16
        %v3095 = vpop.permute.xlu0 %3094
        %3096 = vrot.lane.b32.xlu0 %v2947, 16
        %v3097 = vpop.permute.xlu0 %3096
        %3098 = vrot.lane.b32.xlu0 %v2948, 16
        %v3099 = vpop.permute.xlu0 %3098
        %3100 = vrot.lane.b32.xlu0 %v2955, 16
        %v3101 = vpop.permute.xlu0 %3100
        %3102 = vrot.lane.b32.xlu0 %v2964, 16
        %v3103 = vpop.permute.xlu0 %3102
        %3104 = vrot.lane.b32.xlu0 %v2965, 16
        %v3105 = vpop.permute.xlu0 %3104
        %3106 = vrot.lane.b32.xlu0 %v2972, 16
        %v3107 = vpop.permute.xlu0 %3106
        %3108 = vrot.lane.b32.xlu0 %v2981, 16
        %v3109 = vpop.permute.xlu0 %3108
        %3110 = vrot.lane.b32.xlu0 %v2982, 16
        %v3111 = vpop.permute.xlu0 %3110
        %3112 = vrot.lane.b32.xlu0 %v2989, 16
        %v3113 = vpop.permute.xlu0 %3112
        %3114 = vrot.lane.b32.xlu0 %v2998, 16
        %v3115 = vpop.permute.xlu0 %3114
        %3116 = vrot.lane.b32.xlu0 %v2999, 16
        %v3117 = vpop.permute.xlu0 %3116
        %3118 = vrot.lane.b32.xlu0 %v3006, 16
        %v3119 = vpop.permute.xlu0 %3118
        %3120 = vrot.lane.b32.xlu0 %v3015, 16
        %v3121 = vpop.permute.xlu0 %3120
        %3122 = vrot.lane.b32.xlu0 %v3016, 16
        %v3123 = vpop.permute.xlu0 %3122
        %3124 = vrot.lane.b32.xlu0 %v3023, 16
        %v3125 = vpop.permute.xlu0 %3124
        %3126 = vrot.lane.b32.xlu0 %v3032, 16
        %v3127 = vpop.permute.xlu0 %3126
        %3128 = vrot.lane.b32.xlu0 %v3033, 16
        %v3129 = vpop.permute.xlu0 %3128
        %vm3178 = vcmask 191616
        %vm3179 = vmand %vm3178, %vm1240
        %v3180 = vld [vmem:[%s1238] sm:$0xf]
        %v3181 = vsel %vm3179, %v3035, %v3180
        %3182 = vst [vmem:[%s1238] sm:$0xf] %v3181
        %vm3183 = vcmask 191616
        %3184 = vst.msk [vmem:[%s1238 + $0x4] sm:$0xf] %vm3183, %v3037
        %vm3185 = vcmask 188544
        %vm3186 = vmand %vm3185, %vm915
        %v3187 = vld [vmem:[%s1238 + $0x8] sm:$0x1]
        %v3188 = vsel %vm3186, %v3039, %v3187
        %3189 = vst [vmem:[%s1238 + $0x8] sm:$0x1] %v3188
        %v3190 = vld [vmem:[%s1238 + $0xc] sm:$0xf]
        %v3191 = vsel %vm3179, %v3041, %v3190
        %3192 = vst [vmem:[%s1238 + $0xc] sm:$0xf] %v3191
        %3193 = vst.msk [vmem:[%s1238 + $0x10] sm:$0xf] %vm3183, %v3043
        %v3194 = vld [vmem:[%s1238 + $0x14] sm:$0x1]
        %v3195 = vsel %vm3186, %v3045, %v3194
        %3196 = vst [vmem:[%s1238 + $0x14] sm:$0x1] %v3195
        %v3197 = vld [vmem:[%s1238 + $0x18] sm:$0xf]
        %v3198 = vsel %vm3179, %v3047, %v3197
        %3199 = vst [vmem:[%s1238 + $0x18] sm:$0xf] %v3198
        %3200 = vst.msk [vmem:[%s1238 + $0x1c] sm:$0xf] %vm3183, %v3049
        %v3201 = vld [vmem:[%s1238 + $0x20] sm:$0x1]
        %v3202 = vsel %vm3186, %v3051, %v3201
        %3203 = vst [vmem:[%s1238 + $0x20] sm:$0x1] %v3202
        %v3204 = vld [vmem:[%s1238 + $0x24] sm:$0xf]
        %v3205 = vsel %vm3179, %v3053, %v3204
        %3206 = vst [vmem:[%s1238 + $0x24] sm:$0xf] %v3205
        %3207 = vst.msk [vmem:[%s1238 + $0x28] sm:$0xf] %vm3183, %v3055
        %v3208 = vld [vmem:[%s1238 + $0x2c] sm:$0x1]
        %v3209 = vsel %vm3186, %v3057, %v3208
        %3210 = vst [vmem:[%s1238 + $0x2c] sm:$0x1] %v3209
        %v3211 = vld [vmem:[%s1238 + $0x30] sm:$0xf]
        %v3212 = vsel %vm3179, %v3059, %v3211
        %3213 = vst [vmem:[%s1238 + $0x30] sm:$0xf] %v3212
        %3214 = vst.msk [vmem:[%s1238 + $0x34] sm:$0xf] %vm3183, %v3061
        %v3215 = vld [vmem:[%s1238 + $0x38] sm:$0x1]
        %v3216 = vsel %vm3186, %v3063, %v3215
        %3217 = vst [vmem:[%s1238 + $0x38] sm:$0x1] %v3216
        %v3218 = vld [vmem:[%s1238 + $0x3c] sm:$0xf]
        %v3219 = vsel %vm3179, %v3065, %v3218
        %3220 = vst [vmem:[%s1238 + $0x3c] sm:$0xf] %v3219
        %3221 = vst.msk [vmem:[%s1238 + $0x40] sm:$0xf] %vm3183, %v3067
        %v3222 = vld [vmem:[%s1238 + $0x44] sm:$0x1]
        %v3223 = vsel %vm3186, %v3069, %v3222
        %3224 = vst [vmem:[%s1238 + $0x44] sm:$0x1] %v3223
        %v3225 = vld [vmem:[%s1238 + $0x48] sm:$0xf]
        %v3226 = vsel %vm3179, %v3071, %v3225
        %3227 = vst [vmem:[%s1238 + $0x48] sm:$0xf] %v3226
        %3228 = vst.msk [vmem:[%s1238 + $0x4c] sm:$0xf] %vm3183, %v3073
        %v3229 = vld [vmem:[%s1238 + $0x50] sm:$0x1]
        %v3230 = vsel %vm3186, %v3075, %v3229
        %3231 = vst [vmem:[%s1238 + $0x50] sm:$0x1] %v3230
        %v3232 = vld [vmem:[%s1238 + $0x54] sm:$0xf]
        %v3233 = vsel %vm3179, %v3077, %v3232
        %3234 = vst [vmem:[%s1238 + $0x54] sm:$0xf] %v3233
        %3235 = vst.msk [vmem:[%s1238 + $0x58] sm:$0xf] %vm3183, %v3079
        %v3236 = vld [vmem:[%s1238 + $0x5c] sm:$0x1]
        %v3237 = vsel %vm3186, %v3081, %v3236
        %3238 = vst [vmem:[%s1238 + $0x5c] sm:$0x1] %v3237
        %v3239 = vld [vmem:[%s1238 + $0x60] sm:$0xf]
        %v3240 = vsel %vm3179, %v3083, %v3239
        %3241 = vst [vmem:[%s1238 + $0x60] sm:$0xf] %v3240
        %3242 = vst.msk [vmem:[%s1238 + $0x64] sm:$0xf] %vm3183, %v3085
        %v3243 = vld [vmem:[%s1238 + $0x68] sm:$0x1]
        %v3244 = vsel %vm3186, %v3087, %v3243
        %3245 = vst [vmem:[%s1238 + $0x68] sm:$0x1] %v3244
        %v3246 = vld [vmem:[%s1238 + $0x6c] sm:$0xf]
        %v3247 = vsel %vm3179, %v3089, %v3246
        %3248 = vst [vmem:[%s1238 + $0x6c] sm:$0xf] %v3247
        %3249 = vst.msk [vmem:[%s1238 + $0x70] sm:$0xf] %vm3183, %v3091
        %v3250 = vld [vmem:[%s1238 + $0x74] sm:$0x1]
        %v3251 = vsel %vm3186, %v3093, %v3250
        %3252 = vst [vmem:[%s1238 + $0x74] sm:$0x1] %v3251
        %v3253 = vld [vmem:[%s1238 + $0x78] sm:$0xf]
        %v3254 = vsel %vm3179, %v3095, %v3253
        %3255 = vst [vmem:[%s1238 + $0x78] sm:$0xf] %v3254
        %3256 = vst.msk [vmem:[%s1238 + $0x7c] sm:$0xf] %vm3183, %v3097
        %v3257 = vld [vmem:[%s1238 + $0x80] sm:$0x1]
        %v3258 = vsel %vm3186, %v3099, %v3257
        %3259 = vst [vmem:[%s1238 + $0x80] sm:$0x1] %v3258
        %v3260 = vld [vmem:[%s1238 + $0x84] sm:$0xf]
        %v3261 = vsel %vm3179, %v3101, %v3260
        %3262 = vst [vmem:[%s1238 + $0x84] sm:$0xf] %v3261
        %3263 = vst.msk [vmem:[%s1238 + $0x88] sm:$0xf] %vm3183, %v3103
        %v3264 = vld [vmem:[%s1238 + $0x8c] sm:$0x1]
        %v3265 = vsel %vm3186, %v3105, %v3264
        %3266 = vst [vmem:[%s1238 + $0x8c] sm:$0x1] %v3265
        %v3267 = vld [vmem:[%s1238 + $0x90] sm:$0xf]
        %v3268 = vsel %vm3179, %v3107, %v3267
        %3269 = vst [vmem:[%s1238 + $0x90] sm:$0xf] %v3268
        %3270 = vst.msk [vmem:[%s1238 + $0x94] sm:$0xf] %vm3183, %v3109
        %v3271 = vld [vmem:[%s1238 + $0x98] sm:$0x1]
        %v3272 = vsel %vm3186, %v3111, %v3271
        %3273 = vst [vmem:[%s1238 + $0x98] sm:$0x1] %v3272
        %v3274 = vld [vmem:[%s1238 + $0x9c] sm:$0xf]
        %v3275 = vsel %vm3179, %v3113, %v3274
        %3276 = vst [vmem:[%s1238 + $0x9c] sm:$0xf] %v3275
        %3277 = vst.msk [vmem:[%s1238 + $0xa0] sm:$0xf] %vm3183, %v3115
        %v3278 = vld [vmem:[%s1238 + $0xa4] sm:$0x1]
        %v3279 = vsel %vm3186, %v3117, %v3278
        %3280 = vst [vmem:[%s1238 + $0xa4] sm:$0x1] %v3279
        %v3281 = vld [vmem:[%s1238 + $0xa8] sm:$0xf]
        %v3282 = vsel %vm3179, %v3119, %v3281
        %3283 = vst [vmem:[%s1238 + $0xa8] sm:$0xf] %v3282
        %3284 = vst.msk [vmem:[%s1238 + $0xac] sm:$0xf] %vm3183, %v3121
        %v3285 = vld [vmem:[%s1238 + $0xb0] sm:$0x1]
        %v3286 = vsel %vm3186, %v3123, %v3285
        %3287 = vst [vmem:[%s1238 + $0xb0] sm:$0x1] %v3286
        %v3288 = vld [vmem:[%s1238 + $0xb4] sm:$0xf]
        %v3289 = vsel %vm3179, %v3125, %v3288
        %3290 = vst [vmem:[%s1238 + $0xb4] sm:$0xf] %v3289
        %3291 = vst.msk [vmem:[%s1238 + $0xb8] sm:$0xf] %vm3183, %v3127
        %v3292 = vld [vmem:[%s1238 + $0xbc] sm:$0x1]
        %v3293 = vsel %vm3186, %v3129, %v3292
        %3294 = vst [vmem:[%s1238 + $0xbc] sm:$0x1] %v3293
        %s3295 = scalar_lea.vmem %s3, 192
        %v3296 = vld [vmem:[%s3295] sm:$0xf]
        %v3297 = vld [vmem:[%s3295 + $0x4] sm:$0xf]
        %v3298 = vld [vmem:[%s3295 + $0x8] sm:$0xf]
        %v3299 = vld [vmem:[%s3295 + $0xc] sm:$0xf]
        %v3300 = vld [vmem:[%s3295 + $0x10] sm:$0xf]
        %v3301 = vld [vmem:[%s3295 + $0x14] sm:$0xf]
        %v3302 = vld [vmem:[%s3295 + $0x18] sm:$0xf]
        %v3303 = vld [vmem:[%s3295 + $0x1c] sm:$0xf]
        %v3304 = vld [vmem:[%s3295 + $0x20] sm:$0xf]
        %v3305 = vld [vmem:[%s3295 + $0x24] sm:$0xf]
        %v3306 = vld [vmem:[%s3295 + $0x28] sm:$0xf]
        %v3307 = vld [vmem:[%s3295 + $0x2c] sm:$0xf]
        %v3308 = vld [vmem:[%s3295 + $0x30] sm:$0xf]
        %v3309 = vld [vmem:[%s3295 + $0x34] sm:$0xf]
        %v3310 = vld [vmem:[%s3295 + $0x38] sm:$0xf]
        %v3311 = vld [vmem:[%s3295 + $0x3c] sm:$0xf]
        %v3313 = vunpack.c.l.b16 %v489
        %v3314 = vpack.c.b16 %v513, %v512
        %v3315 = vpack.c.b16 %v515, %v514
        %v3316 = vpack.c.b16 %v3313, %v2346
        %vm3317 = vcmask 1044480
        %v3318 = vrot.slane %v3314, 3
        %v3319 = vrot.slane %v3315, 3
        %v3320 = vsel %vm3317, %v3318, %v3319
        %v3321 = vrot.slane %v3316, 3
        %v3322 = vsel %vm3317, %v3319, %v3321
        %v3342 = vunpack.c.l.b16 %v3296
        %v3343 = vunpack.c.l.b16 %v3297
        %v3344 = vunpack.c.l.b16 %v3298
        %v3345 = vunpack.c.l.b16 %v3299
        %v3346 = vunpack.c.l.b16 %v3300
        %v3347 = vunpack.c.l.b16 %v3301
        %v3348 = vunpack.c.l.b16 %v3302
        %v3349 = vunpack.c.l.b16 %v3303
        %v3350 = vunpack.c.l.b16 %v3304
        %v3351 = vunpack.c.l.b16 %v3305
        %v3352 = vunpack.c.l.b16 %v3306
        %v3353 = vunpack.c.l.b16 %v3307
        %v3354 = vunpack.c.l.b16 %v3308
        %v3355 = vunpack.c.l.b16 %v3309
        %v3356 = vunpack.c.l.b16 %v3310
        %v3357 = vunpack.c.l.b16 %v3311
        %v3358 = vpack.c.b16 %v3343, %v3342
        %v3359 = vpack.c.b16 %v3345, %v3344
        %v3360 = vpack.c.b16 %v3347, %v3346
        %v3361 = vpack.c.b16 %v3349, %v3348
        %v3362 = vpack.c.b16 %v3351, %v3350
        %v3363 = vpack.c.b16 %v3353, %v3352
        %v3364 = vpack.c.b16 %v3355, %v3354
        %v3365 = vpack.c.b16 %v3357, %v3356
        %3374 = vmatpush.bf16.msra.mxu0 %v3365
        %3375 = vmatpush.bf16.msra.mxu0 %v3364
        %3376 = vmatpush.bf16.msra.mxu0 %v3363
        %3377 = vmatpush.bf16.msra.mxu0 %v3362
        %3378 = vmatpush.bf16.msra.mxu0 %v3361
        %3379 = vmatpush.bf16.msra.mxu0 %v3360
        %3380 = vmatpush.bf16.msra.mxu0 %v3359
        %3381 = vmatpush.bf16.msra.mxu0 %v3358
        %3382 = vmatmul.bf16.gmra.mxu0 %v3320
        %v3383 = vpop.f32.mrf.mxu0
        %v3384 = vadd.f32 0.0, %v3383
        %v3385 = vpop.f32.mrf.mxu0
        %v3386 = vadd.f32 0.0, %v3385
        %3387 = vmatmul.bf16.gmra.mxu0 %v3322
        %v3388 = vpop.f32.mrf.mxu0
        %v3389 = vadd.f32 0.0, %v3388
        %v3390 = vpop.f32.mrf.mxu0
        %v3391 = vadd.f32 0.0, %v3390
        %3392 = vmatmul.bf16.gmra.mxu0 %v3321
        %v3393 = vpop.f32.mrf.mxu0
        %v3394 = vadd.f32 0.0, %v3393
        %v3395 = vpop.f32.mrf.mxu0
        %3396 = vdwg.mxu0
        %s3397 = scalar_lea.vmem %s4, 3
        %v3398 = vld [vmem:[%s3397] sm:$0x1]
        %v3400 = vperm.slane %v3398, 0
        %v3402 = vmul.f32 %v3384, %v3400
        %v3403 = vmul.f32 %v3386, %v3400
        %v3404 = vmul.f32 %v3389, %v3400
        %v3405 = vmul.f32 %v3391, %v3400
        %v3406 = vmul.f32 %v3394, %v3400
        %s3407 = scalar_lea.vmem %s5, 3
        %v3408 = vld [vmem:[%s3407] sm:$0x1]
        %v3410 = vperm.slane %v3408, 0
        %v3412 = vadd.f32 %v3402, %v3410
        %v3413 = vadd.f32 %v3403, %v3410
        %v3414 = vadd.f32 %v3404, %v3410
        %v3415 = vadd.f32 %v3405, %v3410
        %v3416 = vadd.f32 %v3406, %v3410
        %vm3417 = vcmp.gt.f32.partialorder %v3412, 0.0
        %vm3418 = vcmp.gt.f32.partialorder %v3413, 0.0
        %vm3419 = vcmp.gt.f32.partialorder %v3414, 0.0
        %vm3420 = vcmp.gt.f32.partialorder %v3415, 0.0
        %vm3421 = vcmp.gt.f32.partialorder %v3416, 0.0
        %v3422 = vmul.f32 %v3412, 0.01
        %v3423 = vmul.f32 %v3413, 0.01
        %v3424 = vmul.f32 %v3414, 0.01
        %v3425 = vmul.f32 %v3415, 0.01
        %v3426 = vmul.f32 %v3416, 0.01
        %v3427 = vsel %vm3417, %v3412, %v3422
        %v3428 = vsel %vm3418, %v3413, %v3423
        %v3429 = vsel %vm3419, %v3414, %v3424
        %v3430 = vsel %vm3420, %v3415, %v3425
        %v3431 = vsel %vm3421, %v3416, %v3426
        %v3432 = vpack.c.bf16 %v3428, %v3427
        %v3433 = vpack.c.bf16 %v3430, %v3429
        %v3434 = vpack.c.bf16 %v3431, %v3431
        %s3435 = scalar_lea.vmem %s2, 384
        %v3436 = vld [vmem:[%s3435] sm:$0xf]
        %v3437 = vld [vmem:[%s3435 + $0x4] sm:$0xf]
        %v3438 = vld [vmem:[%s3435 + $0x8] sm:$0xf]
        %v3439 = vld [vmem:[%s3435 + $0xc] sm:$0xf]
        %v3440 = vld [vmem:[%s3435 + $0x10] sm:$0xf]
        %v3441 = vld [vmem:[%s3435 + $0x14] sm:$0xf]
        %v3442 = vld [vmem:[%s3435 + $0x18] sm:$0xf]
        %v3443 = vld [vmem:[%s3435 + $0x1c] sm:$0xf]
        %v3444 = vld [vmem:[%s3435 + $0x20] sm:$0xf]
        %v3445 = vld [vmem:[%s3435 + $0x24] sm:$0xf]
        %v3446 = vld [vmem:[%s3435 + $0x28] sm:$0xf]
        %v3447 = vld [vmem:[%s3435 + $0x2c] sm:$0xf]
        %v3448 = vld [vmem:[%s3435 + $0x30] sm:$0xf]
        %v3449 = vld [vmem:[%s3435 + $0x34] sm:$0xf]
        %v3450 = vld [vmem:[%s3435 + $0x38] sm:$0xf]
        %v3451 = vld [vmem:[%s3435 + $0x3c] sm:$0xf]
        %v3452 = vld [vmem:[%s3435 + $0x40] sm:$0xf]
        %v3453 = vld [vmem:[%s3435 + $0x44] sm:$0xf]
        %v3454 = vld [vmem:[%s3435 + $0x48] sm:$0xf]
        %v3455 = vld [vmem:[%s3435 + $0x4c] sm:$0xf]
        %v3456 = vld [vmem:[%s3435 + $0x50] sm:$0xf]
        %v3457 = vld [vmem:[%s3435 + $0x54] sm:$0xf]
        %v3458 = vld [vmem:[%s3435 + $0x58] sm:$0xf]
        %v3459 = vld [vmem:[%s3435 + $0x5c] sm:$0xf]
        %v3460 = vld [vmem:[%s3435 + $0x60] sm:$0xf]
        %v3461 = vld [vmem:[%s3435 + $0x64] sm:$0xf]
        %v3462 = vld [vmem:[%s3435 + $0x68] sm:$0xf]
        %v3463 = vld [vmem:[%s3435 + $0x6c] sm:$0xf]
        %v3464 = vld [vmem:[%s3435 + $0x70] sm:$0xf]
        %v3465 = vld [vmem:[%s3435 + $0x74] sm:$0xf]
        %v3466 = vld [vmem:[%s3435 + $0x78] sm:$0xf]
        %v3467 = vld [vmem:[%s3435 + $0x7c] sm:$0xf]
        %v3500 = vunpack.c.l.b16 %v3436
        %v3501 = vunpack.c.l.b16 %v3437
        %v3502 = vunpack.c.l.b16 %v3438
        %v3503 = vunpack.c.l.b16 %v3439
        %v3504 = vunpack.c.l.b16 %v3440
        %v3505 = vunpack.c.l.b16 %v3441
        %v3506 = vunpack.c.l.b16 %v3442
        %v3507 = vunpack.c.l.b16 %v3443
        %v3508 = vunpack.c.l.b16 %v3444
        %v3509 = vunpack.c.l.b16 %v3445
        %v3510 = vunpack.c.l.b16 %v3446
        %v3511 = vunpack.c.l.b16 %v3447
        %v3512 = vunpack.c.l.b16 %v3448
        %v3513 = vunpack.c.l.b16 %v3449
        %v3514 = vunpack.c.l.b16 %v3450
        %v3515 = vunpack.c.l.b16 %v3451
        %v3516 = vunpack.c.l.b16 %v3452
        %v3517 = vunpack.c.l.b16 %v3453
        %v3518 = vunpack.c.l.b16 %v3454
        %v3519 = vunpack.c.l.b16 %v3455
        %v3520 = vunpack.c.l.b16 %v3456
        %v3521 = vunpack.c.l.b16 %v3457
        %v3522 = vunpack.c.l.b16 %v3458
        %v3523 = vunpack.c.l.b16 %v3459
        %v3524 = vunpack.c.l.b16 %v3460
        %v3525 = vunpack.c.l.b16 %v3461
        %v3526 = vunpack.c.l.b16 %v3462
        %v3527 = vunpack.c.l.b16 %v3463
        %v3528 = vunpack.c.l.b16 %v3464
        %v3529 = vunpack.c.l.b16 %v3465
        %v3530 = vunpack.c.l.b16 %v3466
        %v3531 = vunpack.c.l.b16 %v3467
        %v3532 = vpack.c.b16 %v3501, %v3500
        %v3533 = vpack.c.b16 %v3503, %v3502
        %v3534 = vpack.c.b16 %v3505, %v3504
        %v3535 = vpack.c.b16 %v3507, %v3506
        %v3536 = vpack.c.b16 %v3509, %v3508
        %v3537 = vpack.c.b16 %v3511, %v3510
        %v3538 = vpack.c.b16 %v3513, %v3512
        %v3539 = vpack.c.b16 %v3515, %v3514
        %v3540 = vpack.c.b16 %v3517, %v3516
        %v3541 = vpack.c.b16 %v3519, %v3518
        %v3542 = vpack.c.b16 %v3521, %v3520
        %v3543 = vpack.c.b16 %v3523, %v3522
        %v3544 = vpack.c.b16 %v3525, %v3524
        %v3545 = vpack.c.b16 %v3527, %v3526
        %v3546 = vpack.c.b16 %v3529, %v3528
        %v3547 = vpack.c.b16 %v3531, %v3530
        %v3549 = vsel %vm741, %v3532, 0
        %v3552 = vsel %vm741, %v3533, 0
        %v3555 = vsel %vm741, %v3534, 0
        %v3558 = vsel %vm741, %v3535, 0
        %v3561 = vsel %vm741, %v3536, 0
        %v3564 = vsel %vm741, %v3537, 0
        %v3567 = vsel %vm741, %v3538, 0
        %v3570 = vsel %vm741, %v3539, 0
        %v3573 = vsel %vm741, %v3540, 0
        %v3576 = vsel %vm741, %v3541, 0
        %v3579 = vsel %vm741, %v3542, 0
        %v3582 = vsel %vm741, %v3543, 0
        %v3585 = vsel %vm741, %v3544, 0
        %v3588 = vsel %vm741, %v3545, 0
        %v3591 = vsel %vm741, %v3546, 0
        %v3594 = vsel %vm741, %v3547, 0
        %v3597 = vsel %vm790, %v3434, 0
        %3599 = vmatpush.bf16.msra.mxu0 0
        %3600 = vmatpush.bf16.msra.mxu0 0
        %3601 = vmatpush.bf16.msra.mxu0 0
        %3602 = vmatpush.bf16.msra.mxu0 0
        %3603 = vmatpush.bf16.msra.mxu0 0
        %3604 = vmatpush.bf16.msra.mxu0 %v3597
        %3605 = vmatpush.bf16.msra.mxu0 %v3433
        %3606 = vmatpush.bf16.msra.mxu0 %v3432
        %3607 = vmatmul.bf16.gmra.mxu0 %v3549
        %v3608 = vpop.f32.mrf.mxu0
        %v3609 = vadd.f32 0.0, %v3608
        %v3610 = vpop.f32.mrf.mxu0
        %v3611 = vadd.f32 0.0, %v3610
        %3612 = vmatmul.bf16.gmra.mxu0 %v3552
        %v3613 = vpop.f32.mrf.mxu0
        %v3614 = vadd.f32 0.0, %v3613
        %v3615 = vpop.f32.mrf.mxu0
        %v3616 = vadd.f32 0.0, %v3615
        %3617 = vmatmul.bf16.gmra.mxu0 %v3555
        %v3618 = vpop.f32.mrf.mxu0
        %v3619 = vadd.f32 0.0, %v3618
        %v3620 = vpop.f32.mrf.mxu0
        %v3621 = vadd.f32 0.0, %v3620
        %3622 = vmatmul.bf16.gmra.mxu0 %v3558
        %v3623 = vpop.f32.mrf.mxu0
        %v3624 = vadd.f32 0.0, %v3623
        %v3625 = vpop.f32.mrf.mxu0
        %v3626 = vadd.f32 0.0, %v3625
        %3627 = vmatmul.bf16.gmra.mxu0 %v3561
        %v3628 = vpop.f32.mrf.mxu0
        %v3629 = vadd.f32 0.0, %v3628
        %v3630 = vpop.f32.mrf.mxu0
        %v3631 = vadd.f32 0.0, %v3630
        %3632 = vmatmul.bf16.gmra.mxu0 %v3564
        %v3633 = vpop.f32.mrf.mxu0
        %v3634 = vadd.f32 0.0, %v3633
        %v3635 = vpop.f32.mrf.mxu0
        %v3636 = vadd.f32 0.0, %v3635
        %3637 = vmatmul.bf16.gmra.mxu0 %v3567
        %v3638 = vpop.f32.mrf.mxu0
        %v3639 = vadd.f32 0.0, %v3638
        %v3640 = vpop.f32.mrf.mxu0
        %v3641 = vadd.f32 0.0, %v3640
        %3642 = vmatmul.bf16.gmra.mxu0 %v3570
        %v3643 = vpop.f32.mrf.mxu0
        %v3644 = vadd.f32 0.0, %v3643
        %v3645 = vpop.f32.mrf.mxu0
        %v3646 = vadd.f32 0.0, %v3645
        %3647 = vmatmul.bf16.gmra.mxu0 %v3573
        %v3648 = vpop.f32.mrf.mxu0
        %v3649 = vadd.f32 0.0, %v3648
        %v3650 = vpop.f32.mrf.mxu0
        %v3651 = vadd.f32 0.0, %v3650
        %3652 = vmatmul.bf16.gmra.mxu0 %v3576
        %v3653 = vpop.f32.mrf.mxu0
        %v3654 = vadd.f32 0.0, %v3653
        %v3655 = vpop.f32.mrf.mxu0
        %v3656 = vadd.f32 0.0, %v3655
        %3657 = vmatmul.bf16.gmra.mxu0 %v3579
        %v3658 = vpop.f32.mrf.mxu0
        %v3659 = vadd.f32 0.0, %v3658
        %v3660 = vpop.f32.mrf.mxu0
        %v3661 = vadd.f32 0.0, %v3660
        %3662 = vmatmul.bf16.gmra.mxu0 %v3582
        %v3663 = vpop.f32.mrf.mxu0
        %v3664 = vadd.f32 0.0, %v3663
        %v3665 = vpop.f32.mrf.mxu0
        %v3666 = vadd.f32 0.0, %v3665
        %3667 = vmatmul.bf16.gmra.mxu0 %v3585
        %v3668 = vpop.f32.mrf.mxu0
        %v3669 = vadd.f32 0.0, %v3668
        %v3670 = vpop.f32.mrf.mxu0
        %v3671 = vadd.f32 0.0, %v3670
        %3672 = vmatmul.bf16.gmra.mxu0 %v3588
        %v3673 = vpop.f32.mrf.mxu0
        %v3674 = vadd.f32 0.0, %v3673
        %v3675 = vpop.f32.mrf.mxu0
        %v3676 = vadd.f32 0.0, %v3675
        %3677 = vmatmul.bf16.gmra.mxu0 %v3591
        %v3678 = vpop.f32.mrf.mxu0
        %v3679 = vadd.f32 0.0, %v3678
        %v3680 = vpop.f32.mrf.mxu0
        %v3681 = vadd.f32 0.0, %v3680
        %3682 = vmatmul.bf16.gmra.mxu0 %v3594
        %v3683 = vpop.f32.mrf.mxu0
        %v3684 = vadd.f32 0.0, %v3683
        %v3685 = vpop.f32.mrf.mxu0
        %v3686 = vadd.f32 0.0, %v3685
        %3687 = vdwg.mxu0
        %v3688 = vpack.c.bf16 %v3609, %v3609
        %v3689 = vpack.c.bf16 %v3611, %v3611
        %v3690 = vpack.c.bf16 %v3614, %v3614
        %v3691 = vpack.c.bf16 %v3616, %v3616
        %v3692 = vpack.c.bf16 %v3619, %v3619
        %v3693 = vpack.c.bf16 %v3621, %v3621
        %v3694 = vpack.c.bf16 %v3624, %v3624
        %v3695 = vpack.c.bf16 %v3626, %v3626
        %v3696 = vpack.c.bf16 %v3629, %v3629
        %v3697 = vpack.c.bf16 %v3631, %v3631
        %v3698 = vpack.c.bf16 %v3634, %v3634
        %v3699 = vpack.c.bf16 %v3636, %v3636
        %v3700 = vpack.c.bf16 %v3639, %v3639
        %v3701 = vpack.c.bf16 %v3641, %v3641
        %v3702 = vpack.c.bf16 %v3644, %v3644
        %v3703 = vpack.c.bf16 %v3646, %v3646
        %v3704 = vpack.c.bf16 %v3649, %v3649
        %v3705 = vpack.c.bf16 %v3651, %v3651
        %v3706 = vpack.c.bf16 %v3654, %v3654
        %v3707 = vpack.c.bf16 %v3656, %v3656
        %v3708 = vpack.c.bf16 %v3659, %v3659
        %v3709 = vpack.c.bf16 %v3661, %v3661
        %v3710 = vpack.c.bf16 %v3664, %v3664
        %v3711 = vpack.c.bf16 %v3666, %v3666
        %v3712 = vpack.c.bf16 %v3669, %v3669
        %v3713 = vpack.c.bf16 %v3671, %v3671
        %v3714 = vpack.c.bf16 %v3674, %v3674
        %v3715 = vpack.c.bf16 %v3676, %v3676
        %v3716 = vpack.c.bf16 %v3679, %v3679
        %v3717 = vpack.c.bf16 %v3681, %v3681
        %v3718 = vpack.c.bf16 %v3684, %v3684
        %v3719 = vpack.c.bf16 %v3686, %v3686
        %v3721 = vshrl.u32 %v3688, 16
        %v3723 = vrot.slane %v3721, 7
        %v3724 = vshll.u32 %v3688, 16
        %v3726 = vor.u32 %v3723, %v3724
        %v3727 = vrot.slane %v3723, 4
        %v3729 = vshrl.u32 %v3689, 16
        %v3731 = vrot.slane %v3729, 7
        %v3732 = vshll.u32 %v3689, 16
        %v3734 = vor.u32 %v3731, %v3732
        %v3735 = vsel %vm917, %v3727, %v3734
        %v3736 = vrot.slane %v3731, 4
        %v3738 = vshrl.u32 %v3690, 16
        %v3740 = vrot.slane %v3738, 7
        %v3741 = vshll.u32 %v3690, 16
        %v3743 = vor.u32 %v3740, %v3741
        %v3744 = vrot.slane %v3740, 4
        %v3746 = vshrl.u32 %v3691, 16
        %v3748 = vrot.slane %v3746, 7
        %v3749 = vshll.u32 %v3691, 16
        %v3751 = vor.u32 %v3748, %v3749
        %v3752 = vsel %vm917, %v3744, %v3751
        %v3753 = vrot.slane %v3748, 4
        %v3755 = vshrl.u32 %v3692, 16
        %v3757 = vrot.slane %v3755, 7
        %v3758 = vshll.u32 %v3692, 16
        %v3760 = vor.u32 %v3757, %v3758
        %v3761 = vrot.slane %v3757, 4
        %v3763 = vshrl.u32 %v3693, 16
        %v3765 = vrot.slane %v3763, 7
        %v3766 = vshll.u32 %v3693, 16
        %v3768 = vor.u32 %v3765, %v3766
        %v3769 = vsel %vm917, %v3761, %v3768
        %v3770 = vrot.slane %v3765, 4
        %v3772 = vshrl.u32 %v3694, 16
        %v3774 = vrot.slane %v3772, 7
        %v3775 = vshll.u32 %v3694, 16
        %v3777 = vor.u32 %v3774, %v3775
        %v3778 = vrot.slane %v3774, 4
        %v3780 = vshrl.u32 %v3695, 16
        %v3782 = vrot.slane %v3780, 7
        %v3783 = vshll.u32 %v3695, 16
        %v3785 = vor.u32 %v3782, %v3783
        %v3786 = vsel %vm917, %v3778, %v3785
        %v3787 = vrot.slane %v3782, 4
        %v3789 = vshrl.u32 %v3696, 16
        %v3791 = vrot.slane %v3789, 7
        %v3792 = vshll.u32 %v3696, 16
        %v3794 = vor.u32 %v3791, %v3792
        %v3795 = vrot.slane %v3791, 4
        %v3797 = vshrl.u32 %v3697, 16
        %v3799 = vrot.slane %v3797, 7
        %v3800 = vshll.u32 %v3697, 16
        %v3802 = vor.u32 %v3799, %v3800
        %v3803 = vsel %vm917, %v3795, %v3802
        %v3804 = vrot.slane %v3799, 4
        %v3806 = vshrl.u32 %v3698, 16
        %v3808 = vrot.slane %v3806, 7
        %v3809 = vshll.u32 %v3698, 16
        %v3811 = vor.u32 %v3808, %v3809
        %v3812 = vrot.slane %v3808, 4
        %v3814 = vshrl.u32 %v3699, 16
        %v3816 = vrot.slane %v3814, 7
        %v3817 = vshll.u32 %v3699, 16
        %v3819 = vor.u32 %v3816, %v3817
        %v3820 = vsel %vm917, %v3812, %v3819
        %v3821 = vrot.slane %v3816, 4
        %v3823 = vshrl.u32 %v3700, 16
        %v3825 = vrot.slane %v3823, 7
        %v3826 = vshll.u32 %v3700, 16
        %v3828 = vor.u32 %v3825, %v3826
        %v3829 = vrot.slane %v3825, 4
        %v3831 = vshrl.u32 %v3701, 16
        %v3833 = vrot.slane %v3831, 7
        %v3834 = vshll.u32 %v3701, 16
        %v3836 = vor.u32 %v3833, %v3834
        %v3837 = vsel %vm917, %v3829, %v3836
        %v3838 = vrot.slane %v3833, 4
        %v3840 = vshrl.u32 %v3702, 16
        %v3842 = vrot.slane %v3840, 7
        %v3843 = vshll.u32 %v3702, 16
        %v3845 = vor.u32 %v3842, %v3843
        %v3846 = vrot.slane %v3842, 4
        %v3848 = vshrl.u32 %v3703, 16
        %v3850 = vrot.slane %v3848, 7
        %v3851 = vshll.u32 %v3703, 16
        %v3853 = vor.u32 %v3850, %v3851
        %v3854 = vsel %vm917, %v3846, %v3853
        %v3855 = vrot.slane %v3850, 4
        %v3857 = vshrl.u32 %v3704, 16
        %v3859 = vrot.slane %v3857, 7
        %v3860 = vshll.u32 %v3704, 16
        %v3862 = vor.u32 %v3859, %v3860
        %v3863 = vrot.slane %v3859, 4
        %v3865 = vshrl.u32 %v3705, 16
        %v3867 = vrot.slane %v3865, 7
        %v3868 = vshll.u32 %v3705, 16
        %v3870 = vor.u32 %v3867, %v3868
        %v3871 = vsel %vm917, %v3863, %v3870
        %v3872 = vrot.slane %v3867, 4
        %v3874 = vshrl.u32 %v3706, 16
        %v3876 = vrot.slane %v3874, 7
        %v3877 = vshll.u32 %v3706, 16
        %v3879 = vor.u32 %v3876, %v3877
        %v3880 = vrot.slane %v3876, 4
        %v3882 = vshrl.u32 %v3707, 16
        %v3884 = vrot.slane %v3882, 7
        %v3885 = vshll.u32 %v3707, 16
        %v3887 = vor.u32 %v3884, %v3885
        %v3888 = vsel %vm917, %v3880, %v3887
        %v3889 = vrot.slane %v3884, 4
        %v3891 = vshrl.u32 %v3708, 16
        %v3893 = vrot.slane %v3891, 7
        %v3894 = vshll.u32 %v3708, 16
        %v3896 = vor.u32 %v3893, %v3894
        %v3897 = vrot.slane %v3893, 4
        %v3899 = vshrl.u32 %v3709, 16
        %v3901 = vrot.slane %v3899, 7
        %v3902 = vshll.u32 %v3709, 16
        %v3904 = vor.u32 %v3901, %v3902
        %v3905 = vsel %vm917, %v3897, %v3904
        %v3906 = vrot.slane %v3901, 4
        %v3908 = vshrl.u32 %v3710, 16
        %v3910 = vrot.slane %v3908, 7
        %v3911 = vshll.u32 %v3710, 16
        %v3913 = vor.u32 %v3910, %v3911
        %v3914 = vrot.slane %v3910, 4
        %v3916 = vshrl.u32 %v3711, 16
        %v3918 = vrot.slane %v3916, 7
        %v3919 = vshll.u32 %v3711, 16
        %v3921 = vor.u32 %v3918, %v3919
        %v3922 = vsel %vm917, %v3914, %v3921
        %v3923 = vrot.slane %v3918, 4
        %v3925 = vshrl.u32 %v3712, 16
        %v3927 = vrot.slane %v3925, 7
        %v3928 = vshll.u32 %v3712, 16
        %v3930 = vor.u32 %v3927, %v3928
        %v3931 = vrot.slane %v3927, 4
        %v3933 = vshrl.u32 %v3713, 16
        %v3935 = vrot.slane %v3933, 7
        %v3936 = vshll.u32 %v3713, 16
        %v3938 = vor.u32 %v3935, %v3936
        %v3939 = vsel %vm917, %v3931, %v3938
        %v3940 = vrot.slane %v3935, 4
        %v3942 = vshrl.u32 %v3714, 16
        %v3944 = vrot.slane %v3942, 7
        %v3945 = vshll.u32 %v3714, 16
        %v3947 = vor.u32 %v3944, %v3945
        %v3948 = vrot.slane %v3944, 4
        %v3950 = vshrl.u32 %v3715, 16
        %v3952 = vrot.slane %v3950, 7
        %v3953 = vshll.u32 %v3715, 16
        %v3955 = vor.u32 %v3952, %v3953
        %v3956 = vsel %vm917, %v3948, %v3955
        %v3957 = vrot.slane %v3952, 4
        %v3959 = vshrl.u32 %v3716, 16
        %v3961 = vrot.slane %v3959, 7
        %v3962 = vshll.u32 %v3716, 16
        %v3964 = vor.u32 %v3961, %v3962
        %v3965 = vrot.slane %v3961, 4
        %v3967 = vshrl.u32 %v3717, 16
        %v3969 = vrot.slane %v3967, 7
        %v3970 = vshll.u32 %v3717, 16
        %v3972 = vor.u32 %v3969, %v3970
        %v3973 = vsel %vm917, %v3965, %v3972
        %v3974 = vrot.slane %v3969, 4
        %v3976 = vshrl.u32 %v3718, 16
        %v3978 = vrot.slane %v3976, 7
        %v3979 = vshll.u32 %v3718, 16
        %v3981 = vor.u32 %v3978, %v3979
        %v3982 = vrot.slane %v3978, 4
        %v3984 = vshrl.u32 %v3719, 16
        %v3986 = vrot.slane %v3984, 7
        %v3987 = vshll.u32 %v3719, 16
        %v3989 = vor.u32 %v3986, %v3987
        %v3990 = vsel %vm917, %v3982, %v3989
        %v3991 = vrot.slane %v3986, 4
        %3992 = vrot.lane.b32.xlu0 %v3726, 24
        %v3993 = vpop.permute.xlu0 %3992
        %3994 = vrot.lane.b32.xlu0 %v3735, 24
        %v3995 = vpop.permute.xlu0 %3994
        %3996 = vrot.lane.b32.xlu0 %v3736, 24
        %v3997 = vpop.permute.xlu0 %3996
        %3998 = vrot.lane.b32.xlu0 %v3743, 24
        %v3999 = vpop.permute.xlu0 %3998
        %4000 = vrot.lane.b32.xlu0 %v3752, 24
        %v4001 = vpop.permute.xlu0 %4000
        %4002 = vrot.lane.b32.xlu0 %v3753, 24
        %v4003 = vpop.permute.xlu0 %4002
        %4004 = vrot.lane.b32.xlu0 %v3760, 24
        %v4005 = vpop.permute.xlu0 %4004
        %4006 = vrot.lane.b32.xlu0 %v3769, 24
        %v4007 = vpop.permute.xlu0 %4006
        %4008 = vrot.lane.b32.xlu0 %v3770, 24
        %v4009 = vpop.permute.xlu0 %4008
        %4010 = vrot.lane.b32.xlu0 %v3777, 24
        %v4011 = vpop.permute.xlu0 %4010
        %4012 = vrot.lane.b32.xlu0 %v3786, 24
        %v4013 = vpop.permute.xlu0 %4012
        %4014 = vrot.lane.b32.xlu0 %v3787, 24
        %v4015 = vpop.permute.xlu0 %4014
        %4016 = vrot.lane.b32.xlu0 %v3794, 24
        %v4017 = vpop.permute.xlu0 %4016
        %4018 = vrot.lane.b32.xlu0 %v3803, 24
        %v4019 = vpop.permute.xlu0 %4018
        %4020 = vrot.lane.b32.xlu0 %v3804, 24
        %v4021 = vpop.permute.xlu0 %4020
        %4022 = vrot.lane.b32.xlu0 %v3811, 24
        %v4023 = vpop.permute.xlu0 %4022
        %4024 = vrot.lane.b32.xlu0 %v3820, 24
        %v4025 = vpop.permute.xlu0 %4024
        %4026 = vrot.lane.b32.xlu0 %v3821, 24
        %v4027 = vpop.permute.xlu0 %4026
        %4028 = vrot.lane.b32.xlu0 %v3828, 24
        %v4029 = vpop.permute.xlu0 %4028
        %4030 = vrot.lane.b32.xlu0 %v3837, 24
        %v4031 = vpop.permute.xlu0 %4030
        %4032 = vrot.lane.b32.xlu0 %v3838, 24
        %v4033 = vpop.permute.xlu0 %4032
        %4034 = vrot.lane.b32.xlu0 %v3845, 24
        %v4035 = vpop.permute.xlu0 %4034
        %4036 = vrot.lane.b32.xlu0 %v3854, 24
        %v4037 = vpop.permute.xlu0 %4036
        %4038 = vrot.lane.b32.xlu0 %v3855, 24
        %v4039 = vpop.permute.xlu0 %4038
        %4040 = vrot.lane.b32.xlu0 %v3862, 24
        %v4041 = vpop.permute.xlu0 %4040
        %4042 = vrot.lane.b32.xlu0 %v3871, 24
        %v4043 = vpop.permute.xlu0 %4042
        %4044 = vrot.lane.b32.xlu0 %v3872, 24
        %v4045 = vpop.permute.xlu0 %4044
        %4046 = vrot.lane.b32.xlu0 %v3879, 24
        %v4047 = vpop.permute.xlu0 %4046
        %4048 = vrot.lane.b32.xlu0 %v3888, 24
        %v4049 = vpop.permute.xlu0 %4048
        %4050 = vrot.lane.b32.xlu0 %v3889, 24
        %v4051 = vpop.permute.xlu0 %4050
        %4052 = vrot.lane.b32.xlu0 %v3896, 24
        %v4053 = vpop.permute.xlu0 %4052
        %4054 = vrot.lane.b32.xlu0 %v3905, 24
        %v4055 = vpop.permute.xlu0 %4054
        %4056 = vrot.lane.b32.xlu0 %v3906, 24
        %v4057 = vpop.permute.xlu0 %4056
        %4058 = vrot.lane.b32.xlu0 %v3913, 24
        %v4059 = vpop.permute.xlu0 %4058
        %4060 = vrot.lane.b32.xlu0 %v3922, 24
        %v4061 = vpop.permute.xlu0 %4060
        %4062 = vrot.lane.b32.xlu0 %v3923, 24
        %v4063 = vpop.permute.xlu0 %4062
        %4064 = vrot.lane.b32.xlu0 %v3930, 24
        %v4065 = vpop.permute.xlu0 %4064
        %4066 = vrot.lane.b32.xlu0 %v3939, 24
        %v4067 = vpop.permute.xlu0 %4066
        %4068 = vrot.lane.b32.xlu0 %v3940, 24
        %v4069 = vpop.permute.xlu0 %4068
        %4070 = vrot.lane.b32.xlu0 %v3947, 24
        %v4071 = vpop.permute.xlu0 %4070
        %4072 = vrot.lane.b32.xlu0 %v3956, 24
        %v4073 = vpop.permute.xlu0 %4072
        %4074 = vrot.lane.b32.xlu0 %v3957, 24
        %v4075 = vpop.permute.xlu0 %4074
        %4076 = vrot.lane.b32.xlu0 %v3964, 24
        %v4077 = vpop.permute.xlu0 %4076
        %4078 = vrot.lane.b32.xlu0 %v3973, 24
        %v4079 = vpop.permute.xlu0 %4078
        %4080 = vrot.lane.b32.xlu0 %v3974, 24
        %v4081 = vpop.permute.xlu0 %4080
        %4082 = vrot.lane.b32.xlu0 %v3981, 24
        %v4083 = vpop.permute.xlu0 %4082
        %4084 = vrot.lane.b32.xlu0 %v3990, 24
        %v4085 = vpop.permute.xlu0 %4084
        %4086 = vrot.lane.b32.xlu0 %v3991, 24
        %v4087 = vpop.permute.xlu0 %4086
        %vm4136 = vcmask 257216
        %vm4137 = vmand %vm4136, %vm1240
        %v4138 = vld [vmem:[%s1238] sm:$0xf]
        %v4139 = vsel %vm4137, %v3993, %v4138
        %4140 = vst [vmem:[%s1238] sm:$0xf] %v4139
        %vm4141 = vcmask 257216
        %4142 = vst.msk [vmem:[%s1238 + $0x4] sm:$0xf] %vm4141, %v3995
        %vm4143 = vcmask 254144
        %vm4144 = vmand %vm4143, %vm915
        %v4145 = vld [vmem:[%s1238 + $0x8] sm:$0x1]
        %v4146 = vsel %vm4144, %v3997, %v4145
        %4147 = vst [vmem:[%s1238 + $0x8] sm:$0x1] %v4146
        %v4148 = vld [vmem:[%s1238 + $0xc] sm:$0xf]
        %v4149 = vsel %vm4137, %v3999, %v4148
        %4150 = vst [vmem:[%s1238 + $0xc] sm:$0xf] %v4149
        %4151 = vst.msk [vmem:[%s1238 + $0x10] sm:$0xf] %vm4141, %v4001
        %v4152 = vld [vmem:[%s1238 + $0x14] sm:$0x1]
        %v4153 = vsel %vm4144, %v4003, %v4152
        %4154 = vst [vmem:[%s1238 + $0x14] sm:$0x1] %v4153
        %v4155 = vld [vmem:[%s1238 + $0x18] sm:$0xf]
        %v4156 = vsel %vm4137, %v4005, %v4155
        %4157 = vst [vmem:[%s1238 + $0x18] sm:$0xf] %v4156
        %4158 = vst.msk [vmem:[%s1238 + $0x1c] sm:$0xf] %vm4141, %v4007
        %v4159 = vld [vmem:[%s1238 + $0x20] sm:$0x1]
        %v4160 = vsel %vm4144, %v4009, %v4159
        %4161 = vst [vmem:[%s1238 + $0x20] sm:$0x1] %v4160
        %v4162 = vld [vmem:[%s1238 + $0x24] sm:$0xf]
        %v4163 = vsel %vm4137, %v4011, %v4162
        %4164 = vst [vmem:[%s1238 + $0x24] sm:$0xf] %v4163
        %4165 = vst.msk [vmem:[%s1238 + $0x28] sm:$0xf] %vm4141, %v4013
        %v4166 = vld [vmem:[%s1238 + $0x2c] sm:$0x1]
        %v4167 = vsel %vm4144, %v4015, %v4166
        %4168 = vst [vmem:[%s1238 + $0x2c] sm:$0x1] %v4167
        %v4169 = vld [vmem:[%s1238 + $0x30] sm:$0xf]
        %v4170 = vsel %vm4137, %v4017, %v4169
        %4171 = vst [vmem:[%s1238 + $0x30] sm:$0xf] %v4170
        %4172 = vst.msk [vmem:[%s1238 + $0x34] sm:$0xf] %vm4141, %v4019
        %v4173 = vld [vmem:[%s1238 + $0x38] sm:$0x1]
        %v4174 = vsel %vm4144, %v4021, %v4173
        %4175 = vst [vmem:[%s1238 + $0x38] sm:$0x1] %v4174
        %v4176 = vld [vmem:[%s1238 + $0x3c] sm:$0xf]
        %v4177 = vsel %vm4137, %v4023, %v4176
        %4178 = vst [vmem:[%s1238 + $0x3c] sm:$0xf] %v4177
        %4179 = vst.msk [vmem:[%s1238 + $0x40] sm:$0xf] %vm4141, %v4025
        %v4180 = vld [vmem:[%s1238 + $0x44] sm:$0x1]
        %v4181 = vsel %vm4144, %v4027, %v4180
        %4182 = vst [vmem:[%s1238 + $0x44] sm:$0x1] %v4181
        %v4183 = vld [vmem:[%s1238 + $0x48] sm:$0xf]
        %v4184 = vsel %vm4137, %v4029, %v4183
        %4185 = vst [vmem:[%s1238 + $0x48] sm:$0xf] %v4184
        %4186 = vst.msk [vmem:[%s1238 + $0x4c] sm:$0xf] %vm4141, %v4031
        %v4187 = vld [vmem:[%s1238 + $0x50] sm:$0x1]
        %v4188 = vsel %vm4144, %v4033, %v4187
        %4189 = vst [vmem:[%s1238 + $0x50] sm:$0x1] %v4188
        %v4190 = vld [vmem:[%s1238 + $0x54] sm:$0xf]
        %v4191 = vsel %vm4137, %v4035, %v4190
        %4192 = vst [vmem:[%s1238 + $0x54] sm:$0xf] %v4191
        %4193 = vst.msk [vmem:[%s1238 + $0x58] sm:$0xf] %vm4141, %v4037
        %v4194 = vld [vmem:[%s1238 + $0x5c] sm:$0x1]
        %v4195 = vsel %vm4144, %v4039, %v4194
        %4196 = vst [vmem:[%s1238 + $0x5c] sm:$0x1] %v4195
        %v4197 = vld [vmem:[%s1238 + $0x60] sm:$0xf]
        %v4198 = vsel %vm4137, %v4041, %v4197
        %4199 = vst [vmem:[%s1238 + $0x60] sm:$0xf] %v4198
        %4200 = vst.msk [vmem:[%s1238 + $0x64] sm:$0xf] %vm4141, %v4043
        %v4201 = vld [vmem:[%s1238 + $0x68] sm:$0x1]
        %v4202 = vsel %vm4144, %v4045, %v4201
        %4203 = vst [vmem:[%s1238 + $0x68] sm:$0x1] %v4202
        %v4204 = vld [vmem:[%s1238 + $0x6c] sm:$0xf]
        %v4205 = vsel %vm4137, %v4047, %v4204
        %4206 = vst [vmem:[%s1238 + $0x6c] sm:$0xf] %v4205
        %4207 = vst.msk [vmem:[%s1238 + $0x70] sm:$0xf] %vm4141, %v4049
        %v4208 = vld [vmem:[%s1238 + $0x74] sm:$0x1]
        %v4209 = vsel %vm4144, %v4051, %v4208
        %4210 = vst [vmem:[%s1238 + $0x74] sm:$0x1] %v4209
        %v4211 = vld [vmem:[%s1238 + $0x78] sm:$0xf]
        %v4212 = vsel %vm4137, %v4053, %v4211
        %4213 = vst [vmem:[%s1238 + $0x78] sm:$0xf] %v4212
        %4214 = vst.msk [vmem:[%s1238 + $0x7c] sm:$0xf] %vm4141, %v4055
        %v4215 = vld [vmem:[%s1238 + $0x80] sm:$0x1]
        %v4216 = vsel %vm4144, %v4057, %v4215
        %4217 = vst [vmem:[%s1238 + $0x80] sm:$0x1] %v4216
        %v4218 = vld [vmem:[%s1238 + $0x84] sm:$0xf]
        %v4219 = vsel %vm4137, %v4059, %v4218
        %4220 = vst [vmem:[%s1238 + $0x84] sm:$0xf] %v4219
        %4221 = vst.msk [vmem:[%s1238 + $0x88] sm:$0xf] %vm4141, %v4061
        %v4222 = vld [vmem:[%s1238 + $0x8c] sm:$0x1]
        %v4223 = vsel %vm4144, %v4063, %v4222
        %4224 = vst [vmem:[%s1238 + $0x8c] sm:$0x1] %v4223
        %v4225 = vld [vmem:[%s1238 + $0x90] sm:$0xf]
        %v4226 = vsel %vm4137, %v4065, %v4225
        %4227 = vst [vmem:[%s1238 + $0x90] sm:$0xf] %v4226
        %4228 = vst.msk [vmem:[%s1238 + $0x94] sm:$0xf] %vm4141, %v4067
        %v4229 = vld [vmem:[%s1238 + $0x98] sm:$0x1]
        %v4230 = vsel %vm4144, %v4069, %v4229
        %4231 = vst [vmem:[%s1238 + $0x98] sm:$0x1] %v4230
        %v4232 = vld [vmem:[%s1238 + $0x9c] sm:$0xf]
        %v4233 = vsel %vm4137, %v4071, %v4232
        %4234 = vst [vmem:[%s1238 + $0x9c] sm:$0xf] %v4233
        %4235 = vst.msk [vmem:[%s1238 + $0xa0] sm:$0xf] %vm4141, %v4073
        %v4236 = vld [vmem:[%s1238 + $0xa4] sm:$0x1]
        %v4237 = vsel %vm4144, %v4075, %v4236
        %4238 = vst [vmem:[%s1238 + $0xa4] sm:$0x1] %v4237
        %v4239 = vld [vmem:[%s1238 + $0xa8] sm:$0xf]
        %v4240 = vsel %vm4137, %v4077, %v4239
        %4241 = vst [vmem:[%s1238 + $0xa8] sm:$0xf] %v4240
        %4242 = vst.msk [vmem:[%s1238 + $0xac] sm:$0xf] %vm4141, %v4079
        %v4243 = vld [vmem:[%s1238 + $0xb0] sm:$0x1]
        %v4244 = vsel %vm4144, %v4081, %v4243
        %4245 = vst [vmem:[%s1238 + $0xb0] sm:$0x1] %v4244
        %v4246 = vld [vmem:[%s1238 + $0xb4] sm:$0xf]
        %v4247 = vsel %vm4137, %v4083, %v4246
        %4248 = vst [vmem:[%s1238 + $0xb4] sm:$0xf] %v4247
        %4249 = vst.msk [vmem:[%s1238 + $0xb8] sm:$0xf] %vm4141, %v4085
        %v4250 = vld [vmem:[%s1238 + $0xbc] sm:$0x1]
        %v4251 = vsel %vm4144, %v4087, %v4250
        %4252 = vst [vmem:[%s1238 + $0xbc] sm:$0x1] %v4251
        %v4254 = vshrl.u32 %v251, 16
        %v4256 = vrot.slane %v4254, 7
        %v4257 = vshll.u32 %v251, 16
        %v4259 = vor.u32 %v4256, %v4257
        %v4260 = vrot.slane %v4256, 4
        %v4262 = vshrl.u32 %v252, 16
        %v4264 = vrot.slane %v4262, 7
        %v4265 = vshll.u32 %v252, 16
        %v4267 = vor.u32 %v4264, %v4265
        %v4268 = vsel %vm917, %v4260, %v4267
        %v4269 = vrot.slane %v4264, 4
        %v4271 = vshrl.u32 %v253, 16
        %v4273 = vrot.slane %v4271, 7
        %v4274 = vshll.u32 %v253, 16
        %v4276 = vor.u32 %v4273, %v4274
        %v4277 = vrot.slane %v4273, 4
        %v4279 = vshrl.u32 %v254, 16
        %v4281 = vrot.slane %v4279, 7
        %v4282 = vshll.u32 %v254, 16
        %v4284 = vor.u32 %v4281, %v4282
        %v4285 = vsel %vm917, %v4277, %v4284
        %v4286 = vrot.slane %v4281, 4
        %v4288 = vshrl.u32 %v255, 16
        %v4290 = vrot.slane %v4288, 7
        %v4291 = vshll.u32 %v255, 16
        %v4293 = vor.u32 %v4290, %v4291
        %v4294 = vrot.slane %v4290, 4
        %v4296 = vshrl.u32 %v256, 16
        %v4298 = vrot.slane %v4296, 7
        %v4299 = vshll.u32 %v256, 16
        %v4301 = vor.u32 %v4298, %v4299
        %v4302 = vsel %vm917, %v4294, %v4301
        %v4303 = vrot.slane %v4298, 4
        %v4305 = vshrl.u32 %v257, 16
        %v4307 = vrot.slane %v4305, 7
        %v4308 = vshll.u32 %v257, 16
        %v4310 = vor.u32 %v4307, %v4308
        %v4311 = vrot.slane %v4307, 4
        %v4313 = vshrl.u32 %v258, 16
        %v4315 = vrot.slane %v4313, 7
        %v4316 = vshll.u32 %v258, 16
        %v4318 = vor.u32 %v4315, %v4316
        %v4319 = vsel %vm917, %v4311, %v4318
        %v4320 = vrot.slane %v4315, 4
        %v4322 = vshrl.u32 %v259, 16
        %v4324 = vrot.slane %v4322, 7
        %v4325 = vshll.u32 %v259, 16
        %v4327 = vor.u32 %v4324, %v4325
        %v4328 = vrot.slane %v4324, 4
        %v4330 = vshrl.u32 %v260, 16
        %v4332 = vrot.slane %v4330, 7
        %v4333 = vshll.u32 %v260, 16
        %v4335 = vor.u32 %v4332, %v4333
        %v4336 = vsel %vm917, %v4328, %v4335
        %v4337 = vrot.slane %v4332, 4
        %v4339 = vshrl.u32 %v261, 16
        %v4341 = vrot.slane %v4339, 7
        %v4342 = vshll.u32 %v261, 16
        %v4344 = vor.u32 %v4341, %v4342
        %v4345 = vrot.slane %v4341, 4
        %v4347 = vshrl.u32 %v262, 16
        %v4349 = vrot.slane %v4347, 7
        %v4350 = vshll.u32 %v262, 16
        %v4352 = vor.u32 %v4349, %v4350
        %v4353 = vsel %vm917, %v4345, %v4352
        %v4354 = vrot.slane %v4349, 4
        %v4356 = vshrl.u32 %v263, 16
        %v4358 = vrot.slane %v4356, 7
        %v4359 = vshll.u32 %v263, 16
        %v4361 = vor.u32 %v4358, %v4359
        %v4362 = vrot.slane %v4358, 4
        %v4364 = vshrl.u32 %v264, 16
        %v4366 = vrot.slane %v4364, 7
        %v4367 = vshll.u32 %v264, 16
        %v4369 = vor.u32 %v4366, %v4367
        %v4370 = vsel %vm917, %v4362, %v4369
        %v4371 = vrot.slane %v4366, 4
        %v4373 = vshrl.u32 %v265, 16
        %v4375 = vrot.slane %v4373, 7
        %v4376 = vshll.u32 %v265, 16
        %v4378 = vor.u32 %v4375, %v4376
        %v4379 = vrot.slane %v4375, 4
        %v4381 = vshrl.u32 %v266, 16
        %v4383 = vrot.slane %v4381, 7
        %v4384 = vshll.u32 %v266, 16
        %v4386 = vor.u32 %v4383, %v4384
        %v4387 = vsel %vm917, %v4379, %v4386
        %v4388 = vrot.slane %v4383, 4
        %v4390 = vshrl.u32 %v267, 16
        %v4392 = vrot.slane %v4390, 7
        %v4393 = vshll.u32 %v267, 16
        %v4395 = vor.u32 %v4392, %v4393
        %v4396 = vrot.slane %v4392, 4
        %v4398 = vshrl.u32 %v268, 16
        %v4400 = vrot.slane %v4398, 7
        %v4401 = vshll.u32 %v268, 16
        %v4403 = vor.u32 %v4400, %v4401
        %v4404 = vsel %vm917, %v4396, %v4403
        %v4405 = vrot.slane %v4400, 4
        %v4407 = vshrl.u32 %v269, 16
        %v4409 = vrot.slane %v4407, 7
        %v4410 = vshll.u32 %v269, 16
        %v4412 = vor.u32 %v4409, %v4410
        %v4413 = vrot.slane %v4409, 4
        %v4415 = vshrl.u32 %v270, 16
        %v4417 = vrot.slane %v4415, 7
        %v4418 = vshll.u32 %v270, 16
        %v4420 = vor.u32 %v4417, %v4418
        %v4421 = vsel %vm917, %v4413, %v4420
        %v4422 = vrot.slane %v4417, 4
        %v4424 = vshrl.u32 %v271, 16
        %v4426 = vrot.slane %v4424, 7
        %v4427 = vshll.u32 %v271, 16
        %v4429 = vor.u32 %v4426, %v4427
        %v4430 = vrot.slane %v4426, 4
        %v4432 = vshrl.u32 %v272, 16
        %v4434 = vrot.slane %v4432, 7
        %v4435 = vshll.u32 %v272, 16
        %v4437 = vor.u32 %v4434, %v4435
        %v4438 = vsel %vm917, %v4430, %v4437
        %v4439 = vrot.slane %v4434, 4
        %v4441 = vshrl.u32 %v273, 16
        %v4443 = vrot.slane %v4441, 7
        %v4444 = vshll.u32 %v273, 16
        %v4446 = vor.u32 %v4443, %v4444
        %v4447 = vrot.slane %v4443, 4
        %v4449 = vshrl.u32 %v274, 16
        %v4451 = vrot.slane %v4449, 7
        %v4452 = vshll.u32 %v274, 16
        %v4454 = vor.u32 %v4451, %v4452
        %v4455 = vsel %vm917, %v4447, %v4454
        %v4456 = vrot.slane %v4451, 4
        %v4458 = vshrl.u32 %v275, 16
        %v4460 = vrot.slane %v4458, 7
        %v4461 = vshll.u32 %v275, 16
        %v4463 = vor.u32 %v4460, %v4461
        %v4464 = vrot.slane %v4460, 4
        %v4466 = vshrl.u32 %v276, 16
        %v4468 = vrot.slane %v4466, 7
        %v4469 = vshll.u32 %v276, 16
        %v4471 = vor.u32 %v4468, %v4469
        %v4472 = vsel %vm917, %v4464, %v4471
        %v4473 = vrot.slane %v4468, 4
        %v4475 = vshrl.u32 %v277, 16
        %v4477 = vrot.slane %v4475, 7
        %v4478 = vshll.u32 %v277, 16
        %v4480 = vor.u32 %v4477, %v4478
        %v4481 = vrot.slane %v4477, 4
        %v4483 = vshrl.u32 %v278, 16
        %v4485 = vrot.slane %v4483, 7
        %v4486 = vshll.u32 %v278, 16
        %v4488 = vor.u32 %v4485, %v4486
        %v4489 = vsel %vm917, %v4481, %v4488
        %v4490 = vrot.slane %v4485, 4
        %v4492 = vshrl.u32 %v279, 16
        %v4494 = vrot.slane %v4492, 7
        %v4495 = vshll.u32 %v279, 16
        %v4497 = vor.u32 %v4494, %v4495
        %v4498 = vrot.slane %v4494, 4
        %v4500 = vshrl.u32 %v280, 16
        %v4502 = vrot.slane %v4500, 7
        %v4503 = vshll.u32 %v280, 16
        %v4505 = vor.u32 %v4502, %v4503
        %v4506 = vsel %vm917, %v4498, %v4505
        %v4507 = vrot.slane %v4502, 4
        %v4509 = vshrl.u32 %v281, 16
        %v4511 = vrot.slane %v4509, 7
        %v4512 = vshll.u32 %v281, 16
        %v4514 = vor.u32 %v4511, %v4512
        %v4515 = vrot.slane %v4511, 4
        %v4517 = vshrl.u32 %v282, 16
        %v4519 = vrot.slane %v4517, 7
        %v4520 = vshll.u32 %v282, 16
        %v4522 = vor.u32 %v4519, %v4520
        %v4523 = vsel %vm917, %v4515, %v4522
        %v4524 = vrot.slane %v4519, 4
        %4525 = vrot.lane.b32.xlu0 %v4259, 32
        %v4526 = vpop.permute.xlu0 %4525
        %4527 = vrot.lane.b32.xlu0 %v4268, 32
        %v4528 = vpop.permute.xlu0 %4527
        %4529 = vrot.lane.b32.xlu0 %v4269, 32
        %v4530 = vpop.permute.xlu0 %4529
        %4531 = vrot.lane.b32.xlu0 %v4276, 32
        %v4532 = vpop.permute.xlu0 %4531
        %4533 = vrot.lane.b32.xlu0 %v4285, 32
        %v4534 = vpop.permute.xlu0 %4533
        %4535 = vrot.lane.b32.xlu0 %v4286, 32
        %v4536 = vpop.permute.xlu0 %4535
        %4537 = vrot.lane.b32.xlu0 %v4293, 32
        %v4538 = vpop.permute.xlu0 %4537
        %4539 = vrot.lane.b32.xlu0 %v4302, 32
        %v4540 = vpop.permute.xlu0 %4539
        %4541 = vrot.lane.b32.xlu0 %v4303, 32
        %v4542 = vpop.permute.xlu0 %4541
        %4543 = vrot.lane.b32.xlu0 %v4310, 32
        %v4544 = vpop.permute.xlu0 %4543
        %4545 = vrot.lane.b32.xlu0 %v4319, 32
        %v4546 = vpop.permute.xlu0 %4545
        %4547 = vrot.lane.b32.xlu0 %v4320, 32
        %v4548 = vpop.permute.xlu0 %4547
        %4549 = vrot.lane.b32.xlu0 %v4327, 32
        %v4550 = vpop.permute.xlu0 %4549
        %4551 = vrot.lane.b32.xlu0 %v4336, 32
        %v4552 = vpop.permute.xlu0 %4551
        %4553 = vrot.lane.b32.xlu0 %v4337, 32
        %v4554 = vpop.permute.xlu0 %4553
        %4555 = vrot.lane.b32.xlu0 %v4344, 32
        %v4556 = vpop.permute.xlu0 %4555
        %4557 = vrot.lane.b32.xlu0 %v4353, 32
        %v4558 = vpop.permute.xlu0 %4557
        %4559 = vrot.lane.b32.xlu0 %v4354, 32
        %v4560 = vpop.permute.xlu0 %4559
        %4561 = vrot.lane.b32.xlu0 %v4361, 32
        %v4562 = vpop.permute.xlu0 %4561
        %4563 = vrot.lane.b32.xlu0 %v4370, 32
        %v4564 = vpop.permute.xlu0 %4563
        %4565 = vrot.lane.b32.xlu0 %v4371, 32
        %v4566 = vpop.permute.xlu0 %4565
        %4567 = vrot.lane.b32.xlu0 %v4378, 32
        %v4568 = vpop.permute.xlu0 %4567
        %4569 = vrot.lane.b32.xlu0 %v4387, 32
        %v4570 = vpop.permute.xlu0 %4569
        %4571 = vrot.lane.b32.xlu0 %v4388, 32
        %v4572 = vpop.permute.xlu0 %4571
        %4573 = vrot.lane.b32.xlu0 %v4395, 32
        %v4574 = vpop.permute.xlu0 %4573
        %4575 = vrot.lane.b32.xlu0 %v4404, 32
        %v4576 = vpop.permute.xlu0 %4575
        %4577 = vrot.lane.b32.xlu0 %v4405, 32
        %v4578 = vpop.permute.xlu0 %4577
        %4579 = vrot.lane.b32.xlu0 %v4412, 32
        %v4580 = vpop.permute.xlu0 %4579
        %4581 = vrot.lane.b32.xlu0 %v4421, 32
        %v4582 = vpop.permute.xlu0 %4581
        %4583 = vrot.lane.b32.xlu0 %v4422, 32
        %v4584 = vpop.permute.xlu0 %4583
        %4585 = vrot.lane.b32.xlu0 %v4429, 32
        %v4586 = vpop.permute.xlu0 %4585
        %4587 = vrot.lane.b32.xlu0 %v4438, 32
        %v4588 = vpop.permute.xlu0 %4587
        %4589 = vrot.lane.b32.xlu0 %v4439, 32
        %v4590 = vpop.permute.xlu0 %4589
        %4591 = vrot.lane.b32.xlu0 %v4446, 32
        %v4592 = vpop.permute.xlu0 %4591
        %4593 = vrot.lane.b32.xlu0 %v4455, 32
        %v4594 = vpop.permute.xlu0 %4593
        %4595 = vrot.lane.b32.xlu0 %v4456, 32
        %v4596 = vpop.permute.xlu0 %4595
        %4597 = vrot.lane.b32.xlu0 %v4463, 32
        %v4598 = vpop.permute.xlu0 %4597
        %4599 = vrot.lane.b32.xlu0 %v4472, 32
        %v4600 = vpop.permute.xlu0 %4599
        %4601 = vrot.lane.b32.xlu0 %v4473, 32
        %v4602 = vpop.permute.xlu0 %4601
        %4603 = vrot.lane.b32.xlu0 %v4480, 32
        %v4604 = vpop.permute.xlu0 %4603
        %4605 = vrot.lane.b32.xlu0 %v4489, 32
        %v4606 = vpop.permute.xlu0 %4605
        %4607 = vrot.lane.b32.xlu0 %v4490, 32
        %v4608 = vpop.permute.xlu0 %4607
        %4609 = vrot.lane.b32.xlu0 %v4497, 32
        %v4610 = vpop.permute.xlu0 %4609
        %4611 = vrot.lane.b32.xlu0 %v4506, 32
        %v4612 = vpop.permute.xlu0 %4611
        %4613 = vrot.lane.b32.xlu0 %v4507, 32
        %v4614 = vpop.permute.xlu0 %4613
        %4615 = vrot.lane.b32.xlu0 %v4514, 32
        %v4616 = vpop.permute.xlu0 %4615
        %4617 = vrot.lane.b32.xlu0 %v4523, 32
        %v4618 = vpop.permute.xlu0 %4617
        %4619 = vrot.lane.b32.xlu0 %v4524, 32
        %v4620 = vpop.permute.xlu0 %4619
        %vm4669 = vcmask 1043712
        %vm4670 = vmand %vm4669, %vm1240
        %v4671 = vld [vmem:[%s1238] sm:$0xf]
        %v4672 = vsel %vm4670, %v4526, %v4671
        %4673 = vst [vmem:[%s1238] sm:$0xf] %v4672
        %vm4674 = vcmask 1043712
        %4675 = vst.msk [vmem:[%s1238 + $0x4] sm:$0xf] %vm4674, %v4528
        %vm4676 = vcmask 1040640
        %vm4677 = vmand %vm4676, %vm915
        %v4678 = vld [vmem:[%s1238 + $0x8] sm:$0x1]
        %v4679 = vsel %vm4677, %v4530, %v4678
        %4680 = vst [vmem:[%s1238 + $0x8] sm:$0x1] %v4679
        %v4681 = vld [vmem:[%s1238 + $0xc] sm:$0xf]
        %v4682 = vsel %vm4670, %v4532, %v4681
        %4683 = vst [vmem:[%s1238 + $0xc] sm:$0xf] %v4682
        %4684 = vst.msk [vmem:[%s1238 + $0x10] sm:$0xf] %vm4674, %v4534
        %v4685 = vld [vmem:[%s1238 + $0x14] sm:$0x1]
        %v4686 = vsel %vm4677, %v4536, %v4685
        %4687 = vst [vmem:[%s1238 + $0x14] sm:$0x1] %v4686
        %v4688 = vld [vmem:[%s1238 + $0x18] sm:$0xf]
        %v4689 = vsel %vm4670, %v4538, %v4688
        %4690 = vst [vmem:[%s1238 + $0x18] sm:$0xf] %v4689
        %4691 = vst.msk [vmem:[%s1238 + $0x1c] sm:$0xf] %vm4674, %v4540
        %v4692 = vld [vmem:[%s1238 + $0x20] sm:$0x1]
        %v4693 = vsel %vm4677, %v4542, %v4692
        %4694 = vst [vmem:[%s1238 + $0x20] sm:$0x1] %v4693
        %v4695 = vld [vmem:[%s1238 + $0x24] sm:$0xf]
        %v4696 = vsel %vm4670, %v4544, %v4695
        %4697 = vst [vmem:[%s1238 + $0x24] sm:$0xf] %v4696
        %4698 = vst.msk [vmem:[%s1238 + $0x28] sm:$0xf] %vm4674, %v4546
        %v4699 = vld [vmem:[%s1238 + $0x2c] sm:$0x1]
        %v4700 = vsel %vm4677, %v4548, %v4699
        %4701 = vst [vmem:[%s1238 + $0x2c] sm:$0x1] %v4700
        %v4702 = vld [vmem:[%s1238 + $0x30] sm:$0xf]
        %v4703 = vsel %vm4670, %v4550, %v4702
        %4704 = vst [vmem:[%s1238 + $0x30] sm:$0xf] %v4703
        %4705 = vst.msk [vmem:[%s1238 + $0x34] sm:$0xf] %vm4674, %v4552
        %v4706 = vld [vmem:[%s1238 + $0x38] sm:$0x1]
        %v4707 = vsel %vm4677, %v4554, %v4706
        %4708 = vst [vmem:[%s1238 + $0x38] sm:$0x1] %v4707
        %v4709 = vld [vmem:[%s1238 + $0x3c] sm:$0xf]
        %v4710 = vsel %vm4670, %v4556, %v4709
        %4711 = vst [vmem:[%s1238 + $0x3c] sm:$0xf] %v4710
        %4712 = vst.msk [vmem:[%s1238 + $0x40] sm:$0xf] %vm4674, %v4558
        %v4713 = vld [vmem:[%s1238 + $0x44] sm:$0x1]
        %v4714 = vsel %vm4677, %v4560, %v4713
        %4715 = vst [vmem:[%s1238 + $0x44] sm:$0x1] %v4714
        %v4716 = vld [vmem:[%s1238 + $0x48] sm:$0xf]
        %v4717 = vsel %vm4670, %v4562, %v4716
        %4718 = vst [vmem:[%s1238 + $0x48] sm:$0xf] %v4717
        %4719 = vst.msk [vmem:[%s1238 + $0x4c] sm:$0xf] %vm4674, %v4564
        %v4720 = vld [vmem:[%s1238 + $0x50] sm:$0x1]
        %v4721 = vsel %vm4677, %v4566, %v4720
        %4722 = vst [vmem:[%s1238 + $0x50] sm:$0x1] %v4721
        %v4723 = vld [vmem:[%s1238 + $0x54] sm:$0xf]
        %v4724 = vsel %vm4670, %v4568, %v4723
        %4725 = vst [vmem:[%s1238 + $0x54] sm:$0xf] %v4724
        %4726 = vst.msk [vmem:[%s1238 + $0x58] sm:$0xf] %vm4674, %v4570
        %v4727 = vld [vmem:[%s1238 + $0x5c] sm:$0x1]
        %v4728 = vsel %vm4677, %v4572, %v4727
        %4729 = vst [vmem:[%s1238 + $0x5c] sm:$0x1] %v4728
        %v4730 = vld [vmem:[%s1238 + $0x60] sm:$0xf]
        %v4731 = vsel %vm4670, %v4574, %v4730
        %4732 = vst [vmem:[%s1238 + $0x60] sm:$0xf] %v4731
        %4733 = vst.msk [vmem:[%s1238 + $0x64] sm:$0xf] %vm4674, %v4576
        %v4734 = vld [vmem:[%s1238 + $0x68] sm:$0x1]
        %v4735 = vsel %vm4677, %v4578, %v4734
        %4736 = vst [vmem:[%s1238 + $0x68] sm:$0x1] %v4735
        %v4737 = vld [vmem:[%s1238 + $0x6c] sm:$0xf]
        %v4738 = vsel %vm4670, %v4580, %v4737
        %4739 = vst [vmem:[%s1238 + $0x6c] sm:$0xf] %v4738
        %4740 = vst.msk [vmem:[%s1238 + $0x70] sm:$0xf] %vm4674, %v4582
        %v4741 = vld [vmem:[%s1238 + $0x74] sm:$0x1]
        %v4742 = vsel %vm4677, %v4584, %v4741
        %4743 = vst [vmem:[%s1238 + $0x74] sm:$0x1] %v4742
        %v4744 = vld [vmem:[%s1238 + $0x78] sm:$0xf]
        %v4745 = vsel %vm4670, %v4586, %v4744
        %4746 = vst [vmem:[%s1238 + $0x78] sm:$0xf] %v4745
        %4747 = vst.msk [vmem:[%s1238 + $0x7c] sm:$0xf] %vm4674, %v4588
        %v4748 = vld [vmem:[%s1238 + $0x80] sm:$0x1]
        %v4749 = vsel %vm4677, %v4590, %v4748
        %4750 = vst [vmem:[%s1238 + $0x80] sm:$0x1] %v4749
        %v4751 = vld [vmem:[%s1238 + $0x84] sm:$0xf]
        %v4752 = vsel %vm4670, %v4592, %v4751
        %4753 = vst [vmem:[%s1238 + $0x84] sm:$0xf] %v4752
        %4754 = vst.msk [vmem:[%s1238 + $0x88] sm:$0xf] %vm4674, %v4594
        %v4755 = vld [vmem:[%s1238 + $0x8c] sm:$0x1]
        %v4756 = vsel %vm4677, %v4596, %v4755
        %4757 = vst [vmem:[%s1238 + $0x8c] sm:$0x1] %v4756
        %v4758 = vld [vmem:[%s1238 + $0x90] sm:$0xf]
        %v4759 = vsel %vm4670, %v4598, %v4758
        %4760 = vst [vmem:[%s1238 + $0x90] sm:$0xf] %v4759
        %4761 = vst.msk [vmem:[%s1238 + $0x94] sm:$0xf] %vm4674, %v4600
        %v4762 = vld [vmem:[%s1238 + $0x98] sm:$0x1]
        %v4763 = vsel %vm4677, %v4602, %v4762
        %4764 = vst [vmem:[%s1238 + $0x98] sm:$0x1] %v4763
        %v4765 = vld [vmem:[%s1238 + $0x9c] sm:$0xf]
        %v4766 = vsel %vm4670, %v4604, %v4765
        %4767 = vst [vmem:[%s1238 + $0x9c] sm:$0xf] %v4766
        %4768 = vst.msk [vmem:[%s1238 + $0xa0] sm:$0xf] %vm4674, %v4606
        %v4769 = vld [vmem:[%s1238 + $0xa4] sm:$0x1]
        %v4770 = vsel %vm4677, %v4608, %v4769
        %4771 = vst [vmem:[%s1238 + $0xa4] sm:$0x1] %v4770
        %v4772 = vld [vmem:[%s1238 + $0xa8] sm:$0xf]
        %v4773 = vsel %vm4670, %v4610, %v4772
        %4774 = vst [vmem:[%s1238 + $0xa8] sm:$0xf] %v4773
        %4775 = vst.msk [vmem:[%s1238 + $0xac] sm:$0xf] %vm4674, %v4612
        %v4776 = vld [vmem:[%s1238 + $0xb0] sm:$0x1]
        %v4777 = vsel %vm4677, %v4614, %v4776
        %4778 = vst [vmem:[%s1238 + $0xb0] sm:$0x1] %v4777
        %v4779 = vld [vmem:[%s1238 + $0xb4] sm:$0xf]
        %v4780 = vsel %vm4670, %v4616, %v4779
        %4781 = vst [vmem:[%s1238 + $0xb4] sm:$0xf] %v4780
        %4782 = vst.msk [vmem:[%s1238 + $0xb8] sm:$0xf] %vm4674, %v4618
        %v4783 = vld [vmem:[%s1238 + $0xbc] sm:$0x1]
        %v4784 = vsel %vm4677, %v4620, %v4783
        %4785 = vst [vmem:[%s1238 + $0xbc] sm:$0x1] %v4784
        %4786 = vst [vmem:[%s244] sm:$0xf] 0
        %4787 = vst [vmem:[%s244 + $0x4] sm:$0xf] 0
        %4788 = vst [vmem:[%s244 + $0x8] sm:$0xf] 0
        %s4789 = scalar_lea.vmem %s244, 204 [#allocation2]
        %4790 = vst [vmem:[%s4789] sm:$0xf] 0
        %4791 = vst [vmem:[%s4789 + $0x4] sm:$0xf] 0
        %4792 = vst [vmem:[%s4789 + $0x8] sm:$0xf] 0
        %vm4793 = vcmask 1040384
        %vm4794 = vmand %vm4793, %vm915
        %v4795 = vld [vmem:[%s1238] sm:$0x1]
        %v4796 = vsel %vm4794, 0, %v4795
        %4797 = vst [vmem:[%s1238] sm:$0x1] %v4796
        %v4798 = vld [vmem:[%s1238 + $0xc] sm:$0x1]
        %v4799 = vsel %vm4794, 0, %v4798
        %4800 = vst [vmem:[%s1238 + $0xc] sm:$0x1] %v4799
        %v4801 = vld [vmem:[%s1238 + $0x18] sm:$0x1]
        %v4802 = vsel %vm4794, 0, %v4801
        %4803 = vst [vmem:[%s1238 + $0x18] sm:$0x1] %v4802
        %v4804 = vld [vmem:[%s1238 + $0x24] sm:$0x1]
        %v4805 = vsel %vm4794, 0, %v4804
        %4806 = vst [vmem:[%s1238 + $0x24] sm:$0x1] %v4805
        %v4807 = vld [vmem:[%s1238 + $0x30] sm:$0x1]
        %v4808 = vsel %vm4794, 0, %v4807
        %4809 = vst [vmem:[%s1238 + $0x30] sm:$0x1] %v4808
        %v4810 = vld [vmem:[%s1238 + $0x3c] sm:$0x1]
        %v4811 = vsel %vm4794, 0, %v4810
        %4812 = vst [vmem:[%s1238 + $0x3c] sm:$0x1] %v4811
        %v4813 = vld [vmem:[%s1238 + $0x48] sm:$0x1]
        %v4814 = vsel %vm4794, 0, %v4813
        %4815 = vst [vmem:[%s1238 + $0x48] sm:$0x1] %v4814
        %v4816 = vld [vmem:[%s1238 + $0x54] sm:$0x1]
        %v4817 = vsel %vm4794, 0, %v4816
        %4818 = vst [vmem:[%s1238 + $0x54] sm:$0x1] %v4817
        %v4819 = vld [vmem:[%s1238 + $0x60] sm:$0x1]
        %v4820 = vsel %vm4794, 0, %v4819
        %4821 = vst [vmem:[%s1238 + $0x60] sm:$0x1] %v4820
        %v4822 = vld [vmem:[%s1238 + $0x6c] sm:$0x1]
        %v4823 = vsel %vm4794, 0, %v4822
        %4824 = vst [vmem:[%s1238 + $0x6c] sm:$0x1] %v4823
        %v4825 = vld [vmem:[%s1238 + $0x78] sm:$0x1]
        %v4826 = vsel %vm4794, 0, %v4825
        %4827 = vst [vmem:[%s1238 + $0x78] sm:$0x1] %v4826
        %v4828 = vld [vmem:[%s1238 + $0x84] sm:$0x1]
        %v4829 = vsel %vm4794, 0, %v4828
        %4830 = vst [vmem:[%s1238 + $0x84] sm:$0x1] %v4829
        %v4831 = vld [vmem:[%s1238 + $0x90] sm:$0x1]
        %v4832 = vsel %vm4794, 0, %v4831
        %4833 = vst [vmem:[%s1238 + $0x90] sm:$0x1] %v4832
        %v4834 = vld [vmem:[%s1238 + $0x9c] sm:$0x1]
        %v4835 = vsel %vm4794, 0, %v4834
        %4836 = vst [vmem:[%s1238 + $0x9c] sm:$0x1] %v4835
        %v4837 = vld [vmem:[%s1238 + $0xa8] sm:$0x1]
        %v4838 = vsel %vm4794, 0, %v4837
        %4839 = vst [vmem:[%s1238 + $0xa8] sm:$0x1] %v4838
        %v4840 = vld [vmem:[%s1238 + $0xb4] sm:$0x1]
        %v4841 = vsel %vm4794, 0, %v4840
        %4842 = vst [vmem:[%s1238 + $0xb4] sm:$0x1] %v4841
        %vm4843 = vcmask 1043456
        %vm4844 = vmand %vm4843, %vm1240
        %v4845 = vld [vmem:[%s1238 + $0x8] sm:$0xf]
        %v4846 = vsel %vm4844, 0, %v4845
        %4847 = vst [vmem:[%s1238 + $0x8] sm:$0xf] %v4846
        %v4848 = vld [vmem:[%s1238 + $0x14] sm:$0xf]
        %v4849 = vsel %vm4844, 0, %v4848
        %4850 = vst [vmem:[%s1238 + $0x14] sm:$0xf] %v4849
        %v4851 = vld [vmem:[%s1238 + $0x20] sm:$0xf]
        %v4852 = vsel %vm4844, 0, %v4851
        %4853 = vst [vmem:[%s1238 + $0x20] sm:$0xf] %v4852
        %v4854 = vld [vmem:[%s1238 + $0x2c] sm:$0xf]
        %v4855 = vsel %vm4844, 0, %v4854
        %4856 = vst [vmem:[%s1238 + $0x2c] sm:$0xf] %v4855
        %v4857 = vld [vmem:[%s1238 + $0x38] sm:$0xf]
        %v4858 = vsel %vm4844, 0, %v4857
        %4859 = vst [vmem:[%s1238 + $0x38] sm:$0xf] %v4858
        %v4860 = vld [vmem:[%s1238 + $0x44] sm:$0xf]
        %v4861 = vsel %vm4844, 0, %v4860
        %4862 = vst [vmem:[%s1238 + $0x44] sm:$0xf] %v4861
        %v4863 = vld [vmem:[%s1238 + $0x50] sm:$0xf]
        %v4864 = vsel %vm4844, 0, %v4863
        %4865 = vst [vmem:[%s1238 + $0x50] sm:$0xf] %v4864
        %v4866 = vld [vmem:[%s1238 + $0x5c] sm:$0xf]
        %v4867 = vsel %vm4844, 0, %v4866
        %4868 = vst [vmem:[%s1238 + $0x5c] sm:$0xf] %v4867
        %v4869 = vld [vmem:[%s1238 + $0x68] sm:$0xf]
        %v4870 = vsel %vm4844, 0, %v4869
        %4871 = vst [vmem:[%s1238 + $0x68] sm:$0xf] %v4870
        %v4872 = vld [vmem:[%s1238 + $0x74] sm:$0xf]
        %v4873 = vsel %vm4844, 0, %v4872
        %4874 = vst [vmem:[%s1238 + $0x74] sm:$0xf] %v4873
        %v4875 = vld [vmem:[%s1238 + $0x80] sm:$0xf]
        %v4876 = vsel %vm4844, 0, %v4875
        %4877 = vst [vmem:[%s1238 + $0x80] sm:$0xf] %v4876
        %v4878 = vld [vmem:[%s1238 + $0x8c] sm:$0xf]
        %v4879 = vsel %vm4844, 0, %v4878
        %4880 = vst [vmem:[%s1238 + $0x8c] sm:$0xf] %v4879
        %v4881 = vld [vmem:[%s1238 + $0x98] sm:$0xf]
        %v4882 = vsel %vm4844, 0, %v4881
        %4883 = vst [vmem:[%s1238 + $0x98] sm:$0xf] %v4882
        %v4884 = vld [vmem:[%s1238 + $0xa4] sm:$0xf]
        %v4885 = vsel %vm4844, 0, %v4884
        %4886 = vst [vmem:[%s1238 + $0xa4] sm:$0xf] %v4885
        %v4887 = vld [vmem:[%s1238 + $0xb0] sm:$0xf]
        %v4888 = vsel %vm4844, 0, %v4887
        %4889 = vst [vmem:[%s1238 + $0xb0] sm:$0xf] %v4888
        %v4890 = vld [vmem:[%s1238 + $0xbc] sm:$0xf]
        %v4891 = vsel %vm4844, 0, %v4890
        %4892 = vst [vmem:[%s1238 + $0xbc] sm:$0xf] %v4891
        %s4893 = sand.u32 %s159, 1
        %s4894 = scalar_lea.sflag [#allocation3], %s4893
        %s4895 = sand.u32 %s159, 1
        %s4896 = smul.addr %s4895, 216
        %s4897 = scalar_lea.vmem [#allocation2], %s4896
        // Predicated region
        $region45: #{tpu_custom_call.1} parent=43 // pred_check
          %p4898 = pneg %p169
        $region46: #{tpu_custom_call.1} parent=43 // pred_check_branch
          %4900 = sbr.rel (%p4898) target = $region48
        $region47: #{tpu_custom_call.1} parent=43 // pred_region
          %4902 = vsyncadd %s4894, 0
          %s4903 = smul.addr %s20, 54
          %s4904 = smul.addr %s4903, 4
          %s4905 = scalar_lea.hbm %s6, %s4904
          %s4906 = sshll.u32 %s4897, 4
          %s4907 = int_to_ptr.vmem [resolvable:$true] %s4906
          %s4908 = sshll.u32 %s4905, 4
          %s4909 = int_to_ptr.hbm [resolvable:$true] %s4908
          %4914 = dma.vmem_to_hbm [thread:$0]  %s4907, 3456, %s4909, %s4894, 64, 64, 4
        $region48: #{tpu_custom_call.1} parent=43 // pred_fallthru
          _
      $region44: #{tpu_custom_call.1} parent=5 // pred_fallthru
        _
      %p4915 = scmp.le.s32.totalorder 2, %s15
      // Predicated region
      $region49: #{tpu_custom_call.1} parent=5 // pred_check
        %p4916 = pneg %p4915
      $region50: #{tpu_custom_call.1} parent=5 // pred_check_branch
        %4918 = sbr.rel (%p4916) target = $region52
      $region51: #{tpu_custom_call.1} parent=5 // pred_region
        %s4919 = ssub.s32 %s15, 2
        // Predicated region
        $region53: #{tpu_custom_call.1} parent=51 // pred_check
          %p4920 = pneg %p175
        $region54: #{tpu_custom_call.1} parent=51 // pred_check_branch
          %4922 = sbr.rel (%p4920) target = $region56
        $region55: #{tpu_custom_call.1} parent=51 // pred_region
          %s4923 = sand.u32 %s160, 1
          %s4924 = scalar_lea.sflag [#allocation3], %s4923
          %s4925 = sand.u32 %s160, 1
          %s4926 = smul.addr %s4925, 216
          %s4927 = scalar_lea.vmem [#allocation2], %s4926
          %4929 = dma.done %s4924, 3456
        $region56: #{tpu_custom_call.1} parent=51 // pred_fallthru
          _
      $region52: #{tpu_custom_call.1} parent=5 // pred_fallthru
        _
    $region6: #{tpu_custom_call.1} parent=1 // loop_footer
      %s19 = sadd.s32 1, %s15
    $region7: #{tpu_custom_call.1} parent=1 // loop_footer_branch
      %14 = sbr.rel target = $region3
    $region8: #{tpu_custom_call.1} parent=1 // loop_exit
      _
    %4930 = vsyncpa [#allocation3], 1
    %s4931 = scalar_lea.sflag [#allocation3], 1
    %4932 = vsyncpa %s4931, 1

</llo_original>
